<compile_context>
chip_gen: v6e
topology: v6e:2x2x1
jax: 0.10.0
libtpu: 0.0.40
codegen_flags: <defaults>
</compile_context>

<pallas_src>
import functools
import math

import jax
import jax.numpy as jnp
from jax.experimental import pallas as pl
from jax.experimental.pallas import tpu as pltpu


# ---------------------------------------------------------------------------
# small helpers
# ---------------------------------------------------------------------------
def _round_up(x, m):
    return (x + m - 1) // m * m


def _pick_k_tile(K, max_tk):
    """Return (tk, Kp): K tile size and (possibly padded) K so that tk | Kp."""
    if K <= max_tk:
        return K, K
    for tk in (8192, 4096, 2048, 1024, 512, 256, 128):
        if tk <= max_tk and K % tk == 0:
            return tk, K
    Kp = _round_up(K, 512)
    return 512, Kp


def _vmem_limit(est_bytes):
    """Generation-aware scoped-VMEM budget derived from the actual tile plan."""
    try:
        cap = pltpu.get_tpu_info().vmem_capacity_bytes
    except Exception:  # pragma: no cover - conservative fallback (v7x physical)
        cap = 64 * 2 ** 20
    # 2x margin over the per-step tile estimate (compiler internal scratch,
    # relayout temporaries), modest floor, capped at 3/4 of physical VMEM.
    want = max(16 * 2 ** 20, 2 * int(est_bytes))
    return int(min(3 * cap // 4, want))


# ---------------------------------------------------------------------------
# Pallas kernel 1: direct icosahedral 3x3 conv on one flattened chart plane
# ---------------------------------------------------------------------------
def _ico_conv_kernel(x_ref, w_ref, b_ref, m_ref, o_ref, *, W, Mrows, relu,
                     halo_rows):
    """Direct conv: 9 shifted row-slices of the lattice, 9 MXU dots.

    x_ref : (L, K)    guarded padded plane, L = (H+2)*(W+2) + 2
    w_ref : (9, K, N) 3x3 taps (row-major), N lane-padded to >= 128
    b_ref : (1, N)
    m_ref : (Mrows, 1) fused CleanVertices + lattice junk-column mask
    o_ref : (Mrows + 2*halo_rows, N)
    """
    acc = None
    for dh in range(3):
        for dw in range(3):
            s = dh * (W + 2) + dw                      # static tap row offset
            patch = x_ref[s:s + Mrows, :]
            part = jnp.dot(patch, w_ref[dh * 3 + dw],
                           preferred_element_type=jnp.float32)
            acc = part if acc is None else acc + part
    y = acc + b_ref[...]                               # f32 epilogue
    if relu:
        y = jnp.maximum(y, 0.0)
    y = (y * m_ref[...]).astype(o_ref.dtype)           # fused CleanVertices
    if halo_rows:
        # Emit the next layer's zero padding rows directly (no repad pass).
        z = jnp.zeros((halo_rows, y.shape[1]), y.dtype)
        y = jnp.concatenate([z, y, z], axis=0)
    o_ref[...] = y


def ico_conv(x_flat, w, b, mask_rows, *, H, W, relu, halo_out,
             out_dtype=jnp.bfloat16):
    """x_flat: (B*5, L, K) guarded flat chart planes -> (B*5, Lout, N)."""
    P, L, K = x_flat.shape
    Mrows = H * (W + 2)
    assert L == (H + 2) * (W + 2) + 2
    nt, Kw, N = w.shape
    assert nt == 9 and Kw == K
    halo = (W + 3) if halo_out else 0
    Lout = Mrows + 2 * halo

    kernel = functools.partial(_ico_conv_kernel, W=W, Mrows=Mrows, relu=relu,
                               halo_rows=halo)
    esz = jnp.dtype(out_dtype).itemsize
    est = (2 * L * K * x_flat.dtype.itemsize          # double-buffered input plane
           + 9 * K * N * w.dtype.itemsize             # resident taps
           + 2 * Lout * N * esz                       # double-buffered output plane
           + Mrows * N * 4                            # f32 accumulator value
           + Mrows * K * x_flat.dtype.itemsize        # shifted-slice temporary
           + N * 4 + Mrows * 4)                       # bias + mask

    return pl.pallas_call(
        kernel,
        out_shape=jax.ShapeDtypeStruct((P, Lout, N), out_dtype),
        grid=(P,),
        in_specs=[
            pl.BlockSpec((None, L, K), lambda i: (i, 0, 0)),
            pl.BlockSpec((9, K, N), lambda i: (0, 0, 0)),
            pl.BlockSpec((1, N), lambda i: (0, 0)),
            pl.BlockSpec((None, Mrows, 1), lambda i: (i % 5, 0, 0)),
        ],
        out_specs=pl.BlockSpec((None, Lout, N), lambda i: (i, 0, 0)),
        compiler_params=pltpu.CompilerParams(
            # B*5 >= 2 programs -> both v7x TensorCores get work.
            dimension_semantics=("parallel",),
            vmem_limit_bytes=_vmem_limit(est),
        ),
    )(x_flat, w, b, mask_rows)


# ---------------------------------------------------------------------------
# Pallas kernel 2: fused FC head   out = relu(x @ w1 + b1) @ w2 + b2
# ---------------------------------------------------------------------------
def _fc_head_acc_kernel(x_ref, w1_ref, b1_ref, w2_ref, b2_ref, o_ref, acc_ref):
    k = pl.program_id(0)

    @pl.when(k == 0)
    def _():
        acc_ref[...] = jnp.zeros_like(acc_ref)

    acc_ref[...] += jnp.dot(x_ref[...], w1_ref[...],
                            preferred_element_type=jnp.float32)

    @pl.when(k == pl.num_programs(0) - 1)
    def _():
        h = jnp.maximum(acc_ref[...] + b1_ref[...], 0.0)     # f32 epilogue
        y = jnp.dot(h.astype(w2_ref.dtype), w2_ref[...],
                    preferred_element_type=jnp.float32)
        o_ref[...] = (y + b2_ref[...]).astype(o_ref.dtype)


def _fc_head_single_kernel(x_ref, w1_ref, b1_ref, w2_ref, b2_ref, o_ref):
    # grid_k == 1: no accumulator scratch / init-finalize path needed.
    h = jnp.dot(x_ref[...], w1_ref[...], preferred_element_type=jnp.float32)
    h = jnp.maximum(h + b1_ref[...], 0.0)
    y = jnp.dot(h.astype(w2_ref.dtype), w2_ref[...],
                preferred_element_type=jnp.float32)
    o_ref[...] = (y + b2_ref[...]).astype(o_ref.dtype)


def fc_head(x, w1, b1, w2, b2, *, max_tk=4096):
    """Single fused launch for fc1 + ReLU + fc2 (fc1 contraction K-tiled)."""
    B, K = x.shape
    N1 = w1.shape[1]
    N2 = w2.shape[1]

    xb = x.astype(jnp.bfloat16)
    Mp = _round_up(B, 8)
    if Mp != B:
        xb = jnp.pad(xb, ((0, Mp - B), (0, 0)))

    tk, Kp = _pick_k_tile(K, max_tk)
    if Kp != K:
        xb = jnp.pad(xb, ((0, 0), (0, Kp - K)))
        w1 = jnp.pad(w1, ((0, Kp - K), (0, 0)))
    grid_k = Kp // tk

    est = (2 * Mp * tk * 2 + 2 * tk * N1 * 2          # double-buffered x / w1 tiles
           + N1 * N2 * 2 + Mp * N1 * 4                # resident w2, f32 acc
           + 2 * Mp * N2 * 4 + 4 * (N1 + N2))
    common = dict(
        out_shape=jax.ShapeDtypeStruct((Mp, N2), jnp.float32),
        in_specs=[
            pl.BlockSpec((Mp, tk), lambda k: (0, k)),
            pl.BlockSpec((tk, N1), lambda k: (k, 0)),
            pl.BlockSpec((1, N1), lambda k: (0, 0)),
            pl.BlockSpec((N1, N2), lambda k: (0, 0)),
            pl.BlockSpec((1, N2), lambda k: (0, 0)),
        ],
        out_specs=pl.BlockSpec((Mp, N2), lambda k: (0, 0)),
        compiler_params=pltpu.CompilerParams(
            dimension_semantics=("arbitrary",),
            vmem_limit_bytes=_vmem_limit(est),
        ),
    )
    if grid_k == 1:
        out = pl.pallas_call(_fc_head_single_kernel, grid=(1,), **common)(
            xb, w1, b1, w2, b2)
    else:
        out = pl.pallas_call(_fc_head_acc_kernel, grid=(grid_k,),
                             scratch_shapes=[pltpu.VMEM((Mp, N1), jnp.float32)],
                             **common)(xb, w1, b1, w2, b2)
    return out[:B]


# ---------------------------------------------------------------------------
# ConvIco weight expansion + vertex masks (one-time preprocessing)
# ---------------------------------------------------------------------------
# Hex-kernel expansion: for output orientation i, the 7 hex weights
# (0 = center, 1..6 = ring, counter-clockwise) are scattered into a 3x3
# stencil (row-major flat positions; the two unused corners are zero).
_IDX_K = jnp.array(
    [
        (1, 2, -1, 6, 0, 3, -1, 5, 4),
        (2, 3, -1, 1, 0, 4, -1, 6, 5),
        (3, 4, -1, 2, 0, 5, -1, 1, 6),
        (4, 5, -1, 3, 0, 6, -1, 2, 1),
        (5, 6, -1, 4, 0, 1, -1, 3, 2),
        (6, 1, -1, 5, 0, 2, -1, 4, 3),
    ],
    dtype=jnp.int32,
)


def expand_kernel(weight, Rin, Rout, k_pad, n_pad):
    """(Cout, Cin, Rin, 7) -> direct-conv taps (9, k_pad, n_pad) in bf16.

    Rows (axis 1) follow the activation channel order (cin, rin); columns
    (axis 2) follow the output channel order (cout, rout); both zero-padded.
    """
    Cout, Cin = weight.shape[0], weight.shape[1]
    cout = jnp.arange(Cout).reshape(Cout, 1, 1, 1, 1)
    cin = jnp.arange(Cin).reshape(1, Cin, 1, 1, 1)
    rout = jnp.arange(Rout).reshape(1, 1, Rout, 1, 1)
    rin = jnp.arange(Rin).reshape(1, 1, 1, Rin, 1)

    ksel = _IDX_K[:Rout]                                   # (Rout, 9)
    ksafe = jnp.where(ksel < 0, 0, ksel)
    kmask = (ksel >= 0).astype(weight.dtype)
    # TODO(synk): verify the sign of the regular-representation shift against
    # icoCNN's convention (only visible under rotation-equivariance tests).
    rshift = (rin - rout) % Rin
    kidx = ksafe.reshape(1, 1, Rout, 1, 9)

    w_exp = weight[cout, cin, rshift, kidx]                # (Cout,Cin,Rout,Rin,9)
    w_exp = w_exp * kmask.reshape(1, 1, Rout, 1, 9)
    w = jnp.transpose(w_exp, (4, 1, 3, 0, 2)).reshape(9, Cin * Rin, Cout * Rout)
    w = jnp.pad(w, ((0, 0), (0, k_pad - Cin * Rin), (0, n_pad - Cout * Rout)))
    return w.astype(jnp.bfloat16)


def vertex_mask(H, W, dtype=jnp.float32):
    # TODO(synk): vertex pixel locations reconstructed from the icoCNN chart
    # layout (two icosahedron vertices per chart); ConvIco source not provided.
    m = jnp.ones((5, H, W), dtype)
    m = m.at[:, 0, 0].set(0.0)
    m = m.at[:, 0, W // 2].set(0.0)
    return m


def row_mask(H, W, dtype=jnp.float32):
    """(5, H*(W+2), 1): CleanVertices mask + zeros at lattice pad columns."""
    m = jnp.zeros((5, H, W + 2), dtype)
    m = m.at[:, :, 1:W + 1].set(vertex_mask(H, W, dtype))
    return m.reshape(5, H * (W + 2), 1)


# ---------------------------------------------------------------------------
# parameters: torch-like init + one-time preprocessing
# ---------------------------------------------------------------------------
def init_params(key, r, in_channels, out_channels, R_in=1):
    H, W = 2 ** r, 2 ** (r + 1)
    keys = jax.random.split(key, 6)

    def conv_w(k, Cout, Cin, Rin):
        s = math.sqrt(2.0 / (3 * 3 * Cin * Rin))
        return s * jax.random.normal(k, (Cout, Cin, Rin, 7), jnp.float32)

    def linear(kw, kb, fan_in, fan_out):
        bound = 1.0 / math.sqrt(fan_in)
        w = jax.random.uniform(kw, (fan_out, fan_in), jnp.float32, -bound, bound)
        b = jax.random.uniform(kb, (fan_out,), jnp.float32, -bound, bound)
        return w, b

    params = {
        "conv1_w": conv_w(keys[0], 16, in_channels, R_in),
        "conv1_b": jnp.zeros((16,), jnp.float32),
        "conv2_w": conv_w(keys[1], 32, 16, 6),
        "conv2_b": jnp.zeros((32,), jnp.float32),
    }
    fc1_in = 32 * 5 * H * W
    params["fc1_w"], params["fc1_b"] = linear(keys[2], keys[3], fc1_in, 64)
    params["fc2_w"], params["fc2_b"] = linear(keys[4], keys[5], 64, out_channels)
    return params


def prepare_params(params, r, in_channels, out_channels, R_in):
    """One-time weight preprocessing (layout, lane padding, bf16 casts)."""
    H, W = 2 ** r, 2 ** (r + 1)
    Mrows = H * (W + 2)
    K1 = in_channels * R_in
    K1p = _round_up(K1, 8)            # conv1 input channels, sublane-friendly pad
    N1c = _round_up(16 * 6, 128)      # conv1 output channels, lane-dense (96->128)
    N2c = _round_up(32 * 1, 128)      # conv2 output channels, lane-dense (32->128)
    N1f = _round_up(64, 128)          # fc1 hidden, lane-dense (64->128)
    N2f = _round_up(out_channels, 128)

    conv1_w = expand_kernel(params["conv1_w"], R_in, 6, K1p, N1c)
    conv1_b = jnp.pad(jnp.repeat(params["conv1_b"], 6), (0, N1c - 16 * 6))
    # conv2 consumes conv1's lane-padded channel layout -> K = N1c (pad rows 0).
    conv2_w = expand_kernel(params["conv2_w"], 6, 1, N1c, N2c)
    conv2_b = jnp.pad(params["conv2_b"], (0, N2c - 32))

    # fc1 rows reordered to the (chart, h, w_padded_lattice, channel_padded)
    # layout the conv2 kernel emits; junk/pad rows & pad channels get zero rows.
    wt = params["fc1_w"].reshape(64, 32, 5, H, W)          # torch (c, chart, h, w)
    w1 = jnp.zeros((5, H, W + 2, N2c, 64), jnp.float32)
    w1 = w1.at[:, :, 1:W + 1, :32, :].set(jnp.transpose(wt, (2, 3, 4, 1, 0)))
    w1 = w1.reshape(5 * Mrows * N2c, 64)
    w1 = jnp.pad(w1, ((0, 0), (0, N1f - 64)))
    fc1_b = jnp.pad(params["fc1_b"], (0, N1f - 64))

    w2 = jnp.zeros((N1f, N2f), jnp.float32)
    w2 = w2.at[:64, :out_channels].set(params["fc2_w"].T)
    fc2_b = jnp.pad(params["fc2_b"], (0, N2f - out_channels))

    return {
        "mask_in": vertex_mask(H, W)[..., None],            # (5, H, W, 1)
        "mask_rows": row_mask(H, W),                        # (5, Mrows, 1)
        "conv1_w": conv1_w,
        "conv1_b": conv1_b.reshape(1, N1c).astype(jnp.float32),
        "conv2_w": conv2_w,
        "conv2_b": conv2_b.reshape(1, N2c).astype(jnp.float32),
        "fc1_w": w1.astype(jnp.bfloat16),
        "fc1_b": fc1_b.reshape(1, N1f).astype(jnp.float32),
        "fc2_w": w2.astype(jnp.bfloat16),
        "fc2_b": fc2_b.reshape(1, N2f).astype(jnp.float32),
    }


# ---------------------------------------------------------------------------
# forward
# ---------------------------------------------------------------------------
def ico_cnn_forward(prep, x, *, out_channels):
    B, Cin, Rin, ch, H, W = x.shape
    assert ch == 5
    K1 = Cin * Rin
    K1p = _round_up(K1, 8)

    # One-time layout transform of the raw (tiny) input: channels-last,
    # CleanVertices on conv1's input, zero spatial pad, flatten each chart
    # plane to the guarded lattice the direct-conv kernel indexes.
    # TODO(synk): icoCNN PadIco does cross-chart icosahedral wrap padding (with
    # orientation rotation for Rin=6); zero spatial padding used here.
    xt = jnp.transpose(x, (0, 3, 4, 5, 1, 2)).reshape(B, 5, H, W, K1)
    xt = (xt * prep["mask_in"]).astype(jnp.bfloat16)
    xt = jnp.pad(xt, ((0, 0), (0, 0), (1, 1), (1, 1), (0, K1p - K1)))
    xf = xt.reshape(B * 5, (H + 2) * (W + 2), K1p)
    xf = jnp.pad(xf, ((0, 0), (1, 1), (0, 0)))              # flat-lattice guards

    # conv1 (+fused ReLU + CleanVertices); output written straight onto the
    # zero-padded lattice conv2 reads (halo_out=True), bf16, 128-lane channels.
    y1 = ico_conv(xf, prep["conv1_w"], prep["conv1_b"], prep["mask_rows"],
                  H=H, W=W, relu=True, halo_out=True)
    # conv2 (+fused ReLU + CleanVertices), bf16, 128-lane channels.
    y2 = ico_conv(y1, prep["conv2_w"], prep["conv2_b"], prep["mask_rows"],
                  H=H, W=W, relu=True, halo_out=False)

    # Flatten (the torch .view(B,-1) ordering is baked into fc1_w's row order
    # at prepare time) and run fc1 + ReLU + fc2 as one fused Pallas launch.
    feats = y2.reshape(B, -1)
    out = fc_head(feats, prep["fc1_w"], prep["fc1_b"],
                  prep["fc2_w"], prep["fc2_b"])
    return out[:, :out_channels]


if __name__ == "__main__":
    r = 2
    B, in_channels, R_in, out_channels = 2, 4, 1, 10
    H, W = 2 ** r, 2 ** (r + 1)

    key = jax.random.PRNGKey(0)
    kx, kp = jax.random.split(key)
    x = jax.random.normal(kx, (B, in_channels, R_in, 5, H, W), jnp.float32)
    params = init_params(kp, r, in_channels, out_channels, R_in)
    prep = prepare_params(params, r, in_channels, out_channels, R_in)

    fwd = jax.jit(functools.partial(ico_cnn_forward, out_channels=out_channels))
    out = fwd(prep, x)
    jax.block_until_ready(out)

    assert out.shape == (B, out_channels), out.shape
    assert bool(jnp.all(jnp.isfinite(out)))
    print("KERNEL_OK")
</pallas_src>

<mosaic_0001>
module attributes {stable_mosaic.version = 11 : i64} {
  func.func @_ico_conv_kernel(%arg0: i32, %arg1: memref<1x62x8xbf16, #tpu.memory_space<vmem>>, %arg2: memref<9x8x128xbf16, #tpu.memory_space<vmem>>, %arg3: memref<1x128xf32, #tpu.memory_space<vmem>>, %arg4: memref<1x40x1xf32, #tpu.memory_space<vmem>>, %arg5: memref<1x62x128xbf16, #tpu.memory_space<vmem>>) attributes {dimension_semantics = [#tpu.dimension_semantics<parallel>], iteration_bounds = array<i64: 10>, scalar_prefetch = 0 : i64, scratch_operands = 0 : i64, tpu.core_type = #tpu.core_type<tc>, window_params = [{transform_indices = @transform_0, window_bounds = array<i64: 1, 62, 8>}, {pipeline_mode = #tpu.pipeline_mode<synchronous>, transform_indices = @transform_1, window_bounds = array<i64: 9, 8, 128>}, {pipeline_mode = #tpu.pipeline_mode<synchronous>, transform_indices = @transform_2, window_bounds = array<i64: 1, 128>}, {transform_indices = @transform_3, window_bounds = array<i64: 1, 40, 1>}, {transform_indices = @transform_4, window_bounds = array<i64: 1, 62, 128>}]} {
    %c0 = arith.constant 0 : index
    %c0_0 = arith.constant 0 : index
    %c0_1 = arith.constant 0 : index
    %0 = vector.load %arg1[%c0, %c0_0, %c0_1] : memref<1x62x8xbf16, #tpu.memory_space<vmem>>, vector<1x40x8xbf16>
    %1 = vector.shape_cast %0 : vector<1x40x8xbf16> to vector<40x8xbf16>
    %c0_2 = arith.constant 0 : index
    %c0_3 = arith.constant 0 : index
    %c0_4 = arith.constant 0 : index
    %2 = vector.load %arg2[%c0_2, %c0_3, %c0_4] : memref<9x8x128xbf16, #tpu.memory_space<vmem>>, vector<1x8x128xbf16>
    %3 = vector.shape_cast %2 : vector<1x8x128xbf16> to vector<8x128xbf16>
    %cst = arith.constant dense<0.000000e+00> : vector<40x128xf32>
    %4 = tpu.matmul %1, %3, %cst {dimension_numbers = #tpu.dot_dimension_numbers<[1], [0], [0], [1], [0, 0, 1, 1], [], []>} : vector<40x8xbf16>, vector<8x128xbf16>, vector<40x128xf32> -> vector<40x128xf32>
    %c0_5 = arith.constant 0 : index
    %c1 = arith.constant 1 : index
    %c0_6 = arith.constant 0 : index
    %5 = vector.load %arg1[%c0_5, %c1, %c0_6] : memref<1x62x8xbf16, #tpu.memory_space<vmem>>, vector<1x40x8xbf16>
    %6 = vector.shape_cast %5 : vector<1x40x8xbf16> to vector<40x8xbf16>
    %c1_7 = arith.constant 1 : index
    %c0_8 = arith.constant 0 : index
    %c0_9 = arith.constant 0 : index
    %7 = vector.load %arg2[%c1_7, %c0_8, %c0_9] : memref<9x8x128xbf16, #tpu.memory_space<vmem>>, vector<1x8x128xbf16>
    %8 = vector.shape_cast %7 : vector<1x8x128xbf16> to vector<8x128xbf16>
    %cst_10 = arith.constant dense<0.000000e+00> : vector<40x128xf32>
    %9 = tpu.matmul %6, %8, %cst_10 {dimension_numbers = #tpu.dot_dimension_numbers<[1], [0], [0], [1], [0, 0, 1, 1], [], []>} : vector<40x8xbf16>, vector<8x128xbf16>, vector<40x128xf32> -> vector<40x128xf32>
    %10 = arith.addf %4, %9 : vector<40x128xf32>
    %c0_11 = arith.constant 0 : index
    %c2 = arith.constant 2 : index
    %c0_12 = arith.constant 0 : index
    %11 = vector.load %arg1[%c0_11, %c2, %c0_12] : memref<1x62x8xbf16, #tpu.memory_space<vmem>>, vector<1x40x8xbf16>
    %12 = vector.shape_cast %11 : vector<1x40x8xbf16> to vector<40x8xbf16>
    %c2_13 = arith.constant 2 : index
    %c0_14 = arith.constant 0 : index
    %c0_15 = arith.constant 0 : index
    %13 = vector.load %arg2[%c2_13, %c0_14, %c0_15] : memref<9x8x128xbf16, #tpu.memory_space<vmem>>, vector<1x8x128xbf16>
    %14 = vector.shape_cast %13 : vector<1x8x128xbf16> to vector<8x128xbf16>
    %cst_16 = arith.constant dense<0.000000e+00> : vector<40x128xf32>
    %15 = tpu.matmul %12, %14, %cst_16 {dimension_numbers = #tpu.dot_dimension_numbers<[1], [0], [0], [1], [0, 0, 1, 1], [], []>} : vector<40x8xbf16>, vector<8x128xbf16>, vector<40x128xf32> -> vector<40x128xf32>
    %16 = arith.addf %10, %15 : vector<40x128xf32>
    %c0_17 = arith.constant 0 : index
    %c10 = arith.constant 10 : index
    %c0_18 = arith.constant 0 : index
    %17 = vector.load %arg1[%c0_17, %c10, %c0_18] : memref<1x62x8xbf16, #tpu.memory_space<vmem>>, vector<1x40x8xbf16>
    %18 = vector.shape_cast %17 : vector<1x40x8xbf16> to vector<40x8xbf16>
    %c3 = arith.constant 3 : index
    %c0_19 = arith.constant 0 : index
    %c0_20 = arith.constant 0 : index
    %19 = vector.load %arg2[%c3, %c0_19, %c0_20] : memref<9x8x128xbf16, #tpu.memory_space<vmem>>, vector<1x8x128xbf16>
    %20 = vector.shape_cast %19 : vector<1x8x128xbf16> to vector<8x128xbf16>
    %cst_21 = arith.constant dense<0.000000e+00> : vector<40x128xf32>
    %21 = tpu.matmul %18, %20, %cst_21 {dimension_numbers = #tpu.dot_dimension_numbers<[1], [0], [0], [1], [0, 0, 1, 1], [], []>} : vector<40x8xbf16>, vector<8x128xbf16>, vector<40x128xf32> -> vector<40x128xf32>
    %22 = arith.addf %16, %21 : vector<40x128xf32>
    %c0_22 = arith.constant 0 : index
    %c11 = arith.constant 11 : index
    %c0_23 = arith.constant 0 : index
    %23 = vector.load %arg1[%c0_22, %c11, %c0_23] : memref<1x62x8xbf16, #tpu.memory_space<vmem>>, vector<1x40x8xbf16>
    %24 = vector.shape_cast %23 : vector<1x40x8xbf16> to vector<40x8xbf16>
    %c4 = arith.constant 4 : index
    %c0_24 = arith.constant 0 : index
    %c0_25 = arith.constant 0 : index
    %25 = vector.load %arg2[%c4, %c0_24, %c0_25] : memref<9x8x128xbf16, #tpu.memory_space<vmem>>, vector<1x8x128xbf16>
    %26 = vector.shape_cast %25 : vector<1x8x128xbf16> to vector<8x128xbf16>
    %cst_26 = arith.constant dense<0.000000e+00> : vector<40x128xf32>
    %27 = tpu.matmul %24, %26, %cst_26 {dimension_numbers = #tpu.dot_dimension_numbers<[1], [0], [0], [1], [0, 0, 1, 1], [], []>} : vector<40x8xbf16>, vector<8x128xbf16>, vector<40x128xf32> -> vector<40x128xf32>
    %28 = arith.addf %22, %27 : vector<40x128xf32>
    %c0_27 = arith.constant 0 : index
    %c12 = arith.constant 12 : index
    %c0_28 = arith.constant 0 : index
    %29 = vector.load %arg1[%c0_27, %c12, %c0_28] : memref<1x62x8xbf16, #tpu.memory_space<vmem>>, vector<1x40x8xbf16>
    %30 = vector.shape_cast %29 : vector<1x40x8xbf16> to vector<40x8xbf16>
    %c5 = arith.constant 5 : index
    %c0_29 = arith.constant 0 : index
    %c0_30 = arith.constant 0 : index
    %31 = vector.load %arg2[%c5, %c0_29, %c0_30] : memref<9x8x128xbf16, #tpu.memory_space<vmem>>, vector<1x8x128xbf16>
    %32 = vector.shape_cast %31 : vector<1x8x128xbf16> to vector<8x128xbf16>
    %cst_31 = arith.constant dense<0.000000e+00> : vector<40x128xf32>
    %33 = tpu.matmul %30, %32, %cst_31 {dimension_numbers = #tpu.dot_dimension_numbers<[1], [0], [0], [1], [0, 0, 1, 1], [], []>} : vector<40x8xbf16>, vector<8x128xbf16>, vector<40x128xf32> -> vector<40x128xf32>
    %34 = arith.addf %28, %33 : vector<40x128xf32>
    %c0_32 = arith.constant 0 : index
    %c20 = arith.constant 20 : index
    %c0_33 = arith.constant 0 : index
    %35 = vector.load %arg1[%c0_32, %c20, %c0_33] : memref<1x62x8xbf16, #tpu.memory_space<vmem>>, vector<1x40x8xbf16>
    %36 = vector.shape_cast %35 : vector<1x40x8xbf16> to vector<40x8xbf16>
    %c6 = arith.constant 6 : index
    %c0_34 = arith.constant 0 : index
    %c0_35 = arith.constant 0 : index
    %37 = vector.load %arg2[%c6, %c0_34, %c0_35] : memref<9x8x128xbf16, #tpu.memory_space<vmem>>, vector<1x8x128xbf16>
    %38 = vector.shape_cast %37 : vector<1x8x128xbf16> to vector<8x128xbf16>
    %cst_36 = arith.constant dense<0.000000e+00> : vector<40x128xf32>
    %39 = tpu.matmul %36, %38, %cst_36 {dimension_numbers = #tpu.dot_dimension_numbers<[1], [0], [0], [1], [0, 0, 1, 1], [], []>} : vector<40x8xbf16>, vector<8x128xbf16>, vector<40x128xf32> -> vector<40x128xf32>
    %40 = arith.addf %34, %39 : vector<40x128xf32>
    %c0_37 = arith.constant 0 : index
    %c21 = arith.constant 21 : index
    %c0_38 = arith.constant 0 : index
    %41 = vector.load %arg1[%c0_37, %c21, %c0_38] : memref<1x62x8xbf16, #tpu.memory_space<vmem>>, vector<1x40x8xbf16>
    %42 = vector.shape_cast %41 : vector<1x40x8xbf16> to vector<40x8xbf16>
    %c7 = arith.constant 7 : index
    %c0_39 = arith.constant 0 : index
    %c0_40 = arith.constant 0 : index
    %43 = vector.load %arg2[%c7, %c0_39, %c0_40] : memref<9x8x128xbf16, #tpu.memory_space<vmem>>, vector<1x8x128xbf16>
    %44 = vector.shape_cast %43 : vector<1x8x128xbf16> to vector<8x128xbf16>
    %cst_41 = arith.constant dense<0.000000e+00> : vector<40x128xf32>
    %45 = tpu.matmul %42, %44, %cst_41 {dimension_numbers = #tpu.dot_dimension_numbers<[1], [0], [0], [1], [0, 0, 1, 1], [], []>} : vector<40x8xbf16>, vector<8x128xbf16>, vector<40x128xf32> -> vector<40x128xf32>
    %46 = arith.addf %40, %45 : vector<40x128xf32>
    %c0_42 = arith.constant 0 : index
    %c22 = arith.constant 22 : index
    %c0_43 = arith.constant 0 : index
    %47 = vector.load %arg1[%c0_42, %c22, %c0_43] : memref<1x62x8xbf16, #tpu.memory_space<vmem>>, vector<1x40x8xbf16>
    %48 = vector.shape_cast %47 : vector<1x40x8xbf16> to vector<40x8xbf16>
    %c8 = arith.constant 8 : index
    %c0_44 = arith.constant 0 : index
    %c0_45 = arith.constant 0 : index
    %49 = vector.load %arg2[%c8, %c0_44, %c0_45] : memref<9x8x128xbf16, #tpu.memory_space<vmem>>, vector<1x8x128xbf16>
    %50 = vector.shape_cast %49 : vector<1x8x128xbf16> to vector<8x128xbf16>
    %cst_46 = arith.constant dense<0.000000e+00> : vector<40x128xf32>
    %51 = tpu.matmul %48, %50, %cst_46 {dimension_numbers = #tpu.dot_dimension_numbers<[1], [0], [0], [1], [0, 0, 1, 1], [], []>} : vector<40x8xbf16>, vector<8x128xbf16>, vector<40x128xf32> -> vector<40x128xf32>
    %52 = arith.addf %46, %51 : vector<40x128xf32>
    %c0_47 = arith.constant 0 : index
    %c0_48 = arith.constant 0 : index
    %53 = vector.load %arg3[%c0_47, %c0_48] : memref<1x128xf32, #tpu.memory_space<vmem>>, vector<1x128xf32>
    %54 = vector.broadcast %53 : vector<1x128xf32> to vector<40x128xf32>
    %55 = arith.addf %52, %54 : vector<40x128xf32>
    %cst_49 = arith.constant 0.000000e+00 : f32
    %56 = vector.broadcast %cst_49 : f32 to vector<40x128xf32>
    %57 = arith.maximumf %55, %56 : vector<40x128xf32>
    %c0_50 = arith.constant 0 : index
    %c0_51 = arith.constant 0 : index
    %c0_52 = arith.constant 0 : index
    %58 = vector.load %arg4[%c0_50, %c0_51, %c0_52] : memref<1x40x1xf32, #tpu.memory_space<vmem>>, vector<1x40x1xf32>
    %59 = vector.shape_cast %58 : vector<1x40x1xf32> to vector<40x1xf32>
    %60 = vector.broadcast %59 : vector<40x1xf32> to vector<40x128xf32>
    %61 = arith.mulf %57, %60 : vector<40x128xf32>
    %62 = arith.truncf %61 : vector<40x128xf32> to vector<40x128xbf16>
    %cst_53 = arith.constant 0.000000e+00 : bf16
    %63 = vector.broadcast %cst_53 : bf16 to vector<11x128xbf16>
    %64 = tpu.concatenate %63, %62, %63 in 0 : vector<11x128xbf16>, vector<40x128xbf16>, vector<11x128xbf16> -> vector<62x128xbf16>
    %c0_54 = arith.constant 0 : index
    %c0_55 = arith.constant 0 : index
    %c0_56 = arith.constant 0 : index
    %65 = vector.load %arg5[%c0_54, %c0_55, %c0_56] : memref<1x62x128xbf16, #tpu.memory_space<vmem>>, vector<1x62x128xbf16>
    %66 = vector.shape_cast %65 : vector<1x62x128xbf16> to vector<62x128xbf16>
    %67 = vector.shape_cast %64 : vector<62x128xbf16> to vector<1x62x128xbf16>
    tpu.vector_store %arg5[%c0_54, %c0_55, %c0_56], %67 {strides = array<i32>} : memref<1x62x128xbf16, #tpu.memory_space<vmem>>, vector<1x62x128xbf16>,
    return
  }
  func.func @transform_0(%arg0: i32) -> (i32, i32, i32) {
    %c0_i32 = arith.constant 0 : i32
    %c0_i32_0 = arith.constant 0 : i32
    %c0_i32_1 = arith.constant 0 : i32
    return %arg0, %c0_i32, %c0_i32_0 : i32, i32, i32
  }
  func.func @transform_1(%arg0: i32) -> (i32, i32, i32) {
    %c0_i32 = arith.constant 0 : i32
    %c0_i32_0 = arith.constant 0 : i32
    %c0_i32_1 = arith.constant 0 : i32
    %c0_i32_2 = arith.constant 0 : i32
    return %c0_i32, %c0_i32_0, %c0_i32_1 : i32, i32, i32
  }
  func.func @transform_2(%arg0: i32) -> (i32, i32) {
    %c0_i32 = arith.constant 0 : i32
    %c0_i32_0 = arith.constant 0 : i32
    %c0_i32_1 = arith.constant 0 : i32
    return %c0_i32, %c0_i32_0 : i32, i32
  }
  func.func @transform_3(%arg0: i32) -> (i32, i32, i32) {
    %c5_i32 = arith.constant 5 : i32
    %c0_i32 = arith.constant 0 : i32
    %0 = arith.cmpi eq, %c5_i32, %c0_i32 : i32
    %c1_i32 = arith.constant 1 : i32
    %1 = arith.select %0, %c1_i32, %c5_i32 : i32
    %2 = arith.remsi %arg0, %1 : i32
    %c0_i32_0 = arith.constant 0 : i32
    %3 = arith.cmpi ne, %2, %c0_i32_0 : i32
    %c0_i32_1 = arith.constant 0 : i32
    %4 = arith.cmpi slt, %2, %c0_i32_1 : i32
    %c0_i32_2 = arith.constant 0 : i32
    %5 = arith.cmpi slt, %1, %c0_i32_2 : i32
    %6 = arith.xori %4, %5 : i1
    %7 = arith.andi %6, %3 : i1
    %8 = arith.addi %2, %1 : i32
    %9 = arith.select %7, %8, %2 : i32
    %c0_i32_3 = arith.constant 0 : i32
    %c0_i32_4 = arith.constant 0 : i32
    %c0_i32_5 = arith.constant 0 : i32
    return %9, %c0_i32_3, %c0_i32_4 : i32, i32, i32
  }
  func.func @transform_4(%arg0: i32) -> (i32, i32, i32) {
    %c0_i32 = arith.constant 0 : i32
    %c0_i32_0 = arith.constant 0 : i32
    %c0_i32_1 = arith.constant 0 : i32
    return %arg0, %c0_i32, %c0_i32_0 : i32, i32, i32
  }
}

module attributes {stable_mosaic.version = 11 : i64} {
  func.func @_ico_conv_kernel(%arg0: i32, %arg1: memref<1x62x128xbf16, #tpu.memory_space<vmem>>, %arg2: memref<9x128x128xbf16, #tpu.memory_space<vmem>>, %arg3: memref<1x128xf32, #tpu.memory_space<vmem>>, %arg4: memref<1x40x1xf32, #tpu.memory_space<vmem>>, %arg5: memref<1x40x128xbf16, #tpu.memory_space<vmem>>) attributes {dimension_semantics = [#tpu.dimension_semantics<parallel>], iteration_bounds = array<i64: 10>, scalar_prefetch = 0 : i64, scratch_operands = 0 : i64, tpu.core_type = #tpu.core_type<tc>, window_params = [{transform_indices = @transform_0, window_bounds = array<i64: 1, 62, 128>}, {pipeline_mode = #tpu.pipeline_mode<synchronous>, transform_indices = @transform_1, window_bounds = array<i64: 9, 128, 128>}, {pipeline_mode = #tpu.pipeline_mode<synchronous>, transform_indices = @transform_2, window_bounds = array<i64: 1, 128>}, {transform_indices = @transform_3, window_bounds = array<i64: 1, 40, 1>}, {transform_indices = @transform_4, window_bounds = array<i64: 1, 40, 128>}]} {
    %c0 = arith.constant 0 : index
    %c0_0 = arith.constant 0 : index
    %c0_1 = arith.constant 0 : index
    %0 = vector.load %arg1[%c0, %c0_0, %c0_1] : memref<1x62x128xbf16, #tpu.memory_space<vmem>>, vector<1x40x128xbf16>
    %1 = vector.shape_cast %0 : vector<1x40x128xbf16> to vector<40x128xbf16>
    %c0_2 = arith.constant 0 : index
    %c0_3 = arith.constant 0 : index
    %c0_4 = arith.constant 0 : index
    %2 = vector.load %arg2[%c0_2, %c0_3, %c0_4] : memref<9x128x128xbf16, #tpu.memory_space<vmem>>, vector<1x128x128xbf16>
    %3 = vector.shape_cast %2 : vector<1x128x128xbf16> to vector<128x128xbf16>
    %cst = arith.constant dense<0.000000e+00> : vector<40x128xf32>
    %4 = tpu.matmul %1, %3, %cst {dimension_numbers = #tpu.dot_dimension_numbers<[1], [0], [0], [1], [0, 0, 1, 1], [], []>} : vector<40x128xbf16>, vector<128x128xbf16>, vector<40x128xf32> -> vector<40x128xf32>
    %c0_5 = arith.constant 0 : index
    %c1 = arith.constant 1 : index
    %c0_6 = arith.constant 0 : index
    %5 = vector.load %arg1[%c0_5, %c1, %c0_6] : memref<1x62x128xbf16, #tpu.memory_space<vmem>>, vector<1x40x128xbf16>
    %6 = vector.shape_cast %5 : vector<1x40x128xbf16> to vector<40x128xbf16>
    %c1_7 = arith.constant 1 : index
    %c0_8 = arith.constant 0 : index
    %c0_9 = arith.constant 0 : index
    %7 = vector.load %arg2[%c1_7, %c0_8, %c0_9] : memref<9x128x128xbf16, #tpu.memory_space<vmem>>, vector<1x128x128xbf16>
    %8 = vector.shape_cast %7 : vector<1x128x128xbf16> to vector<128x128xbf16>
    %cst_10 = arith.constant dense<0.000000e+00> : vector<40x128xf32>
    %9 = tpu.matmul %6, %8, %cst_10 {dimension_numbers = #tpu.dot_dimension_numbers<[1], [0], [0], [1], [0, 0, 1, 1], [], []>} : vector<40x128xbf16>, vector<128x128xbf16>, vector<40x128xf32> -> vector<40x128xf32>
    %10 = arith.addf %4, %9 : vector<40x128xf32>
    %c0_11 = arith.constant 0 : index
    %c2 = arith.constant 2 : index
    %c0_12 = arith.constant 0 : index
    %11 = vector.load %arg1[%c0_11, %c2, %c0_12] : memref<1x62x128xbf16, #tpu.memory_space<vmem>>, vector<1x40x128xbf16>
    %12 = vector.shape_cast %11 : vector<1x40x128xbf16> to vector<40x128xbf16>
    %c2_13 = arith.constant 2 : index
    %c0_14 = arith.constant 0 : index
    %c0_15 = arith.constant 0 : index
    %13 = vector.load %arg2[%c2_13, %c0_14, %c0_15] : memref<9x128x128xbf16, #tpu.memory_space<vmem>>, vector<1x128x128xbf16>
    %14 = vector.shape_cast %13 : vector<1x128x128xbf16> to vector<128x128xbf16>
    %cst_16 = arith.constant dense<0.000000e+00> : vector<40x128xf32>
    %15 = tpu.matmul %12, %14, %cst_16 {dimension_numbers = #tpu.dot_dimension_numbers<[1], [0], [0], [1], [0, 0, 1, 1], [], []>} : vector<40x128xbf16>, vector<128x128xbf16>, vector<40x128xf32> -> vector<40x128xf32>
    %16 = arith.addf %10, %15 : vector<40x128xf32>
    %c0_17 = arith.constant 0 : index
    %c10 = arith.constant 10 : index
    %c0_18 = arith.constant 0 : index
    %17 = vector.load %arg1[%c0_17, %c10, %c0_18] : memref<1x62x128xbf16, #tpu.memory_space<vmem>>, vector<1x40x128xbf16>
    %18 = vector.shape_cast %17 : vector<1x40x128xbf16> to vector<40x128xbf16>
    %c3 = arith.constant 3 : index
    %c0_19 = arith.constant 0 : index
    %c0_20 = arith.constant 0 : index
    %19 = vector.load %arg2[%c3, %c0_19, %c0_20] : memref<9x128x128xbf16, #tpu.memory_space<vmem>>, vector<1x128x128xbf16>
    %20 = vector.shape_cast %19 : vector<1x128x128xbf16> to vector<128x128xbf16>
    %cst_21 = arith.constant dense<0.000000e+00> : vector<40x128xf32>
    %21 = tpu.matmul %18, %20, %cst_21 {dimension_numbers = #tpu.dot_dimension_numbers<[1], [0], [0], [1], [0, 0, 1, 1], [], []>} : vector<40x128xbf16>, vector<128x128xbf16>, vector<40x128xf32> -> vector<40x128xf32>
    %22 = arith.addf %16, %21 : vector<40x128xf32>
    %c0_22 = arith.constant 0 : index
    %c11 = arith.constant 11 : index
    %c0_23 = arith.constant 0 : index
    %23 = vector.load %arg1[%c0_22, %c11, %c0_23] : memref<1x62x128xbf16, #tpu.memory_space<vmem>>, vector<1x40x128xbf16>
    %24 = vector.shape_cast %23 : vector<1x40x128xbf16> to vector<40x128xbf16>
    %c4 = arith.constant 4 : index
    %c0_24 = arith.constant 0 : index
    %c0_25 = arith.constant 0 : index
    %25 = vector.load %arg2[%c4, %c0_24, %c0_25] : memref<9x128x128xbf16, #tpu.memory_space<vmem>>, vector<1x128x128xbf16>
    %26 = vector.shape_cast %25 : vector<1x128x128xbf16> to vector<128x128xbf16>
    %cst_26 = arith.constant dense<0.000000e+00> : vector<40x128xf32>
    %27 = tpu.matmul %24, %26, %cst_26 {dimension_numbers = #tpu.dot_dimension_numbers<[1], [0], [0], [1], [0, 0, 1, 1], [], []>} : vector<40x128xbf16>, vector<128x128xbf16>, vector<40x128xf32> -> vector<40x128xf32>
    %28 = arith.addf %22, %27 : vector<40x128xf32>
    %c0_27 = arith.constant 0 : index
    %c12 = arith.constant 12 : index
    %c0_28 = arith.constant 0 : index
    %29 = vector.load %arg1[%c0_27, %c12, %c0_28] : memref<1x62x128xbf16, #tpu.memory_space<vmem>>, vector<1x40x128xbf16>
    %30 = vector.shape_cast %29 : vector<1x40x128xbf16> to vector<40x128xbf16>
    %c5 = arith.constant 5 : index
    %c0_29 = arith.constant 0 : index
    %c0_30 = arith.constant 0 : index
    %31 = vector.load %arg2[%c5, %c0_29, %c0_30] : memref<9x128x128xbf16, #tpu.memory_space<vmem>>, vector<1x128x128xbf16>
    %32 = vector.shape_cast %31 : vector<1x128x128xbf16> to vector<128x128xbf16>
    %cst_31 = arith.constant dense<0.000000e+00> : vector<40x128xf32>
    %33 = tpu.matmul %30, %32, %cst_31 {dimension_numbers = #tpu.dot_dimension_numbers<[1], [0], [0], [1], [0, 0, 1, 1], [], []>} : vector<40x128xbf16>, vector<128x128xbf16>, vector<40x128xf32> -> vector<40x128xf32>
    %34 = arith.addf %28, %33 : vector<40x128xf32>
    %c0_32 = arith.constant 0 : index
    %c20 = arith.constant 20 : index
    %c0_33 = arith.constant 0 : index
    %35 = vector.load %arg1[%c0_32, %c20, %c0_33] : memref<1x62x128xbf16, #tpu.memory_space<vmem>>, vector<1x40x128xbf16>
    %36 = vector.shape_cast %35 : vector<1x40x128xbf16> to vector<40x128xbf16>
    %c6 = arith.constant 6 : index
    %c0_34 = arith.constant 0 : index
    %c0_35 = arith.constant 0 : index
    %37 = vector.load %arg2[%c6, %c0_34, %c0_35] : memref<9x128x128xbf16, #tpu.memory_space<vmem>>, vector<1x128x128xbf16>
    %38 = vector.shape_cast %37 : vector<1x128x128xbf16> to vector<128x128xbf16>
    %cst_36 = arith.constant dense<0.000000e+00> : vector<40x128xf32>
    %39 = tpu.matmul %36, %38, %cst_36 {dimension_numbers = #tpu.dot_dimension_numbers<[1], [0], [0], [1], [0, 0, 1, 1], [], []>} : vector<40x128xbf16>, vector<128x128xbf16>, vector<40x128xf32> -> vector<40x128xf32>
    %40 = arith.addf %34, %39 : vector<40x128xf32>
    %c0_37 = arith.constant 0 : index
    %c21 = arith.constant 21 : index
    %c0_38 = arith.constant 0 : index
    %41 = vector.load %arg1[%c0_37, %c21, %c0_38] : memref<1x62x128xbf16, #tpu.memory_space<vmem>>, vector<1x40x128xbf16>
    %42 = vector.shape_cast %41 : vector<1x40x128xbf16> to vector<40x128xbf16>
    %c7 = arith.constant 7 : index
    %c0_39 = arith.constant 0 : index
    %c0_40 = arith.constant 0 : index
    %43 = vector.load %arg2[%c7, %c0_39, %c0_40] : memref<9x128x128xbf16, #tpu.memory_space<vmem>>, vector<1x128x128xbf16>
    %44 = vector.shape_cast %43 : vector<1x128x128xbf16> to vector<128x128xbf16>
    %cst_41 = arith.constant dense<0.000000e+00> : vector<40x128xf32>
    %45 = tpu.matmul %42, %44, %cst_41 {dimension_numbers = #tpu.dot_dimension_numbers<[1], [0], [0], [1], [0, 0, 1, 1], [], []>} : vector<40x128xbf16>, vector<128x128xbf16>, vector<40x128xf32> -> vector<40x128xf32>
    %46 = arith.addf %40, %45 : vector<40x128xf32>
    %c0_42 = arith.constant 0 : index
    %c22 = arith.constant 22 : index
    %c0_43 = arith.constant 0 : index
    %47 = vector.load %arg1[%c0_42, %c22, %c0_43] : memref<1x62x128xbf16, #tpu.memory_space<vmem>>, vector<1x40x128xbf16>
    %48 = vector.shape_cast %47 : vector<1x40x128xbf16> to vector<40x128xbf16>
    %c8 = arith.constant 8 : index
    %c0_44 = arith.constant 0 : index
    %c0_45 = arith.constant 0 : index
    %49 = vector.load %arg2[%c8, %c0_44, %c0_45] : memref<9x128x128xbf16, #tpu.memory_space<vmem>>, vector<1x128x128xbf16>
    %50 = vector.shape_cast %49 : vector<1x128x128xbf16> to vector<128x128xbf16>
    %cst_46 = arith.constant dense<0.000000e+00> : vector<40x128xf32>
    %51 = tpu.matmul %48, %50, %cst_46 {dimension_numbers = #tpu.dot_dimension_numbers<[1], [0], [0], [1], [0, 0, 1, 1], [], []>} : vector<40x128xbf16>, vector<128x128xbf16>, vector<40x128xf32> -> vector<40x128xf32>
    %52 = arith.addf %46, %51 : vector<40x128xf32>
    %c0_47 = arith.constant 0 : index
    %c0_48 = arith.constant 0 : index
    %53 = vector.load %arg3[%c0_47, %c0_48] : memref<1x128xf32, #tpu.memory_space<vmem>>, vector<1x128xf32>
    %54 = vector.broadcast %53 : vector<1x128xf32> to vector<40x128xf32>
    %55 = arith.addf %52, %54 : vector<40x128xf32>
    %cst_49 = arith.constant 0.000000e+00 : f32
    %56 = vector.broadcast %cst_49 : f32 to vector<40x128xf32>
    %57 = arith.maximumf %55, %56 : vector<40x128xf32>
    %c0_50 = arith.constant 0 : index
    %c0_51 = arith.constant 0 : index
    %c0_52 = arith.constant 0 : index
    %58 = vector.load %arg4[%c0_50, %c0_51, %c0_52] : memref<1x40x1xf32, #tpu.memory_space<vmem>>, vector<1x40x1xf32>
    %59 = vector.shape_cast %58 : vector<1x40x1xf32> to vector<40x1xf32>
    %60 = vector.broadcast %59 : vector<40x1xf32> to vector<40x128xf32>
    %61 = arith.mulf %57, %60 : vector<40x128xf32>
    %62 = arith.truncf %61 : vector<40x128xf32> to vector<40x128xbf16>
    %c0_53 = arith.constant 0 : index
    %c0_54 = arith.constant 0 : index
    %c0_55 = arith.constant 0 : index
    %63 = vector.load %arg5[%c0_53, %c0_54, %c0_55] : memref<1x40x128xbf16, #tpu.memory_space<vmem>>, vector<1x40x128xbf16>
    %64 = vector.shape_cast %63 : vector<1x40x128xbf16> to vector<40x128xbf16>
    %65 = vector.shape_cast %62 : vector<40x128xbf16> to vector<1x40x128xbf16>
    tpu.vector_store %arg5[%c0_53, %c0_54, %c0_55], %65 {strides = array<i32>} : memref<1x40x128xbf16, #tpu.memory_space<vmem>>, vector<1x40x128xbf16>,
    return
  }
  func.func @transform_0(%arg0: i32) -> (i32, i32, i32) {
    %c0_i32 = arith.constant 0 : i32
    %c0_i32_0 = arith.constant 0 : i32
    %c0_i32_1 = arith.constant 0 : i32
    return %arg0, %c0_i32, %c0_i32_0 : i32, i32, i32
  }
  func.func @transform_1(%arg0: i32) -> (i32, i32, i32) {
    %c0_i32 = arith.constant 0 : i32
    %c0_i32_0 = arith.constant 0 : i32
    %c0_i32_1 = arith.constant 0 : i32
    %c0_i32_2 = arith.constant 0 : i32
    return %c0_i32, %c0_i32_0, %c0_i32_1 : i32, i32, i32
  }
  func.func @transform_2(%arg0: i32) -> (i32, i32) {
    %c0_i32 = arith.constant 0 : i32
    %c0_i32_0 = arith.constant 0 : i32
    %c0_i32_1 = arith.constant 0 : i32
    return %c0_i32, %c0_i32_0 : i32, i32
  }
  func.func @transform_3(%arg0: i32) -> (i32, i32, i32) {
    %c5_i32 = arith.constant 5 : i32
    %c0_i32 = arith.constant 0 : i32
    %0 = arith.cmpi eq, %c5_i32, %c0_i32 : i32
    %c1_i32 = arith.constant 1 : i32
    %1 = arith.select %0, %c1_i32, %c5_i32 : i32
    %2 = arith.remsi %arg0, %1 : i32
    %c0_i32_0 = arith.constant 0 : i32
    %3 = arith.cmpi ne, %2, %c0_i32_0 : i32
    %c0_i32_1 = arith.constant 0 : i32
    %4 = arith.cmpi slt, %2, %c0_i32_1 : i32
    %c0_i32_2 = arith.constant 0 : i32
    %5 = arith.cmpi slt, %1, %c0_i32_2 : i32
    %6 = arith.xori %4, %5 : i1
    %7 = arith.andi %6, %3 : i1
    %8 = arith.addi %2, %1 : i32
    %9 = arith.select %7, %8, %2 : i32
    %c0_i32_3 = arith.constant 0 : i32
    %c0_i32_4 = arith.constant 0 : i32
    %c0_i32_5 = arith.constant 0 : i32
    return %9, %c0_i32_3, %c0_i32_4 : i32, i32, i32
  }
  func.func @transform_4(%arg0: i32) -> (i32, i32, i32) {
    %c0_i32 = arith.constant 0 : i32
    %c0_i32_0 = arith.constant 0 : i32
    %c0_i32_1 = arith.constant 0 : i32
    return %arg0, %c0_i32, %c0_i32_0 : i32, i32, i32
  }
}

module attributes {stable_mosaic.version = 11 : i64} {
  func.func @_fc_head_acc_kernel(%arg0: i32, %arg1: memref<8x1024xbf16, #tpu.memory_space<vmem>>, %arg2: memref<1024x128xbf16, #tpu.memory_space<vmem>>, %arg3: memref<1x128xf32, #tpu.memory_space<vmem>>, %arg4: memref<128x128xbf16, #tpu.memory_space<vmem>>, %arg5: memref<1x128xf32, #tpu.memory_space<vmem>>, %arg6: memref<8x128xf32, #tpu.memory_space<vmem>>, %arg7: memref<8x128xf32, #tpu.memory_space<vmem>>) attributes {dimension_semantics = [#tpu.dimension_semantics<arbitrary>], iteration_bounds = array<i64: 25>, scalar_prefetch = 0 : i64, scratch_operands = 1 : i64, tpu.core_type = #tpu.core_type<tc>, window_params = [{transform_indices = @transform_0, window_bounds = array<i64: 8, 1024>}, {transform_indices = @transform_1, window_bounds = array<i64: 1024, 128>}, {pipeline_mode = #tpu.pipeline_mode<synchronous>, transform_indices = @transform_2, window_bounds = array<i64: 1, 128>}, {pipeline_mode = #tpu.pipeline_mode<synchronous>, transform_indices = @transform_3, window_bounds = array<i64: 128, 128>}, {pipeline_mode = #tpu.pipeline_mode<synchronous>, transform_indices = @transform_4, window_bounds = array<i64: 1, 128>}, {pipeline_mode = #tpu.pipeline_mode<synchronous>, transform_indices = @transform_5, window_bounds = array<i64: 8, 128>}]} {
    %c0_i32 = arith.constant 0 : i32
    %0 = arith.cmpi eq, %arg0, %c0_i32 : i32
    %1 = arith.extui %0 : i1 to i32
    %c0_i32_0 = arith.constant 0 : i32
    %2 = arith.cmpi ne, %1, %c0_i32_0 : i32
    scf.if %2 {
      %cst_9 = arith.constant 0.000000e+00 : f32
      %12 = vector.broadcast %cst_9 : f32 to vector<8x128xf32>
      %c0_10 = arith.constant 0 : index
      %c0_11 = arith.constant 0 : index
      %13 = vector.load %arg7[%c0_10, %c0_11] : memref<8x128xf32, #tpu.memory_space<vmem>>, vector<8x128xf32>
      tpu.vector_store %arg7[%c0_10, %c0_11], %12 {strides = array<i32>} : memref<8x128xf32, #tpu.memory_space<vmem>>, vector<8x128xf32>,
    } else {
    }
    %c0 = arith.constant 0 : index
    %c0_1 = arith.constant 0 : index
    %3 = vector.load %arg7[%c0, %c0_1] : memref<8x128xf32, #tpu.memory_space<vmem>>, vector<8x128xf32>
    %c0_2 = arith.constant 0 : index
    %c0_3 = arith.constant 0 : index
    %4 = vector.load %arg1[%c0_2, %c0_3] : memref<8x1024xbf16, #tpu.memory_space<vmem>>, vector<8x1024xbf16>
    %c0_4 = arith.constant 0 : index
    %c0_5 = arith.constant 0 : index
    %5 = vector.load %arg2[%c0_4, %c0_5] : memref<1024x128xbf16, #tpu.memory_space<vmem>>, vector<1024x128xbf16>
    %cst = arith.constant dense<0.000000e+00> : vector<8x128xf32>
    %6 = tpu.matmul %4, %5, %cst {dimension_numbers = #tpu.dot_dimension_numbers<[1], [0], [0], [1], [0, 0, 1, 1], [], []>} : vector<8x1024xbf16>, vector<1024x128xbf16>, vector<8x128xf32> -> vector<8x128xf32>
    %7 = arith.addf %3, %6 : vector<8x128xf32>
    %c0_6 = arith.constant 0 : index
    %c0_7 = arith.constant 0 : index
    %8 = vector.load %arg7[%c0_6, %c0_7] : memref<8x128xf32, #tpu.memory_space<vmem>>, vector<8x128xf32>
    tpu.vector_store %arg7[%c0_6, %c0_7], %7 {strides = array<i32>} : memref<8x128xf32, #tpu.memory_space<vmem>>, vector<8x128xf32>,
    %c24_i32 = arith.constant 24 : i32
    %9 = arith.cmpi eq, %arg0, %c24_i32 : i32
    %10 = arith.extui %9 : i1 to i32
    %c0_i32_8 = arith.constant 0 : i32
    %11 = arith.cmpi ne, %10, %c0_i32_8 : i32
    scf.if %11 {
      %c0_9 = arith.constant 0 : index
      %c0_10 = arith.constant 0 : index
      %12 = vector.load %arg7[%c0_9, %c0_10] : memref<8x128xf32, #tpu.memory_space<vmem>>, vector<8x128xf32>
      %c0_11 = arith.constant 0 : index
      %c0_12 = arith.constant 0 : index
      %13 = vector.load %arg3[%c0_11, %c0_12] : memref<1x128xf32, #tpu.memory_space<vmem>>, vector<1x128xf32>
      %14 = vector.broadcast %13 : vector<1x128xf32> to vector<8x128xf32>
      %15 = arith.addf %12, %14 : vector<8x128xf32>
      %cst_13 = arith.constant 0.000000e+00 : f32
      %16 = vector.broadcast %cst_13 : f32 to vector<8x128xf32>
      %17 = arith.maximumf %15, %16 : vector<8x128xf32>
      %18 = arith.truncf %17 : vector<8x128xf32> to vector<8x128xbf16>
      %c0_14 = arith.constant 0 : index
      %c0_15 = arith.constant 0 : index
      %19 = vector.load %arg4[%c0_14, %c0_15] : memref<128x128xbf16, #tpu.memory_space<vmem>>, vector<128x128xbf16>
      %cst_16 = arith.constant dense<0.000000e+00> : vector<8x128xf32>
      %20 = tpu.matmul %18, %19, %cst_16 {dimension_numbers = #tpu.dot_dimension_numbers<[1], [0], [0], [1], [0, 0, 1, 1], [], []>} : vector<8x128xbf16>, vector<128x128xbf16>, vector<8x128xf32> -> vector<8x128xf32>
      %c0_17 = arith.constant 0 : index
      %c0_18 = arith.constant 0 : index
      %21 = vector.load %arg5[%c0_17, %c0_18] : memref<1x128xf32, #tpu.memory_space<vmem>>, vector<1x128xf32>
      %22 = vector.broadcast %21 : vector<1x128xf32> to vector<8x128xf32>
      %23 = arith.addf %20, %22 : vector<8x128xf32>
      %c0_19 = arith.constant 0 : index
      %c0_20 = arith.constant 0 : index
      %24 = vector.load %arg6[%c0_19, %c0_20] : memref<8x128xf32, #tpu.memory_space<vmem>>, vector<8x128xf32>
      tpu.vector_store %arg6[%c0_19, %c0_20], %23 {strides = array<i32>} : memref<8x128xf32, #tpu.memory_space<vmem>>, vector<8x128xf32>,
    } else {
    }
    return
  }
  func.func @transform_0(%arg0: i32) -> (i32, i32) {
    %c0_i32 = arith.constant 0 : i32
    %c0_i32_0 = arith.constant 0 : i32
    return %c0_i32, %arg0 : i32, i32
  }
  func.func @transform_1(%arg0: i32) -> (i32, i32) {
    %c0_i32 = arith.constant 0 : i32
    %c0_i32_0 = arith.constant 0 : i32
    return %arg0, %c0_i32 : i32, i32
  }
  func.func @transform_2(%arg0: i32) -> (i32, i32) {
    %c0_i32 = arith.constant 0 : i32
    %c0_i32_0 = arith.constant 0 : i32
    %c0_i32_1 = arith.constant 0 : i32
    return %c0_i32, %c0_i32_0 : i32, i32
  }
  func.func @transform_3(%arg0: i32) -> (i32, i32) {
    %c0_i32 = arith.constant 0 : i32
    %c0_i32_0 = arith.constant 0 : i32
    %c0_i32_1 = arith.constant 0 : i32
    return %c0_i32, %c0_i32_0 : i32, i32
  }
  func.func @transform_4(%arg0: i32) -> (i32, i32) {
    %c0_i32 = arith.constant 0 : i32
    %c0_i32_0 = arith.constant 0 : i32
    %c0_i32_1 = arith.constant 0 : i32
    return %c0_i32, %c0_i32_0 : i32, i32
  }
  func.func @transform_5(%arg0: i32) -> (i32, i32) {
    %c0_i32 = arith.constant 0 : i32
    %c0_i32_0 = arith.constant 0 : i32
    %c0_i32_1 = arith.constant 0 : i32
    return %c0_i32, %c0_i32_0 : i32, i32
  }
}

</mosaic_0001>

<llo_original>
// kernel: ico_cnn_forward.3
$region0: #{ico_cnn_forward.3}
  #allocation0 [shape = 'u32[]', space=smem, size = 0x4, offset = 0x4, fixed_abs, tag = 'smem constant byte address 0x4 - core index']
  #allocation1 [shape = 'u32[144,128]{1,0:T(1,128)}', space=vmem, size = 0x12000, scoped, tag = 'internal scratch']
  %s0 = inlined_call_operand.vmem [shape: bf16[10,62,8], index: 0, kind: input, shape index: {}]
  %s1 = inlined_call_operand.hbm [shape: bf16[9,8,128], index: 1, kind: input, shape index: {}]
  %s2 = inlined_call_operand.hbm [shape: f32[1,128], index: 2, kind: input, shape index: {}]
  %s3 = inlined_call_operand.vmem [shape: f32[5,40,1], index: 3, kind: input, shape index: {}]
  %s4 = inlined_call_operand.vmem [shape: bf16[10,62,128], index: 4, kind: output, shape index: {}]
  %s5 = sld [smem:[#allocation0]]
  $region57: #{ico_cnn_forward.3} parent=0
    _
  %s7 = ssub.s32 1, %s5
  %s8 = scalar_select 0, %s7, %s5
  $region1: #{ico_cnn_forward.3} parent=0
    #allocation2 [shape = 'u8[18432]{0}', space=vmem, size = 0x4800, scoped, tag = 'input window, operand 1, single buffered']
    #allocation3 [shape = 's32[2]{0}', space=sflag, size = 0x8, scoped, tag = 'scoped memory for ico_cnn_forward.3']
    #allocation4 [shape = 'u8[512]{0}', space=vmem, size = 0x400, scoped, tag = 'input window, operand 2, single buffered']
    #allocation5 [shape = 's32[1]{0}', space=sflag, size = 0x4, scoped, tag = 'scoped memory for ico_cnn_forward.3']
    %9 = vsyncpa [#allocation3], 0
    %10 = vsyncpa [#allocation5], 0
    loop: start=0, step=1, limit=12
    $region2: #{ico_cnn_forward.3} parent=1 // loop_pre_header
      _
    $region3: #{ico_cnn_forward.3} parent=1 // loop_header
      %s12 = sphi 0, %s16
      %p13 = scmp.ge.s32.totalorder %s12, 12
      %s22 = sphi 0, %s24
      %s25 = sphi 0, %s22
      %s26 = sphi 0, %s25
      %s42 = sphi 0, %s26
      %s46 = sphi 0, %s46
      %s48 = sphi 0, %s46
      %s49 = sphi 0, %s48
      %s63 = sphi 0, %s49
      %s67 = sphi 0, %s67
      %s69 = sphi 0, %s67
      %s70 = sphi 0, %s69
      %s84 = sphi 0, %s70
      %s116 = sphi 0, %s118
      %s119 = sphi 0, %s116
      %s120 = sphi 0, %s119
      %s136 = sphi 0, %s120
      %s142 = sphi 0, %s144
      %s145 = sphi 0, %s142
      %s146 = sphi 0, %s145
      %s162 = sphi 0, %s146
    $region4: #{ico_cnn_forward.3} parent=1 // loop_header_branch
      %15 = sbr.rel (%p13) target = $region8
    $region5: #{ico_cnn_forward.3} parent=1 // loop_body
      %s17 = ssub.s32 %s12, 1
      %s18 = ssub.s32 %s12, 2
      %s19 = sadd.s32 %s12, 1
      %s20 = ssub.s32 %s12, %s19
      %p21 = scmp.eq.s32.totalorder %s20, 0
      %s23 = sadd.s32 %s22, 1
      %s24 = scalar_select %p21, %s22, %s23
      %p27 = pneg %p21
      %p28 = scmp.eq.s32.totalorder %s12, 9
      %p29 = por %p27, %p28
      %p30 = scmp.ne.s32.totalorder %s22, %s25
      %p31 = scmp.eq.s32.totalorder %s12, 0
      %p32 = por %p30, %p31
      %p33 = scmp.ne.s32.totalorder %s22, %s25
      %p34 = scmp.eq.s32.totalorder %s17, 9
      %p35 = por %p33, %p34
      %p36 = scmp.ne.s32.totalorder %s25, %s26
      %p37 = scmp.eq.s32.totalorder %s17, 0
      %p38 = por %p36, %p37
      %p39 = scmp.ne.s32.totalorder %s25, %s26
      %p40 = scmp.eq.s32.totalorder %s18, 9
      %p41 = por %p39, %p40
      %p43 = scmp.ne.s32.totalorder %s26, %s42
      %p44 = scmp.eq.s32.totalorder %s18, 0
      %p45 = por %p43, %p44
      %s47 = sadd.s32 %s46, 1
      %p50 = scmp.eq.s32.totalorder %s12, 9
      %p51 = scmp.ne.s32.totalorder %s46, %s48
      %p52 = scmp.eq.s32.totalorder %s12, 0
      %p53 = por %p51, %p52
      %p54 = scmp.ne.s32.totalorder %s46, %s48
      %p55 = scmp.eq.s32.totalorder %s17, 9
      %p56 = por %p54, %p55
      %p57 = scmp.ne.s32.totalorder %s48, %s49
      %p58 = scmp.eq.s32.totalorder %s17, 0
      %p59 = por %p57, %p58
      %p60 = scmp.ne.s32.totalorder %s48, %s49
      %p61 = scmp.eq.s32.totalorder %s18, 9
      %p62 = por %p60, %p61
      %p64 = scmp.ne.s32.totalorder %s49, %s63
      %p65 = scmp.eq.s32.totalorder %s18, 0
      %p66 = por %p64, %p65
      %s68 = sadd.s32 %s67, 1
      %p71 = scmp.eq.s32.totalorder %s12, 9
      %p72 = scmp.ne.s32.totalorder %s67, %s69
      %p73 = scmp.eq.s32.totalorder %s12, 0
      %p74 = por %p72, %p73
      %p75 = scmp.ne.s32.totalorder %s67, %s69
      %p76 = scmp.eq.s32.totalorder %s17, 9
      %p77 = por %p75, %p76
      %p78 = scmp.ne.s32.totalorder %s69, %s70
      %p79 = scmp.eq.s32.totalorder %s17, 0
      %p80 = por %p78, %p79
      %p81 = scmp.ne.s32.totalorder %s69, %s70
      %p82 = scmp.eq.s32.totalorder %s18, 9
      %p83 = por %p81, %p82
      %p85 = scmp.ne.s32.totalorder %s70, %s84
      %p86 = scmp.eq.s32.totalorder %s18, 0
      %p87 = por %p85, %p86
      %p88 = scmp.lt.s32.totalorder %s12, 0
      %s89 = ssub.s32 0, %s12
      %s90 = scalar_select %p88, %s89, %s12
      %s91 = sdiv.u32.pop %s90, 5
      %s92 = srem.u32.pop %s90, 5
      %s93 = ssub.s32 0, %s92
      %s94 = scalar_select %p88, %s93, %s92
      %p95 = scmp.ne.s32.totalorder %s94, 0
      %p96 = scmp.lt.s32.totalorder %s94, 0
      %p97 = pnand %p96, %p95
      %p98 = pneg %p97
      %s99 = sadd.s32 %s94, 5
      %s100 = scalar_select %p98, %s99, %s94
      %p101 = scmp.lt.s32.totalorder %s19, 0
      %s102 = ssub.s32 0, %s19
      %s103 = scalar_select %p101, %s102, %s19
      %s104 = sdiv.u32.pop %s103, 5
      %s105 = srem.u32.pop %s103, 5
      %s106 = ssub.s32 0, %s105
      %s107 = scalar_select %p101, %s106, %s105
      %p108 = scmp.ne.s32.totalorder %s107, 0
      %p109 = scmp.lt.s32.totalorder %s107, 0
      %p110 = pnand %p109, %p108
      %p111 = pneg %p110
      %s112 = sadd.s32 %s107, 5
      %s113 = scalar_select %p111, %s112, %s107
      %s114 = ssub.s32 %s100, %s113
      %p115 = scmp.eq.s32.totalorder %s114, 0
      %s117 = sadd.s32 %s116, 1
      %s118 = scalar_select %p115, %s116, %s117
      %p121 = pneg %p115
      %p122 = scmp.eq.s32.totalorder %s12, 9
      %p123 = por %p121, %p122
      %p124 = scmp.ne.s32.totalorder %s116, %s119
      %p125 = scmp.eq.s32.totalorder %s12, 0
      %p126 = por %p124, %p125
      %p127 = scmp.ne.s32.totalorder %s116, %s119
      %p128 = scmp.eq.s32.totalorder %s17, 9
      %p129 = por %p127, %p128
      %p130 = scmp.ne.s32.totalorder %s119, %s120
      %p131 = scmp.eq.s32.totalorder %s17, 0
      %p132 = por %p130, %p131
      %p133 = scmp.ne.s32.totalorder %s119, %s120
      %p134 = scmp.eq.s32.totalorder %s18, 9
      %p135 = por %p133, %p134
      %p137 = scmp.ne.s32.totalorder %s120, %s136
      %p138 = scmp.eq.s32.totalorder %s18, 0
      %p139 = por %p137, %p138
      %s140 = ssub.s32 %s12, %s19
      %p141 = scmp.eq.s32.totalorder %s140, 0
      %s143 = sadd.s32 %s142, 1
      %s144 = scalar_select %p141, %s142, %s143
      %p147 = pneg %p141
      %p148 = scmp.eq.s32.totalorder %s12, 9
      %p149 = por %p147, %p148
      %p150 = scmp.ne.s32.totalorder %s142, %s145
      %p151 = scmp.eq.s32.totalorder %s12, 0
      %p152 = por %p150, %p151
      %p153 = scmp.ne.s32.totalorder %s142, %s145
      %p154 = scmp.eq.s32.totalorder %s17, 9
      %p155 = por %p153, %p154
      %p156 = scmp.ne.s32.totalorder %s145, %s146
      %p157 = scmp.eq.s32.totalorder %s17, 0
      %p158 = por %p156, %p157
      %p159 = scmp.ne.s32.totalorder %s145, %s146
      %p160 = scmp.eq.s32.totalorder %s18, 9
      %p161 = por %p159, %p160
      %p163 = scmp.ne.s32.totalorder %s146, %s162
      %p164 = scmp.eq.s32.totalorder %s18, 0
      %p165 = por %p163, %p164
      %p166 = scmp.le.s32.totalorder 1, %s12
      %p167 = scmp.lt.s32.totalorder %s12, 11
      %p168 = pnand %p166, %p167
      %p169 = pneg %p168
      // Predicated region
      $region9: #{ico_cnn_forward.3} parent=5 // pred_check
        _
      $region10: #{ico_cnn_forward.3} parent=5 // pred_check_branch
        %171 = sbr.rel (%p168) target = $region12
      $region11: #{ico_cnn_forward.3} parent=5 // pred_region
        %s172 = ssub.s32 %s12, 1
        // Predicated region
        $region13: #{ico_cnn_forward.3} parent=11 // pred_check
          %p173 = pneg %p59
        $region14: #{ico_cnn_forward.3} parent=11 // pred_check_branch
          %175 = sbr.rel (%p173) target = $region16
        $region15: #{ico_cnn_forward.3} parent=11 // pred_region
          %s177 = ssub.s32 576, 576
          %178 = vsyncadd [#allocation3], %s177
          %s179 = sshll.u32 [#allocation2], 4
          %s180 = int_to_ptr.vmem [resolvable:$true] %s179
          %185 = dma.hbm_to_vmem [thread:$0]  %s1, 576, %s180, [#allocation3], 64, 64, 4
        $region16: #{ico_cnn_forward.3} parent=11 // pred_fallthru
          _
        // Predicated region
        $region17: #{ico_cnn_forward.3} parent=11 // pred_check
          %p186 = pneg %p80
        $region18: #{ico_cnn_forward.3} parent=11 // pred_check_branch
          %188 = sbr.rel (%p186) target = $region20
        $region19: #{ico_cnn_forward.3} parent=11 // pred_region
          %s190 = ssub.s32 16, 16
          %191 = vsyncadd [#allocation5], %s190
          %s193 = sshll.u32 [#allocation4], 4
          %s194 = int_to_ptr.vmem [resolvable:$true] %s193
          %196 = dma.hbm_to_vmem [thread:$0]  %s2, 16, %s194, [#allocation5]
        $region20: #{ico_cnn_forward.3} parent=11 // pred_fallthru
          _
      $region12: #{ico_cnn_forward.3} parent=5 // pred_fallthru
        _
      %p197 = scmp.lt.s32.totalorder %s12, 10
      // Predicated region
      $region21: #{ico_cnn_forward.3} parent=5 // pred_check
        %p198 = pneg %p197
      $region22: #{ico_cnn_forward.3} parent=5 // pred_check_branch
        %200 = sbr.rel (%p198) target = $region24
      $region23: #{ico_cnn_forward.3} parent=5 // pred_region
        // Predicated region
        $region25: #{ico_cnn_forward.3} parent=23 // pred_check
          %p201 = pneg %p32
        $region26: #{ico_cnn_forward.3} parent=23 // pred_check_branch
          %203 = sbr.rel (%p201) target = $region28
        $region27: #{ico_cnn_forward.3} parent=23 // pred_region
          %p204 = scmp.lt.s32.totalorder %s12, 9
          %s205 = scalar_select %p204, %s12, 9
          %s206 = smul.addr %s205, 8
          %s207 = smul.addr %s206, 4
          %s208 = scalar_lea.vmem %s0, %s207
        $region28: #{ico_cnn_forward.3} parent=23 // pred_fallthru
          _
        // Predicated region
        $region29: #{ico_cnn_forward.3} parent=23 // pred_check
          %p209 = pneg %p126
        $region30: #{ico_cnn_forward.3} parent=23 // pred_check_branch
          %211 = sbr.rel (%p209) target = $region32
        $region31: #{ico_cnn_forward.3} parent=23 // pred_region
          %p212 = scmp.lt.s32.totalorder %s12, 0
          %s213 = ssub.s32 0, %s12
          %s214 = scalar_select %p212, %s213, %s12
          %s215 = sdiv.u32.pop %s214, 5
          %s216 = srem.u32.pop %s214, 5
          %s217 = ssub.s32 0, %s216
          %s218 = scalar_select %p212, %s217, %s216
          %p219 = scmp.ne.s32.totalorder %s218, 0
          %p220 = scmp.lt.s32.totalorder %s218, 0
          %p221 = pnand %p220, %p219
          %p222 = pneg %p221
          %s223 = sadd.s32 %s218, 5
          %s224 = scalar_select %p222, %s223, %s218
          %p225 = scmp.lt.s32.totalorder %s224, 4
          %s226 = scalar_select %p225, %s224, 4
          %s227 = smul.addr %s226, 5
          %s228 = smul.addr %s227, 8
          %s229 = scalar_lea.vmem %s3, %s228
          %p230 = scmp.lt.s32.totalorder %s12, 0
          %s231 = ssub.s32 0, %s12
          %s232 = scalar_select %p230, %s231, %s12
          %s233 = sdiv.u32.pop %s232, 5
          %s234 = srem.u32.pop %s232, 5
          %s235 = ssub.s32 0, %s234
          %s236 = scalar_select %p230, %s235, %s234
          %p237 = scmp.ne.s32.totalorder %s236, 0
          %p238 = scmp.lt.s32.totalorder %s236, 0
          %p239 = pnand %p238, %p237
          %p240 = pneg %p239
          %s241 = sadd.s32 %s236, 5
          %s242 = scalar_select %p240, %s241, %s236
        $region32: #{ico_cnn_forward.3} parent=23 // pred_fallthru
          _
      $region24: #{ico_cnn_forward.3} parent=5 // pred_fallthru
        _
      %p243 = scmp.le.s32.totalorder 1, %s12
      %p244 = scmp.lt.s32.totalorder %s12, 11
      %p245 = pnand %p243, %p244
      %p246 = pneg %p245
      // Predicated region
      $region33: #{ico_cnn_forward.3} parent=5 // pred_check
        _
      $region34: #{ico_cnn_forward.3} parent=5 // pred_check_branch
        %248 = sbr.rel (%p245) target = $region36
      $region35: #{ico_cnn_forward.3} parent=5 // pred_region
        %s249 = ssub.s32 %s12, 1
        // Predicated region
        $region37: #{ico_cnn_forward.3} parent=35 // pred_check
          %p250 = pneg %p59
        $region38: #{ico_cnn_forward.3} parent=35 // pred_check_branch
          %252 = sbr.rel (%p250) target = $region40
        $region39: #{ico_cnn_forward.3} parent=35 // pred_region
          %253 = dma.done [#allocation3], 576
        $region40: #{ico_cnn_forward.3} parent=35 // pred_fallthru
          _
        // Predicated region
        $region41: #{ico_cnn_forward.3} parent=35 // pred_check
          %p254 = pneg %p80
        $region42: #{ico_cnn_forward.3} parent=35 // pred_check_branch
          %256 = sbr.rel (%p254) target = $region44
        $region43: #{ico_cnn_forward.3} parent=35 // pred_region
          %257 = dma.done [#allocation5], 16
        $region44: #{ico_cnn_forward.3} parent=35 // pred_fallthru
          _
        %p258 = scmp.lt.s32.totalorder %s17, 9
        %s259 = scalar_select %p258, %s17, 9
        %s260 = smul.addr %s259, 8
        %s261 = smul.addr %s260, 4
        %s262 = scalar_lea.vmem %s0, %s261
        %p263 = pneg %p38
        %p264 = pneg %p35
        %p265 = pneg %p59
        %p266 = pneg %p56
        %p267 = pneg %p80
        %p268 = pneg %p77
        %p269 = scmp.lt.s32.totalorder %s17, 0
        %s270 = ssub.s32 0, %s17
        %s271 = scalar_select %p269, %s270, %s17
        %s272 = sdiv.u32.pop %s271, 5
        %s273 = srem.u32.pop %s271, 5
        %s274 = ssub.s32 0, %s273
        %s275 = scalar_select %p269, %s274, %s273
        %p276 = scmp.ne.s32.totalorder %s275, 0
        %p277 = scmp.lt.s32.totalorder %s275, 0
        %p278 = pnand %p277, %p276
        %p279 = pneg %p278
        %s280 = sadd.s32 %s275, 5
        %s281 = scalar_select %p279, %s280, %s275
        %p282 = scmp.lt.s32.totalorder %s281, 4
        %s283 = scalar_select %p282, %s281, 4
        %s284 = smul.addr %s283, 5
        %s285 = smul.addr %s284, 8
        %s286 = scalar_lea.vmem %s3, %s285
        %p287 = pneg %p132
        %p288 = pneg %p129
        %p289 = pneg %p158
        %p290 = pneg %p155
        %p291 = scmp.lt.s32.totalorder %s17, 9
        %s292 = scalar_select %p291, %s17, 9
        %s293 = smul.addr %s292, 8
        %s294 = smul.addr %s293, 4
        %s295 = scalar_lea.vmem %s4, %s294
        %p296 = scmp.lt.s32.totalorder %s17, 9
        %s297 = scalar_select %p296, %s17, 9
        %s298 = smul.addr %s297, 8
        %s299 = smul.addr %s298, 4
        %s300 = scalar_lea.vmem %s0, %s299
        %p301 = scmp.lt.s32.totalorder %s17, 0
        %s302 = ssub.s32 0, %s17
        %s303 = scalar_select %p301, %s302, %s17
        %s304 = sdiv.u32.pop %s303, 5
        %s305 = srem.u32.pop %s303, 5
        %s306 = ssub.s32 0, %s305
        %s307 = scalar_select %p301, %s306, %s305
        %p308 = scmp.ne.s32.totalorder %s307, 0
        %p309 = scmp.lt.s32.totalorder %s307, 0
        %p310 = pnand %p309, %p308
        %p311 = pneg %p310
        %s312 = sadd.s32 %s307, 5
        %s313 = scalar_select %p311, %s312, %s307
        %p314 = scmp.lt.s32.totalorder %s313, 4
        %s315 = scalar_select %p314, %s313, 4
        %s316 = smul.addr %s315, 5
        %s317 = smul.addr %s316, 8
        %s318 = scalar_lea.vmem %s3, %s317
        %p319 = scmp.lt.s32.totalorder %s17, 0
        %s320 = ssub.s32 0, %s17
        %s321 = scalar_select %p319, %s320, %s17
        %s322 = sdiv.u32.pop %s321, 5
        %s323 = srem.u32.pop %s321, 5
        %s324 = ssub.s32 0, %s323
        %s325 = scalar_select %p319, %s324, %s323
        %p326 = scmp.ne.s32.totalorder %s325, 0
        %p327 = scmp.lt.s32.totalorder %s325, 0
        %p328 = pnand %p327, %p326
        %p329 = pneg %p328
        %s330 = sadd.s32 %s325, 5
        %s331 = scalar_select %p329, %s330, %s325
        %p332 = scmp.lt.s32.totalorder %s17, 9
        %s333 = scalar_select %p332, %s17, 9
        %s334 = smul.addr %s333, 8
        %s335 = smul.addr %s334, 4
        %s336 = scalar_lea.vmem %s4, %s335
        %v338 = vld [vmem:[%s300] sm:$0xf]
        %v339 = vld [vmem:[%s300 + $0x4] sm:$0xf]
        %v340 = vld [vmem:[%s300 + $0x8] sm:$0xf]
        %v341 = vld [vmem:[%s300 + $0xc] sm:$0xf]
        %v342 = vld [vmem:[%s300 + $0x10] sm:$0xf]
        %v343 = vld [vmem:[#allocation2] sm:$0xf]
        %v344 = vld [vmem:[%s300 + $0x14] sm:$0x1]
        %s345 = scalar_lea.vmem [#allocation2], 4
        %v346 = vld [vmem:[%s345] sm:$0xf]
        %v353 = vunpack.c.l.b16 %v338
        %v354 = vunpack.c.l.b16 %v339
        %v355 = vunpack.c.l.b16 %v340
        %v356 = vunpack.c.l.b16 %v341
        %v357 = vunpack.c.l.b16 %v342
        %v358 = vunpack.c.l.b16 %v344
        %v359 = vpack.c.b16 %v354, %v353
        %v360 = vpack.c.b16 %v356, %v355
        %v361 = vpack.c.b16 %v358, %v357
        %vm362 = vsmask.f32 7424
        %v364 = vshrl.u32 %v359, 16
        %v366 = vshll.u32 %v359, 16
        %v368 = vrot.slane %v366, 1
        %v369 = vor.u32 %v364, %v368
        %v371 = vshll.u32 %v360, 16
        %v373 = vrot.slane %v371, 1
        %v374 = vsel %vm362, %v369, %v373
        %v375 = vshrl.u32 %v360, 16
        %v377 = vor.u32 %v375, %v373
        %v379 = vshll.u32 %v361, 16
        %v381 = vrot.slane %v379, 1
        %v382 = vsel %vm362, %v377, %v381
        %v383 = vshrl.u32 %v361, 16
        %v385 = vor.u32 %v383, %v381
        %vm386 = vcmask 64512
        %v388 = vsel %vm386, %v374, 0
        %v391 = vsel %vm386, %v382, 0
        %v394 = vsel %vm386, %v385, 0
        %vm396 = vcmask 1043456
        %v398 = vsel %vm396, %v346, 0
        %400 = vmatprep.subr.bf16.mxu0 0
        %401 = vmatpush1.bf16.msra.mxu0 0
        %402 = vmatprep.subr.bf16.mxu0 0
        %403 = vmatpush1.bf16.msra.mxu0 0
        %404 = vmatprep.subr.bf16.mxu0 0
        %405 = vmatpush1.bf16.msra.mxu0 0
        %406 = vmatprep.subr.bf16.mxu0 0
        %407 = vmatpush1.bf16.msra.mxu0 0
        %408 = vmatprep.subr.bf16.mxu0 0
        %409 = vmatpush1.bf16.msra.mxu0 0
        %410 = vmatprep.subr.bf16.mxu0 0
        %411 = vmatpush1.bf16.msra.mxu0 0
        %412 = vmatprep.subr.bf16.mxu0 0
        %413 = vmatpush1.bf16.msra.mxu0 0
        %414 = vmatprep.subr.bf16.mxu0 0
        %415 = vmatpush1.bf16.msra.mxu0 %v398
        %416 = vmatprep.subr.bf16.mxu0 0
        %417 = vmatpush2.bf16.msra.mxu0 0
        %418 = vmatprep.subr.bf16.mxu0 0
        %419 = vmatpush2.bf16.msra.mxu0 0
        %420 = vmatprep.subr.bf16.mxu0 0
        %421 = vmatpush2.bf16.msra.mxu0 0
        %422 = vmatprep.subr.bf16.mxu0 0
        %423 = vmatpush2.bf16.msra.mxu0 0
        %424 = vmatprep.subr.bf16.mxu0 0
        %425 = vmatpush2.bf16.msra.mxu0 0
        %426 = vmatprep.subr.bf16.mxu0 0
        %427 = vmatpush2.bf16.msra.mxu0 0
        %428 = vmatprep.subr.bf16.mxu0 0
        %429 = vmatpush2.bf16.msra.mxu0 0
        %430 = vmatprep.subr.bf16.mxu0 0
        %431 = vmatpush2.bf16.msra.mxu0 0
        %432 = vmatprep.mubr.bf16.mxu0 0
        %433 = vmatmul.mubr.bf16.gmra.mxu0 %v388
        %v434 = vpop.f32.mrf.mxu0
        %v435 = vadd.f32 0.0, %v434
        %v436 = vpop.f32.mrf.mxu0
        %v437 = vpop.f32.mrf.mxu0
        %v438 = vadd.f32 0.0, %v437
        %v439 = vpop.f32.mrf.mxu0
        %440 = vmatprep.mubr.bf16.mxu0 0
        %441 = vmatmul.mubr.bf16.gmra.mxu0 %v391
        %v442 = vpop.f32.mrf.mxu0
        %v443 = vadd.f32 0.0, %v442
        %v444 = vpop.f32.mrf.mxu0
        %v445 = vpop.f32.mrf.mxu0
        %v446 = vadd.f32 0.0, %v445
        %v447 = vpop.f32.mrf.mxu0
        %448 = vmatprep.mubr.bf16.mxu0 0
        %449 = vmatmul.mubr.bf16.gmra.mxu0 %v394
        %v450 = vpop.f32.mrf.mxu0
        %v451 = vadd.f32 0.0, %v450
        %v452 = vpop.f32.mrf.mxu0
        %v453 = vpop.f32.mrf.mxu0
        %v454 = vpop.f32.mrf.mxu0
        %455 = vdwg.mxu0
        %v456 = vpack.c.b16 %v357, %v357
        %v457 = vsel %vm386, %v359, 0
        %v459 = vsel %vm386, %v360, 0
        %v462 = vsel %vm386, %v456, 0
        %v465 = vsel %vm396, %v343, 0
        %467 = vmatprep.subr.bf16.mxu0 0
        %468 = vmatpush1.bf16.msra.mxu0 0
        %469 = vmatprep.subr.bf16.mxu0 0
        %470 = vmatpush1.bf16.msra.mxu0 0
        %471 = vmatprep.subr.bf16.mxu0 0
        %472 = vmatpush1.bf16.msra.mxu0 0
        %473 = vmatprep.subr.bf16.mxu0 0
        %474 = vmatpush1.bf16.msra.mxu0 0
        %475 = vmatprep.subr.bf16.mxu0 0
        %476 = vmatpush1.bf16.msra.mxu0 0
        %477 = vmatprep.subr.bf16.mxu0 0
        %478 = vmatpush1.bf16.msra.mxu0 0
        %479 = vmatprep.subr.bf16.mxu0 0
        %480 = vmatpush1.bf16.msra.mxu0 0
        %481 = vmatprep.subr.bf16.mxu0 0
        %482 = vmatpush1.bf16.msra.mxu0 %v465
        %483 = vmatprep.subr.bf16.mxu0 0
        %484 = vmatpush2.bf16.msra.mxu0 0
        %485 = vmatprep.subr.bf16.mxu0 0
        %486 = vmatpush2.bf16.msra.mxu0 0
        %487 = vmatprep.subr.bf16.mxu0 0
        %488 = vmatpush2.bf16.msra.mxu0 0
        %489 = vmatprep.subr.bf16.mxu0 0
        %490 = vmatpush2.bf16.msra.mxu0 0
        %491 = vmatprep.subr.bf16.mxu0 0
        %492 = vmatpush2.bf16.msra.mxu0 0
        %493 = vmatprep.subr.bf16.mxu0 0
        %494 = vmatpush2.bf16.msra.mxu0 0
        %495 = vmatprep.subr.bf16.mxu0 0
        %496 = vmatpush2.bf16.msra.mxu0 0
        %497 = vmatprep.subr.bf16.mxu0 0
        %498 = vmatpush2.bf16.msra.mxu0 0
        %499 = vmatprep.mubr.bf16.mxu0 0
        %500 = vmatmul.mubr.bf16.gmra.mxu0 %v457
        %v501 = vpop.f32.mrf.mxu0
        %v502 = vadd.f32 %v435, %v501
        %v503 = vpop.f32.mrf.mxu0
        %v504 = vpop.f32.mrf.mxu0
        %v505 = vadd.f32 %v438, %v504
        %v506 = vpop.f32.mrf.mxu0
        %507 = vmatprep.mubr.bf16.mxu0 0
        %508 = vmatmul.mubr.bf16.gmra.mxu0 %v459
        %v509 = vpop.f32.mrf.mxu0
        %v510 = vadd.f32 %v443, %v509
        %v511 = vpop.f32.mrf.mxu0
        %v512 = vpop.f32.mrf.mxu0
        %v513 = vadd.f32 %v446, %v512
        %v514 = vpop.f32.mrf.mxu0
        %515 = vmatprep.mubr.bf16.mxu0 0
        %516 = vmatmul.mubr.bf16.gmra.mxu0 %v462
        %v517 = vpop.f32.mrf.mxu0
        %v518 = vadd.f32 %v451, %v517
        %v519 = vpop.f32.mrf.mxu0
        %v520 = vpop.f32.mrf.mxu0
        %v521 = vpop.f32.mrf.mxu0
        %522 = vdwg.mxu0
        %v523 = vld [vmem:[%s300] sm:$0xe]
        %s524 = scalar_lea.vmem [#allocation2], 8
        %v525 = vld [vmem:[%s524] sm:$0xf]
        %v527 = vunpack.c.l.b16 %v523
        %v528 = vpack.c.b16 %v354, %v527
        %vm529 = vcmask 1046528
        %v530 = vrot.slane %v528, 1
        %v531 = vrot.slane %v360, 1
        %v532 = vsel %vm529, %v530, %v531
        %v533 = vrot.slane %v361, 1
        %v534 = vsel %vm529, %v531, %v533
        %v536 = vsel %vm386, %v532, 0
        %v539 = vsel %vm386, %v534, 0
        %v542 = vsel %vm386, %v533, 0
        %v545 = vsel %vm396, %v525, 0
        %547 = vmatprep.subr.bf16.mxu0 0
        %548 = vmatpush1.bf16.msra.mxu0 0
        %549 = vmatprep.subr.bf16.mxu0 0
        %550 = vmatpush1.bf16.msra.mxu0 0
        %551 = vmatprep.subr.bf16.mxu0 0
        %552 = vmatpush1.bf16.msra.mxu0 0
        %553 = vmatprep.subr.bf16.mxu0 0
        %554 = vmatpush1.bf16.msra.mxu0 0
        %555 = vmatprep.subr.bf16.mxu0 0
        %556 = vmatpush1.bf16.msra.mxu0 0
        %557 = vmatprep.subr.bf16.mxu0 0
        %558 = vmatpush1.bf16.msra.mxu0 0
        %559 = vmatprep.subr.bf16.mxu0 0
        %560 = vmatpush1.bf16.msra.mxu0 0
        %561 = vmatprep.subr.bf16.mxu0 0
        %562 = vmatpush1.bf16.msra.mxu0 %v545
        %563 = vmatprep.subr.bf16.mxu0 0
        %564 = vmatpush2.bf16.msra.mxu0 0
        %565 = vmatprep.subr.bf16.mxu0 0
        %566 = vmatpush2.bf16.msra.mxu0 0
        %567 = vmatprep.subr.bf16.mxu0 0
        %568 = vmatpush2.bf16.msra.mxu0 0
        %569 = vmatprep.subr.bf16.mxu0 0
        %570 = vmatpush2.bf16.msra.mxu0 0
        %571 = vmatprep.subr.bf16.mxu0 0
        %572 = vmatpush2.bf16.msra.mxu0 0
        %573 = vmatprep.subr.bf16.mxu0 0
        %574 = vmatpush2.bf16.msra.mxu0 0
        %575 = vmatprep.subr.bf16.mxu0 0
        %576 = vmatpush2.bf16.msra.mxu0 0
        %577 = vmatprep.subr.bf16.mxu0 0
        %578 = vmatpush2.bf16.msra.mxu0 0
        %579 = vmatprep.mubr.bf16.mxu0 0
        %580 = vmatmul.mubr.bf16.gmra.mxu0 %v536
        %v581 = vpop.f32.mrf.mxu0
        %v582 = vadd.f32 0.0, %v581
        %v583 = vpop.f32.mrf.mxu0
        %v584 = vpop.f32.mrf.mxu0
        %v585 = vadd.f32 0.0, %v584
        %v586 = vpop.f32.mrf.mxu0
        %587 = vmatprep.mubr.bf16.mxu0 0
        %588 = vmatmul.mubr.bf16.gmra.mxu0 %v539
        %v589 = vpop.f32.mrf.mxu0
        %v590 = vadd.f32 0.0, %v589
        %v591 = vpop.f32.mrf.mxu0
        %v592 = vpop.f32.mrf.mxu0
        %v593 = vadd.f32 0.0, %v592
        %v594 = vpop.f32.mrf.mxu0
        %595 = vmatprep.mubr.bf16.mxu0 0
        %596 = vmatmul.mubr.bf16.gmra.mxu0 %v542
        %v597 = vpop.f32.mrf.mxu0
        %v598 = vadd.f32 0.0, %v597
        %v599 = vpop.f32.mrf.mxu0
        %v600 = vpop.f32.mrf.mxu0
        %v601 = vpop.f32.mrf.mxu0
        %602 = vdwg.mxu0
        %v603 = vadd.f32 %v502, %v582
        %v604 = vadd.f32 %v505, %v585
        %v605 = vadd.f32 %v510, %v590
        %v606 = vadd.f32 %v513, %v593
        %v607 = vadd.f32 %v518, %v598
        %v608 = vld [vmem:[%s300 + $0x4] sm:$0xe]
        %v609 = vld [vmem:[%s300 + $0x8] sm:$0xf]
        %v610 = vld [vmem:[%s300 + $0xc] sm:$0xf]
        %v611 = vld [vmem:[%s300 + $0x10] sm:$0xf]
        %v612 = vld [vmem:[%s300 + $0x14] sm:$0xf]
        %v613 = vld [vmem:[%s300 + $0x18] sm:$0x1]
        %s614 = scalar_lea.vmem [#allocation2], 12
        %v615 = vld [vmem:[%s614] sm:$0xf]
        %v622 = vunpack.c.l.b16 %v608
        %v623 = vunpack.c.l.b16 %v609
        %v624 = vunpack.c.l.b16 %v610
        %v625 = vunpack.c.l.b16 %v611
        %v626 = vunpack.c.l.b16 %v612
        %v627 = vunpack.c.l.b16 %v613
        %v628 = vpack.c.b16 %v623, %v622
        %v629 = vpack.c.b16 %v625, %v624
        %v630 = vpack.c.b16 %v627, %v626
        %v631 = vrot.slane %v628, 1
        %v632 = vrot.slane %v629, 1
        %v633 = vsel %vm529, %v631, %v632
        %v634 = vrot.slane %v630, 1
        %v635 = vsel %vm529, %v632, %v634
        %v637 = vsel %vm386, %v633, 0
        %v640 = vsel %vm386, %v635, 0
        %v643 = vsel %vm386, %v634, 0
        %v646 = vsel %vm396, %v615, 0
        %648 = vmatprep.subr.bf16.mxu0 0
        %649 = vmatpush1.bf16.msra.mxu0 0
        %650 = vmatprep.subr.bf16.mxu0 0
        %651 = vmatpush1.bf16.msra.mxu0 0
        %652 = vmatprep.subr.bf16.mxu0 0
        %653 = vmatpush1.bf16.msra.mxu0 0
        %654 = vmatprep.subr.bf16.mxu0 0
        %655 = vmatpush1.bf16.msra.mxu0 0
        %656 = vmatprep.subr.bf16.mxu0 0
        %657 = vmatpush1.bf16.msra.mxu0 0
        %658 = vmatprep.subr.bf16.mxu0 0
        %659 = vmatpush1.bf16.msra.mxu0 0
        %660 = vmatprep.subr.bf16.mxu0 0
        %661 = vmatpush1.bf16.msra.mxu0 0
        %662 = vmatprep.subr.bf16.mxu0 0
        %663 = vmatpush1.bf16.msra.mxu0 %v646
        %664 = vmatprep.subr.bf16.mxu0 0
        %665 = vmatpush2.bf16.msra.mxu0 0
        %666 = vmatprep.subr.bf16.mxu0 0
        %667 = vmatpush2.bf16.msra.mxu0 0
        %668 = vmatprep.subr.bf16.mxu0 0
        %669 = vmatpush2.bf16.msra.mxu0 0
        %670 = vmatprep.subr.bf16.mxu0 0
        %671 = vmatpush2.bf16.msra.mxu0 0
        %672 = vmatprep.subr.bf16.mxu0 0
        %673 = vmatpush2.bf16.msra.mxu0 0
        %674 = vmatprep.subr.bf16.mxu0 0
        %675 = vmatpush2.bf16.msra.mxu0 0
        %676 = vmatprep.subr.bf16.mxu0 0
        %677 = vmatpush2.bf16.msra.mxu0 0
        %678 = vmatprep.subr.bf16.mxu0 0
        %679 = vmatpush2.bf16.msra.mxu0 0
        %680 = vmatprep.mubr.bf16.mxu0 0
        %681 = vmatmul.mubr.bf16.gmra.mxu0 %v637
        %v682 = vpop.f32.mrf.mxu0
        %v683 = vadd.f32 0.0, %v682
        %v684 = vpop.f32.mrf.mxu0
        %v685 = vpop.f32.mrf.mxu0
        %v686 = vadd.f32 0.0, %v685
        %v687 = vpop.f32.mrf.mxu0
        %688 = vmatprep.mubr.bf16.mxu0 0
        %689 = vmatmul.mubr.bf16.gmra.mxu0 %v640
        %v690 = vpop.f32.mrf.mxu0
        %v691 = vadd.f32 0.0, %v690
        %v692 = vpop.f32.mrf.mxu0
        %v693 = vpop.f32.mrf.mxu0
        %v694 = vadd.f32 0.0, %v693
        %v695 = vpop.f32.mrf.mxu0
        %696 = vmatprep.mubr.bf16.mxu0 0
        %697 = vmatmul.mubr.bf16.gmra.mxu0 %v643
        %v698 = vpop.f32.mrf.mxu0
        %v699 = vadd.f32 0.0, %v698
        %v700 = vpop.f32.mrf.mxu0
        %v701 = vpop.f32.mrf.mxu0
        %v702 = vpop.f32.mrf.mxu0
        %703 = vdwg.mxu0
        %v704 = vadd.f32 %v603, %v683
        %v705 = vadd.f32 %v604, %v686
        %v706 = vadd.f32 %v605, %v691
        %v707 = vadd.f32 %v606, %v694
        %v708 = vadd.f32 %v607, %v699
        %v709 = vld [vmem:[%s300 + $0x18] sm:$0x3]
        %s710 = scalar_lea.vmem [#allocation2], 16
        %v711 = vld [vmem:[%s710] sm:$0xf]
        %v713 = vunpack.c.l.b16 %v709
        %v714 = vpack.c.b16 %v713, %v626
        %vm715 = vsmask.f32 6400
        %v717 = vshrl.u32 %v628, 16
        %v719 = vrot.slane %v717, 1
        %v720 = vshll.u32 %v628, 16
        %v722 = vrot.slane %v720, 2
        %v723 = vor.u32 %v719, %v722
        %v725 = vshrl.u32 %v629, 16
        %v727 = vrot.slane %v725, 1
        %v728 = vshll.u32 %v629, 16
        %v730 = vrot.slane %v728, 2
        %v731 = vor.u32 %v727, %v730
        %v732 = vsel %vm715, %v723, %v731
        %v734 = vshrl.u32 %v714, 16
        %v736 = vrot.slane %v734, 1
        %v737 = vshll.u32 %v714, 16
        %v739 = vrot.slane %v737, 2
        %v740 = vor.u32 %v736, %v739
        %v741 = vsel %vm715, %v731, %v740
        %v743 = vsel %vm386, %v732, 0
        %v746 = vsel %vm386, %v741, 0
        %v749 = vsel %vm386, %v740, 0
        %v752 = vsel %vm396, %v711, 0
        %754 = vmatprep.subr.bf16.mxu0 0
        %755 = vmatpush1.bf16.msra.mxu0 0
        %756 = vmatprep.subr.bf16.mxu0 0
        %757 = vmatpush1.bf16.msra.mxu0 0
        %758 = vmatprep.subr.bf16.mxu0 0
        %759 = vmatpush1.bf16.msra.mxu0 0
        %760 = vmatprep.subr.bf16.mxu0 0
        %761 = vmatpush1.bf16.msra.mxu0 0
        %762 = vmatprep.subr.bf16.mxu0 0
        %763 = vmatpush1.bf16.msra.mxu0 0
        %764 = vmatprep.subr.bf16.mxu0 0
        %765 = vmatpush1.bf16.msra.mxu0 0
        %766 = vmatprep.subr.bf16.mxu0 0
        %767 = vmatpush1.bf16.msra.mxu0 0
        %768 = vmatprep.subr.bf16.mxu0 0
        %769 = vmatpush1.bf16.msra.mxu0 %v752
        %770 = vmatprep.subr.bf16.mxu0 0
        %771 = vmatpush2.bf16.msra.mxu0 0
        %772 = vmatprep.subr.bf16.mxu0 0
        %773 = vmatpush2.bf16.msra.mxu0 0
        %774 = vmatprep.subr.bf16.mxu0 0
        %775 = vmatpush2.bf16.msra.mxu0 0
        %776 = vmatprep.subr.bf16.mxu0 0
        %777 = vmatpush2.bf16.msra.mxu0 0
        %778 = vmatprep.subr.bf16.mxu0 0
        %779 = vmatpush2.bf16.msra.mxu0 0
        %780 = vmatprep.subr.bf16.mxu0 0
        %781 = vmatpush2.bf16.msra.mxu0 0
        %782 = vmatprep.subr.bf16.mxu0 0
        %783 = vmatpush2.bf16.msra.mxu0 0
        %784 = vmatprep.subr.bf16.mxu0 0
        %785 = vmatpush2.bf16.msra.mxu0 0
        %786 = vmatprep.mubr.bf16.mxu0 0
        %787 = vmatmul.mubr.bf16.gmra.mxu0 %v743
        %v788 = vpop.f32.mrf.mxu0
        %v789 = vadd.f32 0.0, %v788
        %v790 = vpop.f32.mrf.mxu0
        %v791 = vpop.f32.mrf.mxu0
        %v792 = vadd.f32 0.0, %v791
        %v793 = vpop.f32.mrf.mxu0
        %794 = vmatprep.mubr.bf16.mxu0 0
        %795 = vmatmul.mubr.bf16.gmra.mxu0 %v746
        %v796 = vpop.f32.mrf.mxu0
        %v797 = vadd.f32 0.0, %v796
        %v798 = vpop.f32.mrf.mxu0
        %v799 = vpop.f32.mrf.mxu0
        %v800 = vadd.f32 0.0, %v799
        %v801 = vpop.f32.mrf.mxu0
        %802 = vmatprep.mubr.bf16.mxu0 0
        %803 = vmatmul.mubr.bf16.gmra.mxu0 %v749
        %v804 = vpop.f32.mrf.mxu0
        %v805 = vadd.f32 0.0, %v804
        %v806 = vpop.f32.mrf.mxu0
        %v807 = vpop.f32.mrf.mxu0
        %v808 = vpop.f32.mrf.mxu0
        %809 = vdwg.mxu0
        %v810 = vadd.f32 %v704, %v789
        %v811 = vadd.f32 %v705, %v792
        %v812 = vadd.f32 %v706, %v797
        %v813 = vadd.f32 %v707, %v800
        %v814 = vadd.f32 %v708, %v805
        %v815 = vld [vmem:[%s300 + $0x4] sm:$0xc]
        %s816 = scalar_lea.vmem [#allocation2], 20
        %v817 = vld [vmem:[%s816] sm:$0xf]
        %v819 = vunpack.c.l.b16 %v815
        %v820 = vpack.c.b16 %v623, %v819
        %vm821 = vcmask 1045504
        %v822 = vrot.slane %v820, 2
        %v823 = vrot.slane %v629, 2
        %v824 = vsel %vm821, %v822, %v823
        %v825 = vrot.slane %v714, 2
        %v826 = vsel %vm821, %v823, %v825
        %v828 = vsel %vm386, %v824, 0
        %v831 = vsel %vm386, %v826, 0
        %v834 = vsel %vm386, %v825, 0
        %v837 = vsel %vm396, %v817, 0
        %839 = vmatprep.subr.bf16.mxu0 0
        %840 = vmatpush1.bf16.msra.mxu0 0
        %841 = vmatprep.subr.bf16.mxu0 0
        %842 = vmatpush1.bf16.msra.mxu0 0
        %843 = vmatprep.subr.bf16.mxu0 0
        %844 = vmatpush1.bf16.msra.mxu0 0
        %845 = vmatprep.subr.bf16.mxu0 0
        %846 = vmatpush1.bf16.msra.mxu0 0
        %847 = vmatprep.subr.bf16.mxu0 0
        %848 = vmatpush1.bf16.msra.mxu0 0
        %849 = vmatprep.subr.bf16.mxu0 0
        %850 = vmatpush1.bf16.msra.mxu0 0
        %851 = vmatprep.subr.bf16.mxu0 0
        %852 = vmatpush1.bf16.msra.mxu0 0
        %853 = vmatprep.subr.bf16.mxu0 0
        %854 = vmatpush1.bf16.msra.mxu0 %v837
        %855 = vmatprep.subr.bf16.mxu0 0
        %856 = vmatpush2.bf16.msra.mxu0 0
        %857 = vmatprep.subr.bf16.mxu0 0
        %858 = vmatpush2.bf16.msra.mxu0 0
        %859 = vmatprep.subr.bf16.mxu0 0
        %860 = vmatpush2.bf16.msra.mxu0 0
        %861 = vmatprep.subr.bf16.mxu0 0
        %862 = vmatpush2.bf16.msra.mxu0 0
        %863 = vmatprep.subr.bf16.mxu0 0
        %864 = vmatpush2.bf16.msra.mxu0 0
        %865 = vmatprep.subr.bf16.mxu0 0
        %866 = vmatpush2.bf16.msra.mxu0 0
        %867 = vmatprep.subr.bf16.mxu0 0
        %868 = vmatpush2.bf16.msra.mxu0 0
        %869 = vmatprep.subr.bf16.mxu0 0
        %870 = vmatpush2.bf16.msra.mxu0 0
        %871 = vmatprep.mubr.bf16.mxu0 0
        %872 = vmatmul.mubr.bf16.gmra.mxu0 %v828
        %v873 = vpop.f32.mrf.mxu0
        %v874 = vadd.f32 0.0, %v873
        %v875 = vpop.f32.mrf.mxu0
        %v876 = vpop.f32.mrf.mxu0
        %v877 = vadd.f32 0.0, %v876
        %v878 = vpop.f32.mrf.mxu0
        %879 = vmatprep.mubr.bf16.mxu0 0
        %880 = vmatmul.mubr.bf16.gmra.mxu0 %v831
        %v881 = vpop.f32.mrf.mxu0
        %v882 = vadd.f32 0.0, %v881
        %v883 = vpop.f32.mrf.mxu0
        %v884 = vpop.f32.mrf.mxu0
        %v885 = vadd.f32 0.0, %v884
        %v886 = vpop.f32.mrf.mxu0
        %887 = vmatprep.mubr.bf16.mxu0 0
        %888 = vmatmul.mubr.bf16.gmra.mxu0 %v834
        %v889 = vpop.f32.mrf.mxu0
        %v890 = vadd.f32 0.0, %v889
        %v891 = vpop.f32.mrf.mxu0
        %v892 = vpop.f32.mrf.mxu0
        %v893 = vpop.f32.mrf.mxu0
        %894 = vdwg.mxu0
        %v895 = vadd.f32 %v810, %v874
        %v896 = vadd.f32 %v811, %v877
        %v897 = vadd.f32 %v812, %v882
        %v898 = vadd.f32 %v813, %v885
        %v899 = vadd.f32 %v814, %v890
        %v900 = vld [vmem:[%s300 + $0x8] sm:$0xc]
        %v901 = vld [vmem:[%s300 + $0xc] sm:$0xf]
        %v902 = vld [vmem:[%s300 + $0x10] sm:$0xf]
        %v903 = vld [vmem:[%s300 + $0x14] sm:$0xf]
        %v904 = vld [vmem:[%s300 + $0x18] sm:$0xf]
        %v905 = vld [vmem:[%s300 + $0x1c] sm:$0x3]
        %s906 = scalar_lea.vmem [#allocation2], 24
        %v907 = vld [vmem:[%s906] sm:$0xf]
        %v914 = vunpack.c.l.b16 %v900
        %v915 = vunpack.c.l.b16 %v901
        %v916 = vunpack.c.l.b16 %v902
        %v917 = vunpack.c.l.b16 %v903
        %v918 = vunpack.c.l.b16 %v904
        %v919 = vunpack.c.l.b16 %v905
        %v920 = vpack.c.b16 %v915, %v914
        %v921 = vpack.c.b16 %v917, %v916
        %v922 = vpack.c.b16 %v919, %v918
        %v923 = vrot.slane %v920, 2
        %v924 = vrot.slane %v921, 2
        %v925 = vsel %vm821, %v923, %v924
        %v926 = vrot.slane %v922, 2
        %v927 = vsel %vm821, %v924, %v926
        %v929 = vsel %vm386, %v925, 0
        %v932 = vsel %vm386, %v927, 0
        %v935 = vsel %vm386, %v926, 0
        %v938 = vsel %vm396, %v907, 0
        %940 = vmatprep.subr.bf16.mxu0 0
        %941 = vmatpush1.bf16.msra.mxu0 0
        %942 = vmatprep.subr.bf16.mxu0 0
        %943 = vmatpush1.bf16.msra.mxu0 0
        %944 = vmatprep.subr.bf16.mxu0 0
        %945 = vmatpush1.bf16.msra.mxu0 0
        %946 = vmatprep.subr.bf16.mxu0 0
        %947 = vmatpush1.bf16.msra.mxu0 0
        %948 = vmatprep.subr.bf16.mxu0 0
        %949 = vmatpush1.bf16.msra.mxu0 0
        %950 = vmatprep.subr.bf16.mxu0 0
        %951 = vmatpush1.bf16.msra.mxu0 0
        %952 = vmatprep.subr.bf16.mxu0 0
        %953 = vmatpush1.bf16.msra.mxu0 0
        %954 = vmatprep.subr.bf16.mxu0 0
        %955 = vmatpush1.bf16.msra.mxu0 %v938
        %956 = vmatprep.subr.bf16.mxu0 0
        %957 = vmatpush2.bf16.msra.mxu0 0
        %958 = vmatprep.subr.bf16.mxu0 0
        %959 = vmatpush2.bf16.msra.mxu0 0
        %960 = vmatprep.subr.bf16.mxu0 0
        %961 = vmatpush2.bf16.msra.mxu0 0
        %962 = vmatprep.subr.bf16.mxu0 0
        %963 = vmatpush2.bf16.msra.mxu0 0
        %964 = vmatprep.subr.bf16.mxu0 0
        %965 = vmatpush2.bf16.msra.mxu0 0
        %966 = vmatprep.subr.bf16.mxu0 0
        %967 = vmatpush2.bf16.msra.mxu0 0
        %968 = vmatprep.subr.bf16.mxu0 0
        %969 = vmatpush2.bf16.msra.mxu0 0
        %970 = vmatprep.subr.bf16.mxu0 0
        %971 = vmatpush2.bf16.msra.mxu0 0
        %972 = vmatprep.mubr.bf16.mxu0 0
        %973 = vmatmul.mubr.bf16.gmra.mxu0 %v929
        %v974 = vpop.f32.mrf.mxu0
        %v975 = vadd.f32 0.0, %v974
        %v976 = vpop.f32.mrf.mxu0
        %v977 = vpop.f32.mrf.mxu0
        %v978 = vadd.f32 0.0, %v977
        %v979 = vpop.f32.mrf.mxu0
        %980 = vmatprep.mubr.bf16.mxu0 0
        %981 = vmatmul.mubr.bf16.gmra.mxu0 %v932
        %v982 = vpop.f32.mrf.mxu0
        %v983 = vadd.f32 0.0, %v982
        %v984 = vpop.f32.mrf.mxu0
        %v985 = vpop.f32.mrf.mxu0
        %v986 = vadd.f32 0.0, %v985
        %v987 = vpop.f32.mrf.mxu0
        %988 = vmatprep.mubr.bf16.mxu0 0
        %989 = vmatmul.mubr.bf16.gmra.mxu0 %v935
        %v990 = vpop.f32.mrf.mxu0
        %v991 = vadd.f32 0.0, %v990
        %v992 = vpop.f32.mrf.mxu0
        %v993 = vpop.f32.mrf.mxu0
        %v994 = vpop.f32.mrf.mxu0
        %995 = vdwg.mxu0
        %v996 = vadd.f32 %v895, %v975
        %v997 = vadd.f32 %v896, %v978
        %v998 = vadd.f32 %v897, %v983
        %v999 = vadd.f32 %v898, %v986
        %v1000 = vadd.f32 %v899, %v991
        %v1001 = vld [vmem:[%s300 + $0x1c] sm:$0x7]
        %s1002 = scalar_lea.vmem [#allocation2], 28
        %v1003 = vld [vmem:[%s1002] sm:$0xf]
        %v1005 = vunpack.c.l.b16 %v1001
        %v1006 = vpack.c.b16 %v1005, %v918
        %vm1007 = vsmask.f32 5376
        %v1009 = vshrl.u32 %v920, 16
        %v1011 = vrot.slane %v1009, 2
        %v1012 = vshll.u32 %v920, 16
        %v1014 = vrot.slane %v1012, 3
        %v1015 = vor.u32 %v1011, %v1014
        %v1017 = vshrl.u32 %v921, 16
        %v1019 = vrot.slane %v1017, 2
        %v1020 = vshll.u32 %v921, 16
        %v1022 = vrot.slane %v1020, 3
        %v1023 = vor.u32 %v1019, %v1022
        %v1024 = vsel %vm1007, %v1015, %v1023
        %v1026 = vshrl.u32 %v1006, 16
        %v1028 = vrot.slane %v1026, 2
        %v1029 = vshll.u32 %v1006, 16
        %v1031 = vrot.slane %v1029, 3
        %v1032 = vor.u32 %v1028, %v1031
        %v1033 = vsel %vm1007, %v1023, %v1032
        %v1035 = vsel %vm386, %v1024, 0
        %v1038 = vsel %vm386, %v1033, 0
        %v1041 = vsel %vm386, %v1032, 0
        %v1044 = vsel %vm396, %v1003, 0
        %1046 = vmatprep.subr.bf16.mxu0 0
        %1047 = vmatpush1.bf16.msra.mxu0 0
        %1048 = vmatprep.subr.bf16.mxu0 0
        %1049 = vmatpush1.bf16.msra.mxu0 0
        %1050 = vmatprep.subr.bf16.mxu0 0
        %1051 = vmatpush1.bf16.msra.mxu0 0
        %1052 = vmatprep.subr.bf16.mxu0 0
        %1053 = vmatpush1.bf16.msra.mxu0 0
        %1054 = vmatprep.subr.bf16.mxu0 0
        %1055 = vmatpush1.bf16.msra.mxu0 0
        %1056 = vmatprep.subr.bf16.mxu0 0
        %1057 = vmatpush1.bf16.msra.mxu0 0
        %1058 = vmatprep.subr.bf16.mxu0 0
        %1059 = vmatpush1.bf16.msra.mxu0 0
        %1060 = vmatprep.subr.bf16.mxu0 0
        %1061 = vmatpush1.bf16.msra.mxu0 %v1044
        %1062 = vmatprep.subr.bf16.mxu0 0
        %1063 = vmatpush2.bf16.msra.mxu0 0
        %1064 = vmatprep.subr.bf16.mxu0 0
        %1065 = vmatpush2.bf16.msra.mxu0 0
        %1066 = vmatprep.subr.bf16.mxu0 0
        %1067 = vmatpush2.bf16.msra.mxu0 0
        %1068 = vmatprep.subr.bf16.mxu0 0
        %1069 = vmatpush2.bf16.msra.mxu0 0
        %1070 = vmatprep.subr.bf16.mxu0 0
        %1071 = vmatpush2.bf16.msra.mxu0 0
        %1072 = vmatprep.subr.bf16.mxu0 0
        %1073 = vmatpush2.bf16.msra.mxu0 0
        %1074 = vmatprep.subr.bf16.mxu0 0
        %1075 = vmatpush2.bf16.msra.mxu0 0
        %1076 = vmatprep.subr.bf16.mxu0 0
        %1077 = vmatpush2.bf16.msra.mxu0 0
        %1078 = vmatprep.mubr.bf16.mxu0 0
        %1079 = vmatmul.mubr.bf16.gmra.mxu0 %v1035
        %v1080 = vpop.f32.mrf.mxu0
        %v1081 = vadd.f32 0.0, %v1080
        %v1082 = vpop.f32.mrf.mxu0
        %v1083 = vpop.f32.mrf.mxu0
        %v1084 = vadd.f32 0.0, %v1083
        %v1085 = vpop.f32.mrf.mxu0
        %1086 = vmatprep.mubr.bf16.mxu0 0
        %1087 = vmatmul.mubr.bf16.gmra.mxu0 %v1038
        %v1088 = vpop.f32.mrf.mxu0
        %v1089 = vadd.f32 0.0, %v1088
        %v1090 = vpop.f32.mrf.mxu0
        %v1091 = vpop.f32.mrf.mxu0
        %v1092 = vadd.f32 0.0, %v1091
        %v1093 = vpop.f32.mrf.mxu0
        %1094 = vmatprep.mubr.bf16.mxu0 0
        %1095 = vmatmul.mubr.bf16.gmra.mxu0 %v1041
        %v1096 = vpop.f32.mrf.mxu0
        %v1097 = vadd.f32 0.0, %v1096
        %v1098 = vpop.f32.mrf.mxu0
        %v1099 = vpop.f32.mrf.mxu0
        %v1100 = vpop.f32.mrf.mxu0
        %1101 = vdwg.mxu0
        %v1102 = vadd.f32 %v996, %v1081
        %v1103 = vadd.f32 %v997, %v1084
        %v1104 = vadd.f32 %v998, %v1089
        %v1105 = vadd.f32 %v999, %v1092
        %v1106 = vadd.f32 %v1000, %v1097
        %v1107 = vld [vmem:[%s300 + $0x8] sm:$0x8]
        %s1108 = scalar_lea.vmem [#allocation2], 32
        %v1109 = vld [vmem:[%s1108] sm:$0xf]
        %v1111 = vunpack.c.l.b16 %v1107
        %v1112 = vpack.c.b16 %v915, %v1111
        %vm1113 = vcmask 1044480
        %v1114 = vrot.slane %v1112, 3
        %v1115 = vrot.slane %v921, 3
        %v1116 = vsel %vm1113, %v1114, %v1115
        %v1117 = vrot.slane %v1006, 3
        %v1118 = vsel %vm1113, %v1115, %v1117
        %v1120 = vsel %vm386, %v1116, 0
        %v1123 = vsel %vm386, %v1118, 0
        %v1126 = vsel %vm386, %v1117, 0
        %v1129 = vsel %vm396, %v1109, 0
        %1131 = vmatprep.subr.bf16.mxu0 0
        %1132 = vmatpush1.bf16.msra.mxu0 0
        %1133 = vmatprep.subr.bf16.mxu0 0
        %1134 = vmatpush1.bf16.msra.mxu0 0
        %1135 = vmatprep.subr.bf16.mxu0 0
        %1136 = vmatpush1.bf16.msra.mxu0 0
        %1137 = vmatprep.subr.bf16.mxu0 0
        %1138 = vmatpush1.bf16.msra.mxu0 0
        %1139 = vmatprep.subr.bf16.mxu0 0
        %1140 = vmatpush1.bf16.msra.mxu0 0
        %1141 = vmatprep.subr.bf16.mxu0 0
        %1142 = vmatpush1.bf16.msra.mxu0 0
        %1143 = vmatprep.subr.bf16.mxu0 0
        %1144 = vmatpush1.bf16.msra.mxu0 0
        %1145 = vmatprep.subr.bf16.mxu0 0
        %1146 = vmatpush1.bf16.msra.mxu0 %v1129
        %1147 = vmatprep.subr.bf16.mxu0 0
        %1148 = vmatpush2.bf16.msra.mxu0 0
        %1149 = vmatprep.subr.bf16.mxu0 0
        %1150 = vmatpush2.bf16.msra.mxu0 0
        %1151 = vmatprep.subr.bf16.mxu0 0
        %1152 = vmatpush2.bf16.msra.mxu0 0
        %1153 = vmatprep.subr.bf16.mxu0 0
        %1154 = vmatpush2.bf16.msra.mxu0 0
        %1155 = vmatprep.subr.bf16.mxu0 0
        %1156 = vmatpush2.bf16.msra.mxu0 0
        %1157 = vmatprep.subr.bf16.mxu0 0
        %1158 = vmatpush2.bf16.msra.mxu0 0
        %1159 = vmatprep.subr.bf16.mxu0 0
        %1160 = vmatpush2.bf16.msra.mxu0 0
        %1161 = vmatprep.subr.bf16.mxu0 0
        %1162 = vmatpush2.bf16.msra.mxu0 0
        %1163 = vmatprep.mubr.bf16.mxu0 0
        %1164 = vmatmul.mubr.bf16.gmra.mxu0 %v1120
        %v1165 = vpop.f32.mrf.mxu0
        %v1166 = vadd.f32 0.0, %v1165
        %v1167 = vpop.f32.mrf.mxu0
        %v1168 = vpop.f32.mrf.mxu0
        %v1169 = vadd.f32 0.0, %v1168
        %v1170 = vpop.f32.mrf.mxu0
        %1171 = vmatprep.mubr.bf16.mxu0 0
        %1172 = vmatmul.mubr.bf16.gmra.mxu0 %v1123
        %v1173 = vpop.f32.mrf.mxu0
        %v1174 = vadd.f32 0.0, %v1173
        %v1175 = vpop.f32.mrf.mxu0
        %v1176 = vpop.f32.mrf.mxu0
        %v1177 = vadd.f32 0.0, %v1176
        %v1178 = vpop.f32.mrf.mxu0
        %1179 = vmatprep.mubr.bf16.mxu0 0
        %1180 = vmatmul.mubr.bf16.gmra.mxu0 %v1126
        %v1181 = vpop.f32.mrf.mxu0
        %v1182 = vadd.f32 0.0, %v1181
        %v1183 = vpop.f32.mrf.mxu0
        %v1184 = vpop.f32.mrf.mxu0
        %v1185 = vpop.f32.mrf.mxu0
        %1186 = vdwg.mxu0
        %v1187 = vadd.f32 %v1102, %v1166
        %v1188 = vadd.f32 %v1103, %v1169
        %v1189 = vadd.f32 %v1104, %v1174
        %v1190 = vadd.f32 %v1105, %v1177
        %v1191 = vadd.f32 %v1106, %v1182
        %v1192 = vld [vmem:[#allocation4] sm:$0x1]
        %v1194 = vlaneseq
        %v1195 = vshrl.u32 %v1194, 7
        %v1196 = vsub.s32 0, %v1195
        %v1197 = vrot.slane %v1192, %v1196
        %v1199 = vadd.f32 %v1187, %v1197
        %v1200 = vadd.f32 %v1188, %v1197
        %v1201 = vadd.f32 %v1189, %v1197
        %v1202 = vadd.f32 %v1190, %v1197
        %v1203 = vadd.f32 %v1191, %v1197
        %v1204 = vmax.f32 %v1199, 0.0
        %v1205 = vmax.f32 %v1200, 0.0
        %v1206 = vmax.f32 %v1201, 0.0
        %v1207 = vmax.f32 %v1202, 0.0
        %v1208 = vmax.f32 %v1203, 0.0
        %v1209 = vld [vmem:[%s318] sm:$0xff]
        %v1210 = vld [vmem:[%s318 + $0x8] sm:$0xff]
        %v1211 = vld [vmem:[%s318 + $0x10] sm:$0xff]
        %v1212 = vld [vmem:[%s318 + $0x18] sm:$0xff]
        %v1213 = vld [vmem:[%s318 + $0x20] sm:$0xff]
        %1215 = vset.pattern.permute.xlu0 0
        %1216 = vperm.xlu0 %1215, %v1209
        %v1217 = vpop.permute.xlu0 %1216
        %1220 = vset.pattern.permute.xlu0 0
        %1221 = vperm.xlu0 %1220, %v1210
        %v1222 = vpop.permute.xlu0 %1221
        %1225 = vset.pattern.permute.xlu0 0
        %1226 = vperm.xlu0 %1225, %v1211
        %v1227 = vpop.permute.xlu0 %1226
        %1230 = vset.pattern.permute.xlu0 0
        %1231 = vperm.xlu0 %1230, %v1212
        %v1232 = vpop.permute.xlu0 %1231
        %1235 = vset.pattern.permute.xlu0 0
        %1236 = vperm.xlu0 %1235, %v1213
        %v1237 = vpop.permute.xlu0 %1236
        %v1239 = vmul.f32 %v1204, %v1217
        %v1240 = vmul.f32 %v1205, %v1222
        %v1241 = vmul.f32 %v1206, %v1227
        %v1242 = vmul.f32 %v1207, %v1232
        %v1243 = vmul.f32 %v1208, %v1237
        %v1244 = vpack.c.bf16 %v1240, %v1239
        %v1245 = vpack.c.bf16 %v1242, %v1241
        %v1246 = vpack.c.bf16 %v1243, %v1243
        %v1248 = vshrl.u32 %v1244, 16
        %v1250 = vrot.slane %v1248, 2
        %v1251 = vshll.u32 %v1244, 16
        %v1253 = vrot.slane %v1251, 3
        %v1254 = vor.u32 %v1250, %v1253
        %v1256 = vshrl.u32 %v1245, 16
        %v1258 = vrot.slane %v1256, 2
        %v1259 = vshll.u32 %v1245, 16
        %v1261 = vrot.slane %v1259, 3
        %v1262 = vor.u32 %v1258, %v1261
        %v1263 = vsel %vm1007, %v1254, %v1262
        %v1265 = vshrl.u32 %v1246, 16
        %v1267 = vrot.slane %v1265, 2
        %v1268 = vshll.u32 %v1246, 16
        %v1270 = vrot.slane %v1268, 3
        %v1271 = vor.u32 %v1267, %v1270
        %v1272 = vsel %vm1007, %v1262, %v1271
        %vm1275 = vmand %vm821, %vm1007
        %v1276 = vsel %vm1275, 0, %v1254
        %vm1277 = vcmask 1041408
        %vm1278 = vsmask.f32 1280
        %vm1279 = vmand %vm1277, %vm1278
        %v1280 = vsel %vm1279, %v1271, 0
        %v1283 = vunpack.c.l.b16 %v1276
        %v1284 = vunpack.c.h.b16 %v1276
        %v1285 = vunpack.c.l.b16 %v1263
        %v1286 = vunpack.c.h.b16 %v1263
        %v1287 = vunpack.c.l.b16 %v1272
        %v1288 = vunpack.c.h.b16 %v1272
        %v1289 = vunpack.c.l.b16 %v1280
        %v1290 = vunpack.c.h.b16 %v1280
        %v1291 = vpack.c.b16 %v1283, %v1283
        %v1292 = vpack.c.b16 %v1284, %v1284
        %v1293 = vpack.c.b16 %v1285, %v1285
        %v1294 = vpack.c.b16 %v1286, %v1286
        %v1295 = vpack.c.b16 %v1287, %v1287
        %v1296 = vpack.c.b16 %v1288, %v1288
        %v1297 = vpack.c.b16 %v1289, %v1289
        %v1298 = vpack.c.b16 %v1290, %v1290
        %1307 = vst [vmem:[%s336] sm:$0xf] %v1291
        %1308 = vst [vmem:[%s336 + $0x4] sm:$0xf] %v1292
        %1309 = vst [vmem:[%s336 + $0x8] sm:$0xf] %v1293
        %1310 = vst [vmem:[%s336 + $0xc] sm:$0xf] %v1294
        %1311 = vst [vmem:[%s336 + $0x10] sm:$0xf] %v1295
        %1312 = vst [vmem:[%s336 + $0x14] sm:$0xf] %v1296
        %1313 = vst [vmem:[%s336 + $0x18] sm:$0xf] %v1297
        %1314 = vst [vmem:[%s336 + $0x1c] sm:$0x7] %v1298
        %p1315 = scmp.lt.s32.totalorder %s17, 9
        %s1316 = scalar_select %p1315, %s17, 9
        %s1317 = smul.addr %s1316, 8
        %s1318 = smul.addr %s1317, 4
        %s1319 = scalar_lea.vmem %s4, %s1318
        // Predicated region
        $region45: #{ico_cnn_forward.3} parent=35 // pred_check
          %p1320 = pneg %p155
        $region46: #{ico_cnn_forward.3} parent=35 // pred_check_branch
          %1322 = sbr.rel (%p1320) target = $region48
        $region47: #{ico_cnn_forward.3} parent=35 // pred_region
          _
        $region48: #{ico_cnn_forward.3} parent=35 // pred_fallthru
          _
      $region36: #{ico_cnn_forward.3} parent=5 // pred_fallthru
        _
      %p1323 = scmp.le.s32.totalorder 2, %s12
      // Predicated region
      $region49: #{ico_cnn_forward.3} parent=5 // pred_check
        %p1324 = pneg %p1323
      $region50: #{ico_cnn_forward.3} parent=5 // pred_check_branch
        %1326 = sbr.rel (%p1324) target = $region52
      $region51: #{ico_cnn_forward.3} parent=5 // pred_region
        %s1327 = ssub.s32 %s12, 2
        // Predicated region
        $region53: #{ico_cnn_forward.3} parent=51 // pred_check
          %p1328 = pneg %p161
        $region54: #{ico_cnn_forward.3} parent=51 // pred_check_branch
          %1330 = sbr.rel (%p1328) target = $region56
        $region55: #{ico_cnn_forward.3} parent=51 // pred_region
          %p1331 = scmp.lt.s32.totalorder %s18, 9
          %s1332 = scalar_select %p1331, %s18, 9
          %s1333 = smul.addr %s1332, 8
          %s1334 = smul.addr %s1333, 4
          %s1335 = scalar_lea.vmem %s4, %s1334
        $region56: #{ico_cnn_forward.3} parent=51 // pred_fallthru
          _
      $region52: #{ico_cnn_forward.3} parent=5 // pred_fallthru
        _
    $region6: #{ico_cnn_forward.3} parent=1 // loop_footer
      %s16 = sadd.s32 1, %s12
    $region7: #{ico_cnn_forward.3} parent=1 // loop_footer_branch
      %11 = sbr.rel target = $region3
    $region8: #{ico_cnn_forward.3} parent=1 // loop_exit
      _
    %1336 = vsyncpa [#allocation3], 1
    %s1337 = scalar_lea.sflag [#allocation3], 1
    %1338 = vsyncpa %s1337, 1
    %1339 = vsyncpa [#allocation5], 1

// kernel: ico_cnn_forward.4
$region0: #{ico_cnn_forward.4}
  #allocation0 [shape = 'u32[]', space=smem, size = 0x4, offset = 0x4, fixed_abs, tag = 'smem constant byte address 0x4 - core index']
  #allocation1 [shape = 'u32[144,128]{1,0:T(1,128)}', space=vmem, size = 0x12000, scoped, tag = 'internal scratch']
  %s0 = inlined_call_operand.vmem [shape: bf16[10,62,128], index: 0, kind: input, shape index: {}]
  %s1 = inlined_call_operand.hbm [shape: bf16[9,128,128], index: 1, kind: input, shape index: {}]
  %s2 = inlined_call_operand.hbm [shape: f32[1,128], index: 2, kind: input, shape index: {}]
  %s3 = inlined_call_operand.vmem [shape: f32[5,40,1], index: 3, kind: input, shape index: {}]
  %s4 = inlined_call_operand.vmem [shape: bf16[10,40,128], index: 4, kind: output, shape index: {}]
  %s5 = sld [smem:[#allocation0]]
  $region57: #{ico_cnn_forward.4} parent=0
    _
  %s7 = ssub.s32 1, %s5
  %s8 = scalar_select 0, %s7, %s5
  $region1: #{ico_cnn_forward.4} parent=0
    #allocation2 [shape = 'u8[294912]{0}', space=vmem, size = 0x48000, scoped, tag = 'input window, operand 1, single buffered']
    #allocation3 [shape = 's32[2]{0}', space=sflag, size = 0x8, scoped, tag = 'scoped memory for ico_cnn_forward.4']
    #allocation4 [shape = 'u8[512]{0}', space=vmem, size = 0x400, scoped, tag = 'input window, operand 2, single buffered']
    #allocation5 [shape = 's32[1]{0}', space=sflag, size = 0x4, scoped, tag = 'scoped memory for ico_cnn_forward.4']
    %9 = vsyncpa [#allocation3], 0
    %10 = vsyncpa [#allocation5], 0
    loop: start=0, step=1, limit=12
    $region2: #{ico_cnn_forward.4} parent=1 // loop_pre_header
      _
    $region3: #{ico_cnn_forward.4} parent=1 // loop_header
      %s12 = sphi 0, %s16
      %p13 = scmp.ge.s32.totalorder %s12, 12
      %s22 = sphi 0, %s24
      %s25 = sphi 0, %s22
      %s26 = sphi 0, %s25
      %s42 = sphi 0, %s26
      %s46 = sphi 0, %s46
      %s48 = sphi 0, %s46
      %s49 = sphi 0, %s48
      %s63 = sphi 0, %s49
      %s67 = sphi 0, %s67
      %s69 = sphi 0, %s67
      %s70 = sphi 0, %s69
      %s84 = sphi 0, %s70
      %s116 = sphi 0, %s118
      %s119 = sphi 0, %s116
      %s120 = sphi 0, %s119
      %s136 = sphi 0, %s120
      %s142 = sphi 0, %s144
      %s145 = sphi 0, %s142
      %s146 = sphi 0, %s145
      %s162 = sphi 0, %s146
    $region4: #{ico_cnn_forward.4} parent=1 // loop_header_branch
      %15 = sbr.rel (%p13) target = $region8
    $region5: #{ico_cnn_forward.4} parent=1 // loop_body
      %s17 = ssub.s32 %s12, 1
      %s18 = ssub.s32 %s12, 2
      %s19 = sadd.s32 %s12, 1
      %s20 = ssub.s32 %s12, %s19
      %p21 = scmp.eq.s32.totalorder %s20, 0
      %s23 = sadd.s32 %s22, 1
      %s24 = scalar_select %p21, %s22, %s23
      %p27 = pneg %p21
      %p28 = scmp.eq.s32.totalorder %s12, 9
      %p29 = por %p27, %p28
      %p30 = scmp.ne.s32.totalorder %s22, %s25
      %p31 = scmp.eq.s32.totalorder %s12, 0
      %p32 = por %p30, %p31
      %p33 = scmp.ne.s32.totalorder %s22, %s25
      %p34 = scmp.eq.s32.totalorder %s17, 9
      %p35 = por %p33, %p34
      %p36 = scmp.ne.s32.totalorder %s25, %s26
      %p37 = scmp.eq.s32.totalorder %s17, 0
      %p38 = por %p36, %p37
      %p39 = scmp.ne.s32.totalorder %s25, %s26
      %p40 = scmp.eq.s32.totalorder %s18, 9
      %p41 = por %p39, %p40
      %p43 = scmp.ne.s32.totalorder %s26, %s42
      %p44 = scmp.eq.s32.totalorder %s18, 0
      %p45 = por %p43, %p44
      %s47 = sadd.s32 %s46, 1
      %p50 = scmp.eq.s32.totalorder %s12, 9
      %p51 = scmp.ne.s32.totalorder %s46, %s48
      %p52 = scmp.eq.s32.totalorder %s12, 0
      %p53 = por %p51, %p52
      %p54 = scmp.ne.s32.totalorder %s46, %s48
      %p55 = scmp.eq.s32.totalorder %s17, 9
      %p56 = por %p54, %p55
      %p57 = scmp.ne.s32.totalorder %s48, %s49
      %p58 = scmp.eq.s32.totalorder %s17, 0
      %p59 = por %p57, %p58
      %p60 = scmp.ne.s32.totalorder %s48, %s49
      %p61 = scmp.eq.s32.totalorder %s18, 9
      %p62 = por %p60, %p61
      %p64 = scmp.ne.s32.totalorder %s49, %s63
      %p65 = scmp.eq.s32.totalorder %s18, 0
      %p66 = por %p64, %p65
      %s68 = sadd.s32 %s67, 1
      %p71 = scmp.eq.s32.totalorder %s12, 9
      %p72 = scmp.ne.s32.totalorder %s67, %s69
      %p73 = scmp.eq.s32.totalorder %s12, 0
      %p74 = por %p72, %p73
      %p75 = scmp.ne.s32.totalorder %s67, %s69
      %p76 = scmp.eq.s32.totalorder %s17, 9
      %p77 = por %p75, %p76
      %p78 = scmp.ne.s32.totalorder %s69, %s70
      %p79 = scmp.eq.s32.totalorder %s17, 0
      %p80 = por %p78, %p79
      %p81 = scmp.ne.s32.totalorder %s69, %s70
      %p82 = scmp.eq.s32.totalorder %s18, 9
      %p83 = por %p81, %p82
      %p85 = scmp.ne.s32.totalorder %s70, %s84
      %p86 = scmp.eq.s32.totalorder %s18, 0
      %p87 = por %p85, %p86
      %p88 = scmp.lt.s32.totalorder %s12, 0
      %s89 = ssub.s32 0, %s12
      %s90 = scalar_select %p88, %s89, %s12
      %s91 = sdiv.u32.pop %s90, 5
      %s92 = srem.u32.pop %s90, 5
      %s93 = ssub.s32 0, %s92
      %s94 = scalar_select %p88, %s93, %s92
      %p95 = scmp.ne.s32.totalorder %s94, 0
      %p96 = scmp.lt.s32.totalorder %s94, 0
      %p97 = pnand %p96, %p95
      %p98 = pneg %p97
      %s99 = sadd.s32 %s94, 5
      %s100 = scalar_select %p98, %s99, %s94
      %p101 = scmp.lt.s32.totalorder %s19, 0
      %s102 = ssub.s32 0, %s19
      %s103 = scalar_select %p101, %s102, %s19
      %s104 = sdiv.u32.pop %s103, 5
      %s105 = srem.u32.pop %s103, 5
      %s106 = ssub.s32 0, %s105
      %s107 = scalar_select %p101, %s106, %s105
      %p108 = scmp.ne.s32.totalorder %s107, 0
      %p109 = scmp.lt.s32.totalorder %s107, 0
      %p110 = pnand %p109, %p108
      %p111 = pneg %p110
      %s112 = sadd.s32 %s107, 5
      %s113 = scalar_select %p111, %s112, %s107
      %s114 = ssub.s32 %s100, %s113
      %p115 = scmp.eq.s32.totalorder %s114, 0
      %s117 = sadd.s32 %s116, 1
      %s118 = scalar_select %p115, %s116, %s117
      %p121 = pneg %p115
      %p122 = scmp.eq.s32.totalorder %s12, 9
      %p123 = por %p121, %p122
      %p124 = scmp.ne.s32.totalorder %s116, %s119
      %p125 = scmp.eq.s32.totalorder %s12, 0
      %p126 = por %p124, %p125
      %p127 = scmp.ne.s32.totalorder %s116, %s119
      %p128 = scmp.eq.s32.totalorder %s17, 9
      %p129 = por %p127, %p128
      %p130 = scmp.ne.s32.totalorder %s119, %s120
      %p131 = scmp.eq.s32.totalorder %s17, 0
      %p132 = por %p130, %p131
      %p133 = scmp.ne.s32.totalorder %s119, %s120
      %p134 = scmp.eq.s32.totalorder %s18, 9
      %p135 = por %p133, %p134
      %p137 = scmp.ne.s32.totalorder %s120, %s136
      %p138 = scmp.eq.s32.totalorder %s18, 0
      %p139 = por %p137, %p138
      %s140 = ssub.s32 %s12, %s19
      %p141 = scmp.eq.s32.totalorder %s140, 0
      %s143 = sadd.s32 %s142, 1
      %s144 = scalar_select %p141, %s142, %s143
      %p147 = pneg %p141
      %p148 = scmp.eq.s32.totalorder %s12, 9
      %p149 = por %p147, %p148
      %p150 = scmp.ne.s32.totalorder %s142, %s145
      %p151 = scmp.eq.s32.totalorder %s12, 0
      %p152 = por %p150, %p151
      %p153 = scmp.ne.s32.totalorder %s142, %s145
      %p154 = scmp.eq.s32.totalorder %s17, 9
      %p155 = por %p153, %p154
      %p156 = scmp.ne.s32.totalorder %s145, %s146
      %p157 = scmp.eq.s32.totalorder %s17, 0
      %p158 = por %p156, %p157
      %p159 = scmp.ne.s32.totalorder %s145, %s146
      %p160 = scmp.eq.s32.totalorder %s18, 9
      %p161 = por %p159, %p160
      %p163 = scmp.ne.s32.totalorder %s146, %s162
      %p164 = scmp.eq.s32.totalorder %s18, 0
      %p165 = por %p163, %p164
      %p166 = scmp.le.s32.totalorder 1, %s12
      %p167 = scmp.lt.s32.totalorder %s12, 11
      %p168 = pnand %p166, %p167
      %p169 = pneg %p168
      // Predicated region
      $region9: #{ico_cnn_forward.4} parent=5 // pred_check
        _
      $region10: #{ico_cnn_forward.4} parent=5 // pred_check_branch
        %171 = sbr.rel (%p168) target = $region12
      $region11: #{ico_cnn_forward.4} parent=5 // pred_region
        %s172 = ssub.s32 %s12, 1
        // Predicated region
        $region13: #{ico_cnn_forward.4} parent=11 // pred_check
          %p173 = pneg %p59
        $region14: #{ico_cnn_forward.4} parent=11 // pred_check_branch
          %175 = sbr.rel (%p173) target = $region16
        $region15: #{ico_cnn_forward.4} parent=11 // pred_region
          %s177 = ssub.s32 9216, 9216
          %178 = vsyncadd [#allocation3], %s177
          %s179 = sshll.u32 [#allocation2], 4
          %s180 = int_to_ptr.vmem [resolvable:$true] %s179
          %185 = dma.hbm_to_vmem [thread:$0]  %s1, 9216, %s180, [#allocation3], 64, 64, 4
        $region16: #{ico_cnn_forward.4} parent=11 // pred_fallthru
          _
        // Predicated region
        $region17: #{ico_cnn_forward.4} parent=11 // pred_check
          %p186 = pneg %p80
        $region18: #{ico_cnn_forward.4} parent=11 // pred_check_branch
          %188 = sbr.rel (%p186) target = $region20
        $region19: #{ico_cnn_forward.4} parent=11 // pred_region
          %s190 = ssub.s32 16, 16
          %191 = vsyncadd [#allocation5], %s190
          %s193 = sshll.u32 [#allocation4], 4
          %s194 = int_to_ptr.vmem [resolvable:$true] %s193
          %196 = dma.hbm_to_vmem [thread:$0]  %s2, 16, %s194, [#allocation5]
        $region20: #{ico_cnn_forward.4} parent=11 // pred_fallthru
          _
      $region12: #{ico_cnn_forward.4} parent=5 // pred_fallthru
        _
      %p197 = scmp.lt.s32.totalorder %s12, 10
      // Predicated region
      $region21: #{ico_cnn_forward.4} parent=5 // pred_check
        %p198 = pneg %p197
      $region22: #{ico_cnn_forward.4} parent=5 // pred_check_branch
        %200 = sbr.rel (%p198) target = $region24
      $region23: #{ico_cnn_forward.4} parent=5 // pred_region
        // Predicated region
        $region25: #{ico_cnn_forward.4} parent=23 // pred_check
          %p201 = pneg %p32
        $region26: #{ico_cnn_forward.4} parent=23 // pred_check_branch
          %203 = sbr.rel (%p201) target = $region28
        $region27: #{ico_cnn_forward.4} parent=23 // pred_region
          %p204 = scmp.lt.s32.totalorder %s12, 9
          %s205 = scalar_select %p204, %s12, 9
          %s206 = smul.addr %s205, 8
          %s207 = smul.addr %s206, 4
          %s208 = scalar_lea.vmem %s0, %s207
        $region28: #{ico_cnn_forward.4} parent=23 // pred_fallthru
          _
        // Predicated region
        $region29: #{ico_cnn_forward.4} parent=23 // pred_check
          %p209 = pneg %p126
        $region30: #{ico_cnn_forward.4} parent=23 // pred_check_branch
          %211 = sbr.rel (%p209) target = $region32
        $region31: #{ico_cnn_forward.4} parent=23 // pred_region
          %p212 = scmp.lt.s32.totalorder %s12, 0
          %s213 = ssub.s32 0, %s12
          %s214 = scalar_select %p212, %s213, %s12
          %s215 = sdiv.u32.pop %s214, 5
          %s216 = srem.u32.pop %s214, 5
          %s217 = ssub.s32 0, %s216
          %s218 = scalar_select %p212, %s217, %s216
          %p219 = scmp.ne.s32.totalorder %s218, 0
          %p220 = scmp.lt.s32.totalorder %s218, 0
          %p221 = pnand %p220, %p219
          %p222 = pneg %p221
          %s223 = sadd.s32 %s218, 5
          %s224 = scalar_select %p222, %s223, %s218
          %p225 = scmp.lt.s32.totalorder %s224, 4
          %s226 = scalar_select %p225, %s224, 4
          %s227 = smul.addr %s226, 5
          %s228 = smul.addr %s227, 8
          %s229 = scalar_lea.vmem %s3, %s228
          %p230 = scmp.lt.s32.totalorder %s12, 0
          %s231 = ssub.s32 0, %s12
          %s232 = scalar_select %p230, %s231, %s12
          %s233 = sdiv.u32.pop %s232, 5
          %s234 = srem.u32.pop %s232, 5
          %s235 = ssub.s32 0, %s234
          %s236 = scalar_select %p230, %s235, %s234
          %p237 = scmp.ne.s32.totalorder %s236, 0
          %p238 = scmp.lt.s32.totalorder %s236, 0
          %p239 = pnand %p238, %p237
          %p240 = pneg %p239
          %s241 = sadd.s32 %s236, 5
          %s242 = scalar_select %p240, %s241, %s236
        $region32: #{ico_cnn_forward.4} parent=23 // pred_fallthru
          _
      $region24: #{ico_cnn_forward.4} parent=5 // pred_fallthru
        _
      %p243 = scmp.le.s32.totalorder 1, %s12
      %p244 = scmp.lt.s32.totalorder %s12, 11
      %p245 = pnand %p243, %p244
      %p246 = pneg %p245
      // Predicated region
      $region33: #{ico_cnn_forward.4} parent=5 // pred_check
        _
      $region34: #{ico_cnn_forward.4} parent=5 // pred_check_branch
        %248 = sbr.rel (%p245) target = $region36
      $region35: #{ico_cnn_forward.4} parent=5 // pred_region
        %s249 = ssub.s32 %s12, 1
        // Predicated region
        $region37: #{ico_cnn_forward.4} parent=35 // pred_check
          %p250 = pneg %p59
        $region38: #{ico_cnn_forward.4} parent=35 // pred_check_branch
          %252 = sbr.rel (%p250) target = $region40
        $region39: #{ico_cnn_forward.4} parent=35 // pred_region
          %253 = dma.done [#allocation3], 9216
        $region40: #{ico_cnn_forward.4} parent=35 // pred_fallthru
          _
        // Predicated region
        $region41: #{ico_cnn_forward.4} parent=35 // pred_check
          %p254 = pneg %p80
        $region42: #{ico_cnn_forward.4} parent=35 // pred_check_branch
          %256 = sbr.rel (%p254) target = $region44
        $region43: #{ico_cnn_forward.4} parent=35 // pred_region
          %257 = dma.done [#allocation5], 16
        $region44: #{ico_cnn_forward.4} parent=35 // pred_fallthru
          _
        %p258 = scmp.lt.s32.totalorder %s17, 9
        %s259 = scalar_select %p258, %s17, 9
        %s260 = smul.addr %s259, 8
        %s261 = smul.addr %s260, 4
        %s262 = scalar_lea.vmem %s0, %s261
        %p263 = pneg %p38
        %p264 = pneg %p35
        %p265 = pneg %p59
        %p266 = pneg %p56
        %p267 = pneg %p80
        %p268 = pneg %p77
        %p269 = scmp.lt.s32.totalorder %s17, 0
        %s270 = ssub.s32 0, %s17
        %s271 = scalar_select %p269, %s270, %s17
        %s272 = sdiv.u32.pop %s271, 5
        %s273 = srem.u32.pop %s271, 5
        %s274 = ssub.s32 0, %s273
        %s275 = scalar_select %p269, %s274, %s273
        %p276 = scmp.ne.s32.totalorder %s275, 0
        %p277 = scmp.lt.s32.totalorder %s275, 0
        %p278 = pnand %p277, %p276
        %p279 = pneg %p278
        %s280 = sadd.s32 %s275, 5
        %s281 = scalar_select %p279, %s280, %s275
        %p282 = scmp.lt.s32.totalorder %s281, 4
        %s283 = scalar_select %p282, %s281, 4
        %s284 = smul.addr %s283, 5
        %s285 = smul.addr %s284, 8
        %s286 = scalar_lea.vmem %s3, %s285
        %p287 = pneg %p132
        %p288 = pneg %p129
        %p289 = pneg %p158
        %p290 = pneg %p155
        %p291 = scmp.lt.s32.totalorder %s17, 9
        %s292 = scalar_select %p291, %s17, 9
        %s293 = smul.addr %s292, 5
        %s294 = smul.addr %s293, 4
        %s295 = scalar_lea.vmem %s4, %s294
        %p296 = scmp.lt.s32.totalorder %s17, 9
        %s297 = scalar_select %p296, %s17, 9
        %s298 = smul.addr %s297, 8
        %s299 = smul.addr %s298, 4
        %s300 = scalar_lea.vmem %s0, %s299
        %p301 = scmp.lt.s32.totalorder %s17, 0
        %s302 = ssub.s32 0, %s17
        %s303 = scalar_select %p301, %s302, %s17
        %s304 = sdiv.u32.pop %s303, 5
        %s305 = srem.u32.pop %s303, 5
        %s306 = ssub.s32 0, %s305
        %s307 = scalar_select %p301, %s306, %s305
        %p308 = scmp.ne.s32.totalorder %s307, 0
        %p309 = scmp.lt.s32.totalorder %s307, 0
        %p310 = pnand %p309, %p308
        %p311 = pneg %p310
        %s312 = sadd.s32 %s307, 5
        %s313 = scalar_select %p311, %s312, %s307
        %p314 = scmp.lt.s32.totalorder %s313, 4
        %s315 = scalar_select %p314, %s313, 4
        %s316 = smul.addr %s315, 5
        %s317 = smul.addr %s316, 8
        %s318 = scalar_lea.vmem %s3, %s317
        %p319 = scmp.lt.s32.totalorder %s17, 0
        %s320 = ssub.s32 0, %s17
        %s321 = scalar_select %p319, %s320, %s17
        %s322 = sdiv.u32.pop %s321, 5
        %s323 = srem.u32.pop %s321, 5
        %s324 = ssub.s32 0, %s323
        %s325 = scalar_select %p319, %s324, %s323
        %p326 = scmp.ne.s32.totalorder %s325, 0
        %p327 = scmp.lt.s32.totalorder %s325, 0
        %p328 = pnand %p327, %p326
        %p329 = pneg %p328
        %s330 = sadd.s32 %s325, 5
        %s331 = scalar_select %p329, %s330, %s325
        %p332 = scmp.lt.s32.totalorder %s17, 9
        %s333 = scalar_select %p332, %s17, 9
        %s334 = smul.addr %s333, 5
        %s335 = smul.addr %s334, 4
        %s336 = scalar_lea.vmem %s4, %s335
        %v338 = vld [vmem:[%s300] sm:$0xf]
        %v339 = vld [vmem:[%s300 + $0x4] sm:$0xf]
        %v340 = vld [vmem:[%s300 + $0x8] sm:$0xf]
        %v341 = vld [vmem:[%s300 + $0xc] sm:$0xf]
        %v342 = vld [vmem:[%s300 + $0x10] sm:$0xf]
        %v343 = vld [vmem:[#allocation2] sm:$0xf]
        %v344 = vld [vmem:[#allocation2 + $0x4] sm:$0xf]
        %v345 = vld [vmem:[#allocation2 + $0x8] sm:$0xf]
        %v346 = vld [vmem:[#allocation2 + $0xc] sm:$0xf]
        %v347 = vld [vmem:[#allocation2 + $0x10] sm:$0xf]
        %v348 = vld [vmem:[#allocation2 + $0x14] sm:$0xf]
        %v349 = vld [vmem:[#allocation2 + $0x18] sm:$0xf]
        %v350 = vld [vmem:[#allocation2 + $0x1c] sm:$0xf]
        %v351 = vld [vmem:[#allocation2 + $0x20] sm:$0xf]
        %v352 = vld [vmem:[#allocation2 + $0x24] sm:$0xf]
        %v353 = vld [vmem:[#allocation2 + $0x28] sm:$0xf]
        %v354 = vld [vmem:[#allocation2 + $0x2c] sm:$0xf]
        %v355 = vld [vmem:[#allocation2 + $0x30] sm:$0xf]
        %v356 = vld [vmem:[#allocation2 + $0x34] sm:$0xf]
        %v357 = vld [vmem:[#allocation2 + $0x38] sm:$0xf]
        %v358 = vld [vmem:[#allocation2 + $0x3c] sm:$0xf]
        %v359 = vld [vmem:[%s300 + $0x14] sm:$0x1]
        %s360 = scalar_lea.vmem [#allocation2], 64
        %v361 = vld [vmem:[%s360] sm:$0xf]
        %v362 = vld [vmem:[%s360 + $0x4] sm:$0xf]
        %v363 = vld [vmem:[%s360 + $0x8] sm:$0xf]
        %v364 = vld [vmem:[%s360 + $0xc] sm:$0xf]
        %v365 = vld [vmem:[%s360 + $0x10] sm:$0xf]
        %v366 = vld [vmem:[%s360 + $0x14] sm:$0xf]
        %v367 = vld [vmem:[%s360 + $0x18] sm:$0xf]
        %v368 = vld [vmem:[%s360 + $0x1c] sm:$0xf]
        %v369 = vld [vmem:[%s360 + $0x20] sm:$0xf]
        %v370 = vld [vmem:[%s360 + $0x24] sm:$0xf]
        %v371 = vld [vmem:[%s360 + $0x28] sm:$0xf]
        %v372 = vld [vmem:[%s360 + $0x2c] sm:$0xf]
        %v373 = vld [vmem:[%s360 + $0x30] sm:$0xf]
        %v374 = vld [vmem:[%s360 + $0x34] sm:$0xf]
        %v375 = vld [vmem:[%s360 + $0x38] sm:$0xf]
        %v376 = vld [vmem:[%s360 + $0x3c] sm:$0xf]
        %v383 = vunpack.c.l.b16 %v338
        %v384 = vunpack.c.l.b16 %v339
        %v385 = vunpack.c.l.b16 %v340
        %v386 = vunpack.c.l.b16 %v341
        %v387 = vunpack.c.l.b16 %v342
        %v388 = vunpack.c.l.b16 %v359
        %v389 = vpack.c.b16 %v384, %v383
        %v390 = vpack.c.b16 %v386, %v385
        %v391 = vpack.c.b16 %v388, %v387
        %vm392 = vsmask.f32 7424
        %v394 = vshrl.u32 %v389, 16
        %v396 = vshll.u32 %v389, 16
        %v398 = vrot.slane %v396, 1
        %v399 = vor.u32 %v394, %v398
        %v401 = vshll.u32 %v390, 16
        %v403 = vrot.slane %v401, 1
        %v404 = vsel %vm392, %v399, %v403
        %v405 = vshrl.u32 %v390, 16
        %v407 = vor.u32 %v405, %v403
        %v409 = vshll.u32 %v391, 16
        %v411 = vrot.slane %v409, 1
        %v412 = vsel %vm392, %v407, %v411
        %v413 = vshrl.u32 %v391, 16
        %v415 = vor.u32 %v413, %v411
        %v435 = vunpack.c.l.b16 %v361
        %v436 = vunpack.c.l.b16 %v362
        %v437 = vunpack.c.l.b16 %v363
        %v438 = vunpack.c.l.b16 %v364
        %v439 = vunpack.c.l.b16 %v365
        %v440 = vunpack.c.l.b16 %v366
        %v441 = vunpack.c.l.b16 %v367
        %v442 = vunpack.c.l.b16 %v368
        %v443 = vunpack.c.l.b16 %v369
        %v444 = vunpack.c.l.b16 %v370
        %v445 = vunpack.c.l.b16 %v371
        %v446 = vunpack.c.l.b16 %v372
        %v447 = vunpack.c.l.b16 %v373
        %v448 = vunpack.c.l.b16 %v374
        %v449 = vunpack.c.l.b16 %v375
        %v450 = vunpack.c.l.b16 %v376
        %v451 = vpack.c.b16 %v436, %v435
        %v452 = vpack.c.b16 %v438, %v437
        %v453 = vpack.c.b16 %v440, %v439
        %v454 = vpack.c.b16 %v442, %v441
        %v455 = vpack.c.b16 %v444, %v443
        %v456 = vpack.c.b16 %v446, %v445
        %v457 = vpack.c.b16 %v448, %v447
        %v458 = vpack.c.b16 %v450, %v449
        %467 = vmatprep.subr.bf16.mxu0 0
        %468 = vmatpush1.bf16.msra.mxu0 %v458
        %469 = vmatprep.subr.bf16.mxu0 0
        %470 = vmatpush1.bf16.msra.mxu0 %v457
        %471 = vmatprep.subr.bf16.mxu0 0
        %472 = vmatpush1.bf16.msra.mxu0 %v456
        %473 = vmatprep.subr.bf16.mxu0 0
        %474 = vmatpush1.bf16.msra.mxu0 %v455
        %475 = vmatprep.subr.bf16.mxu0 0
        %476 = vmatpush1.bf16.msra.mxu0 %v454
        %477 = vmatprep.subr.bf16.mxu0 0
        %478 = vmatpush1.bf16.msra.mxu0 %v453
        %479 = vmatprep.subr.bf16.mxu0 0
        %480 = vmatpush1.bf16.msra.mxu0 %v452
        %481 = vmatprep.subr.bf16.mxu0 0
        %482 = vmatpush1.bf16.msra.mxu0 %v451
        %483 = vmatprep.subr.bf16.mxu0 0
        %484 = vmatpush2.bf16.msra.mxu0 0
        %485 = vmatprep.subr.bf16.mxu0 0
        %486 = vmatpush2.bf16.msra.mxu0 0
        %487 = vmatprep.subr.bf16.mxu0 0
        %488 = vmatpush2.bf16.msra.mxu0 0
        %489 = vmatprep.subr.bf16.mxu0 0
        %490 = vmatpush2.bf16.msra.mxu0 0
        %491 = vmatprep.subr.bf16.mxu0 0
        %492 = vmatpush2.bf16.msra.mxu0 0
        %493 = vmatprep.subr.bf16.mxu0 0
        %494 = vmatpush2.bf16.msra.mxu0 0
        %495 = vmatprep.subr.bf16.mxu0 0
        %496 = vmatpush2.bf16.msra.mxu0 0
        %497 = vmatprep.subr.bf16.mxu0 0
        %498 = vmatpush2.bf16.msra.mxu0 0
        %499 = vmatprep.mubr.bf16.mxu0 0
        %500 = vmatmul.mubr.bf16.gmra.mxu0 %v404
        %v501 = vpop.f32.mrf.mxu0
        %v502 = vadd.f32 0.0, %v501
        %v503 = vpop.f32.mrf.mxu0
        %v504 = vpop.f32.mrf.mxu0
        %v505 = vadd.f32 0.0, %v504
        %v506 = vpop.f32.mrf.mxu0
        %507 = vmatprep.mubr.bf16.mxu0 0
        %508 = vmatmul.mubr.bf16.gmra.mxu0 %v412
        %v509 = vpop.f32.mrf.mxu0
        %v510 = vadd.f32 0.0, %v509
        %v511 = vpop.f32.mrf.mxu0
        %v512 = vpop.f32.mrf.mxu0
        %v513 = vadd.f32 0.0, %v512
        %v514 = vpop.f32.mrf.mxu0
        %515 = vmatprep.mubr.bf16.mxu0 0
        %516 = vmatmul.mubr.bf16.gmra.mxu0 %v415
        %v517 = vpop.f32.mrf.mxu0
        %v518 = vadd.f32 0.0, %v517
        %v519 = vpop.f32.mrf.mxu0
        %v520 = vpop.f32.mrf.mxu0
        %v521 = vpop.f32.mrf.mxu0
        %522 = vdwg.mxu0
        %v523 = vpack.c.b16 %v387, %v387
        %v543 = vunpack.c.l.b16 %v343
        %v544 = vunpack.c.l.b16 %v344
        %v545 = vunpack.c.l.b16 %v345
        %v546 = vunpack.c.l.b16 %v346
        %v547 = vunpack.c.l.b16 %v347
        %v548 = vunpack.c.l.b16 %v348
        %v549 = vunpack.c.l.b16 %v349
        %v550 = vunpack.c.l.b16 %v350
        %v551 = vunpack.c.l.b16 %v351
        %v552 = vunpack.c.l.b16 %v352
        %v553 = vunpack.c.l.b16 %v353
        %v554 = vunpack.c.l.b16 %v354
        %v555 = vunpack.c.l.b16 %v355
        %v556 = vunpack.c.l.b16 %v356
        %v557 = vunpack.c.l.b16 %v357
        %v558 = vunpack.c.l.b16 %v358
        %v559 = vpack.c.b16 %v544, %v543
        %v560 = vpack.c.b16 %v546, %v545
        %v561 = vpack.c.b16 %v548, %v547
        %v562 = vpack.c.b16 %v550, %v549
        %v563 = vpack.c.b16 %v552, %v551
        %v564 = vpack.c.b16 %v554, %v553
        %v565 = vpack.c.b16 %v556, %v555
        %v566 = vpack.c.b16 %v558, %v557
        %575 = vmatprep.subr.bf16.mxu0 0
        %576 = vmatpush1.bf16.msra.mxu0 %v566
        %577 = vmatprep.subr.bf16.mxu0 0
        %578 = vmatpush1.bf16.msra.mxu0 %v565
        %579 = vmatprep.subr.bf16.mxu0 0
        %580 = vmatpush1.bf16.msra.mxu0 %v564
        %581 = vmatprep.subr.bf16.mxu0 0
        %582 = vmatpush1.bf16.msra.mxu0 %v563
        %583 = vmatprep.subr.bf16.mxu0 0
        %584 = vmatpush1.bf16.msra.mxu0 %v562
        %585 = vmatprep.subr.bf16.mxu0 0
        %586 = vmatpush1.bf16.msra.mxu0 %v561
        %587 = vmatprep.subr.bf16.mxu0 0
        %588 = vmatpush1.bf16.msra.mxu0 %v560
        %589 = vmatprep.subr.bf16.mxu0 0
        %590 = vmatpush1.bf16.msra.mxu0 %v559
        %591 = vmatprep.subr.bf16.mxu0 0
        %592 = vmatpush2.bf16.msra.mxu0 0
        %593 = vmatprep.subr.bf16.mxu0 0
        %594 = vmatpush2.bf16.msra.mxu0 0
        %595 = vmatprep.subr.bf16.mxu0 0
        %596 = vmatpush2.bf16.msra.mxu0 0
        %597 = vmatprep.subr.bf16.mxu0 0
        %598 = vmatpush2.bf16.msra.mxu0 0
        %599 = vmatprep.subr.bf16.mxu0 0
        %600 = vmatpush2.bf16.msra.mxu0 0
        %601 = vmatprep.subr.bf16.mxu0 0
        %602 = vmatpush2.bf16.msra.mxu0 0
        %603 = vmatprep.subr.bf16.mxu0 0
        %604 = vmatpush2.bf16.msra.mxu0 0
        %605 = vmatprep.subr.bf16.mxu0 0
        %606 = vmatpush2.bf16.msra.mxu0 0
        %607 = vmatprep.mubr.bf16.mxu0 0
        %608 = vmatmul.mubr.bf16.gmra.mxu0 %v389
        %v609 = vpop.f32.mrf.mxu0
        %v610 = vadd.f32 %v502, %v609
        %v611 = vpop.f32.mrf.mxu0
        %v612 = vpop.f32.mrf.mxu0
        %v613 = vadd.f32 %v505, %v612
        %v614 = vpop.f32.mrf.mxu0
        %615 = vmatprep.mubr.bf16.mxu0 0
        %616 = vmatmul.mubr.bf16.gmra.mxu0 %v390
        %v617 = vpop.f32.mrf.mxu0
        %v618 = vadd.f32 %v510, %v617
        %v619 = vpop.f32.mrf.mxu0
        %v620 = vpop.f32.mrf.mxu0
        %v621 = vadd.f32 %v513, %v620
        %v622 = vpop.f32.mrf.mxu0
        %623 = vmatprep.mubr.bf16.mxu0 0
        %624 = vmatmul.mubr.bf16.gmra.mxu0 %v523
        %v625 = vpop.f32.mrf.mxu0
        %v626 = vadd.f32 %v518, %v625
        %v627 = vpop.f32.mrf.mxu0
        %v628 = vpop.f32.mrf.mxu0
        %v629 = vpop.f32.mrf.mxu0
        %630 = vdwg.mxu0
        %v631 = vld [vmem:[%s300] sm:$0xe]
        %s632 = scalar_lea.vmem [#allocation2], 128
        %v633 = vld [vmem:[%s632] sm:$0xf]
        %v634 = vld [vmem:[%s632 + $0x4] sm:$0xf]
        %v635 = vld [vmem:[%s632 + $0x8] sm:$0xf]
        %v636 = vld [vmem:[%s632 + $0xc] sm:$0xf]
        %v637 = vld [vmem:[%s632 + $0x10] sm:$0xf]
        %v638 = vld [vmem:[%s632 + $0x14] sm:$0xf]
        %v639 = vld [vmem:[%s632 + $0x18] sm:$0xf]
        %v640 = vld [vmem:[%s632 + $0x1c] sm:$0xf]
        %v641 = vld [vmem:[%s632 + $0x20] sm:$0xf]
        %v642 = vld [vmem:[%s632 + $0x24] sm:$0xf]
        %v643 = vld [vmem:[%s632 + $0x28] sm:$0xf]
        %v644 = vld [vmem:[%s632 + $0x2c] sm:$0xf]
        %v645 = vld [vmem:[%s632 + $0x30] sm:$0xf]
        %v646 = vld [vmem:[%s632 + $0x34] sm:$0xf]
        %v647 = vld [vmem:[%s632 + $0x38] sm:$0xf]
        %v648 = vld [vmem:[%s632 + $0x3c] sm:$0xf]
        %v650 = vunpack.c.l.b16 %v631
        %v651 = vpack.c.b16 %v384, %v650
        %vm652 = vcmask 1046528
        %v653 = vrot.slane %v651, 1
        %v654 = vrot.slane %v390, 1
        %v655 = vsel %vm652, %v653, %v654
        %v656 = vrot.slane %v391, 1
        %v657 = vsel %vm652, %v654, %v656
        %v677 = vunpack.c.l.b16 %v633
        %v678 = vunpack.c.l.b16 %v634
        %v679 = vunpack.c.l.b16 %v635
        %v680 = vunpack.c.l.b16 %v636
        %v681 = vunpack.c.l.b16 %v637
        %v682 = vunpack.c.l.b16 %v638
        %v683 = vunpack.c.l.b16 %v639
        %v684 = vunpack.c.l.b16 %v640
        %v685 = vunpack.c.l.b16 %v641
        %v686 = vunpack.c.l.b16 %v642
        %v687 = vunpack.c.l.b16 %v643
        %v688 = vunpack.c.l.b16 %v644
        %v689 = vunpack.c.l.b16 %v645
        %v690 = vunpack.c.l.b16 %v646
        %v691 = vunpack.c.l.b16 %v647
        %v692 = vunpack.c.l.b16 %v648
        %v693 = vpack.c.b16 %v678, %v677
        %v694 = vpack.c.b16 %v680, %v679
        %v695 = vpack.c.b16 %v682, %v681
        %v696 = vpack.c.b16 %v684, %v683
        %v697 = vpack.c.b16 %v686, %v685
        %v698 = vpack.c.b16 %v688, %v687
        %v699 = vpack.c.b16 %v690, %v689
        %v700 = vpack.c.b16 %v692, %v691
        %709 = vmatprep.subr.bf16.mxu0 0
        %710 = vmatpush1.bf16.msra.mxu0 %v700
        %711 = vmatprep.subr.bf16.mxu0 0
        %712 = vmatpush1.bf16.msra.mxu0 %v699
        %713 = vmatprep.subr.bf16.mxu0 0
        %714 = vmatpush1.bf16.msra.mxu0 %v698
        %715 = vmatprep.subr.bf16.mxu0 0
        %716 = vmatpush1.bf16.msra.mxu0 %v697
        %717 = vmatprep.subr.bf16.mxu0 0
        %718 = vmatpush1.bf16.msra.mxu0 %v696
        %719 = vmatprep.subr.bf16.mxu0 0
        %720 = vmatpush1.bf16.msra.mxu0 %v695
        %721 = vmatprep.subr.bf16.mxu0 0
        %722 = vmatpush1.bf16.msra.mxu0 %v694
        %723 = vmatprep.subr.bf16.mxu0 0
        %724 = vmatpush1.bf16.msra.mxu0 %v693
        %725 = vmatprep.subr.bf16.mxu0 0
        %726 = vmatpush2.bf16.msra.mxu0 0
        %727 = vmatprep.subr.bf16.mxu0 0
        %728 = vmatpush2.bf16.msra.mxu0 0
        %729 = vmatprep.subr.bf16.mxu0 0
        %730 = vmatpush2.bf16.msra.mxu0 0
        %731 = vmatprep.subr.bf16.mxu0 0
        %732 = vmatpush2.bf16.msra.mxu0 0
        %733 = vmatprep.subr.bf16.mxu0 0
        %734 = vmatpush2.bf16.msra.mxu0 0
        %735 = vmatprep.subr.bf16.mxu0 0
        %736 = vmatpush2.bf16.msra.mxu0 0
        %737 = vmatprep.subr.bf16.mxu0 0
        %738 = vmatpush2.bf16.msra.mxu0 0
        %739 = vmatprep.subr.bf16.mxu0 0
        %740 = vmatpush2.bf16.msra.mxu0 0
        %741 = vmatprep.mubr.bf16.mxu0 0
        %742 = vmatmul.mubr.bf16.gmra.mxu0 %v655
        %v743 = vpop.f32.mrf.mxu0
        %v744 = vadd.f32 0.0, %v743
        %v745 = vpop.f32.mrf.mxu0
        %v746 = vpop.f32.mrf.mxu0
        %v747 = vadd.f32 0.0, %v746
        %v748 = vpop.f32.mrf.mxu0
        %749 = vmatprep.mubr.bf16.mxu0 0
        %750 = vmatmul.mubr.bf16.gmra.mxu0 %v657
        %v751 = vpop.f32.mrf.mxu0
        %v752 = vadd.f32 0.0, %v751
        %v753 = vpop.f32.mrf.mxu0
        %v754 = vpop.f32.mrf.mxu0
        %v755 = vadd.f32 0.0, %v754
        %v756 = vpop.f32.mrf.mxu0
        %757 = vmatprep.mubr.bf16.mxu0 0
        %758 = vmatmul.mubr.bf16.gmra.mxu0 %v656
        %v759 = vpop.f32.mrf.mxu0
        %v760 = vadd.f32 0.0, %v759
        %v761 = vpop.f32.mrf.mxu0
        %v762 = vpop.f32.mrf.mxu0
        %v763 = vpop.f32.mrf.mxu0
        %764 = vdwg.mxu0
        %v765 = vadd.f32 %v610, %v744
        %v766 = vadd.f32 %v613, %v747
        %v767 = vadd.f32 %v618, %v752
        %v768 = vadd.f32 %v621, %v755
        %v769 = vadd.f32 %v626, %v760
        %v770 = vld [vmem:[%s300 + $0x4] sm:$0xe]
        %v771 = vld [vmem:[%s300 + $0x8] sm:$0xf]
        %v772 = vld [vmem:[%s300 + $0xc] sm:$0xf]
        %v773 = vld [vmem:[%s300 + $0x10] sm:$0xf]
        %v774 = vld [vmem:[%s300 + $0x14] sm:$0xf]
        %v775 = vld [vmem:[%s300 + $0x18] sm:$0x1]
        %s776 = scalar_lea.vmem [#allocation2], 192
        %v777 = vld [vmem:[%s776] sm:$0xf]
        %v778 = vld [vmem:[%s776 + $0x4] sm:$0xf]
        %v779 = vld [vmem:[%s776 + $0x8] sm:$0xf]
        %v780 = vld [vmem:[%s776 + $0xc] sm:$0xf]
        %v781 = vld [vmem:[%s776 + $0x10] sm:$0xf]
        %v782 = vld [vmem:[%s776 + $0x14] sm:$0xf]
        %v783 = vld [vmem:[%s776 + $0x18] sm:$0xf]
        %v784 = vld [vmem:[%s776 + $0x1c] sm:$0xf]
        %v785 = vld [vmem:[%s776 + $0x20] sm:$0xf]
        %v786 = vld [vmem:[%s776 + $0x24] sm:$0xf]
        %v787 = vld [vmem:[%s776 + $0x28] sm:$0xf]
        %v788 = vld [vmem:[%s776 + $0x2c] sm:$0xf]
        %v789 = vld [vmem:[%s776 + $0x30] sm:$0xf]
        %v790 = vld [vmem:[%s776 + $0x34] sm:$0xf]
        %v791 = vld [vmem:[%s776 + $0x38] sm:$0xf]
        %v792 = vld [vmem:[%s776 + $0x3c] sm:$0xf]
        %v799 = vunpack.c.l.b16 %v770
        %v800 = vunpack.c.l.b16 %v771
        %v801 = vunpack.c.l.b16 %v772
        %v802 = vunpack.c.l.b16 %v773
        %v803 = vunpack.c.l.b16 %v774
        %v804 = vunpack.c.l.b16 %v775
        %v805 = vpack.c.b16 %v800, %v799
        %v806 = vpack.c.b16 %v802, %v801
        %v807 = vpack.c.b16 %v804, %v803
        %v808 = vrot.slane %v805, 1
        %v809 = vrot.slane %v806, 1
        %v810 = vsel %vm652, %v808, %v809
        %v811 = vrot.slane %v807, 1
        %v812 = vsel %vm652, %v809, %v811
        %v832 = vunpack.c.l.b16 %v777
        %v833 = vunpack.c.l.b16 %v778
        %v834 = vunpack.c.l.b16 %v779
        %v835 = vunpack.c.l.b16 %v780
        %v836 = vunpack.c.l.b16 %v781
        %v837 = vunpack.c.l.b16 %v782
        %v838 = vunpack.c.l.b16 %v783
        %v839 = vunpack.c.l.b16 %v784
        %v840 = vunpack.c.l.b16 %v785
        %v841 = vunpack.c.l.b16 %v786
        %v842 = vunpack.c.l.b16 %v787
        %v843 = vunpack.c.l.b16 %v788
        %v844 = vunpack.c.l.b16 %v789
        %v845 = vunpack.c.l.b16 %v790
        %v846 = vunpack.c.l.b16 %v791
        %v847 = vunpack.c.l.b16 %v792
        %v848 = vpack.c.b16 %v833, %v832
        %v849 = vpack.c.b16 %v835, %v834
        %v850 = vpack.c.b16 %v837, %v836
        %v851 = vpack.c.b16 %v839, %v838
        %v852 = vpack.c.b16 %v841, %v840
        %v853 = vpack.c.b16 %v843, %v842
        %v854 = vpack.c.b16 %v845, %v844
        %v855 = vpack.c.b16 %v847, %v846
        %864 = vmatprep.subr.bf16.mxu0 0
        %865 = vmatpush1.bf16.msra.mxu0 %v855
        %866 = vmatprep.subr.bf16.mxu0 0
        %867 = vmatpush1.bf16.msra.mxu0 %v854
        %868 = vmatprep.subr.bf16.mxu0 0
        %869 = vmatpush1.bf16.msra.mxu0 %v853
        %870 = vmatprep.subr.bf16.mxu0 0
        %871 = vmatpush1.bf16.msra.mxu0 %v852
        %872 = vmatprep.subr.bf16.mxu0 0
        %873 = vmatpush1.bf16.msra.mxu0 %v851
        %874 = vmatprep.subr.bf16.mxu0 0
        %875 = vmatpush1.bf16.msra.mxu0 %v850
        %876 = vmatprep.subr.bf16.mxu0 0
        %877 = vmatpush1.bf16.msra.mxu0 %v849
        %878 = vmatprep.subr.bf16.mxu0 0
        %879 = vmatpush1.bf16.msra.mxu0 %v848
        %880 = vmatprep.subr.bf16.mxu0 0
        %881 = vmatpush2.bf16.msra.mxu0 0
        %882 = vmatprep.subr.bf16.mxu0 0
        %883 = vmatpush2.bf16.msra.mxu0 0
        %884 = vmatprep.subr.bf16.mxu0 0
        %885 = vmatpush2.bf16.msra.mxu0 0
        %886 = vmatprep.subr.bf16.mxu0 0
        %887 = vmatpush2.bf16.msra.mxu0 0
        %888 = vmatprep.subr.bf16.mxu0 0
        %889 = vmatpush2.bf16.msra.mxu0 0
        %890 = vmatprep.subr.bf16.mxu0 0
        %891 = vmatpush2.bf16.msra.mxu0 0
        %892 = vmatprep.subr.bf16.mxu0 0
        %893 = vmatpush2.bf16.msra.mxu0 0
        %894 = vmatprep.subr.bf16.mxu0 0
        %895 = vmatpush2.bf16.msra.mxu0 0
        %896 = vmatprep.mubr.bf16.mxu0 0
        %897 = vmatmul.mubr.bf16.gmra.mxu0 %v810
        %v898 = vpop.f32.mrf.mxu0
        %v899 = vadd.f32 0.0, %v898
        %v900 = vpop.f32.mrf.mxu0
        %v901 = vpop.f32.mrf.mxu0
        %v902 = vadd.f32 0.0, %v901
        %v903 = vpop.f32.mrf.mxu0
        %904 = vmatprep.mubr.bf16.mxu0 0
        %905 = vmatmul.mubr.bf16.gmra.mxu0 %v812
        %v906 = vpop.f32.mrf.mxu0
        %v907 = vadd.f32 0.0, %v906
        %v908 = vpop.f32.mrf.mxu0
        %v909 = vpop.f32.mrf.mxu0
        %v910 = vadd.f32 0.0, %v909
        %v911 = vpop.f32.mrf.mxu0
        %912 = vmatprep.mubr.bf16.mxu0 0
        %913 = vmatmul.mubr.bf16.gmra.mxu0 %v811
        %v914 = vpop.f32.mrf.mxu0
        %v915 = vadd.f32 0.0, %v914
        %v916 = vpop.f32.mrf.mxu0
        %v917 = vpop.f32.mrf.mxu0
        %v918 = vpop.f32.mrf.mxu0
        %919 = vdwg.mxu0
        %v920 = vadd.f32 %v765, %v899
        %v921 = vadd.f32 %v766, %v902
        %v922 = vadd.f32 %v767, %v907
        %v923 = vadd.f32 %v768, %v910
        %v924 = vadd.f32 %v769, %v915
        %v925 = vld [vmem:[%s300 + $0x18] sm:$0x3]
        %s926 = scalar_lea.vmem [#allocation2], 256
        %v927 = vld [vmem:[%s926] sm:$0xf]
        %v928 = vld [vmem:[%s926 + $0x4] sm:$0xf]
        %v929 = vld [vmem:[%s926 + $0x8] sm:$0xf]
        %v930 = vld [vmem:[%s926 + $0xc] sm:$0xf]
        %v931 = vld [vmem:[%s926 + $0x10] sm:$0xf]
        %v932 = vld [vmem:[%s926 + $0x14] sm:$0xf]
        %v933 = vld [vmem:[%s926 + $0x18] sm:$0xf]
        %v934 = vld [vmem:[%s926 + $0x1c] sm:$0xf]
        %v935 = vld [vmem:[%s926 + $0x20] sm:$0xf]
        %v936 = vld [vmem:[%s926 + $0x24] sm:$0xf]
        %v937 = vld [vmem:[%s926 + $0x28] sm:$0xf]
        %v938 = vld [vmem:[%s926 + $0x2c] sm:$0xf]
        %v939 = vld [vmem:[%s926 + $0x30] sm:$0xf]
        %v940 = vld [vmem:[%s926 + $0x34] sm:$0xf]
        %v941 = vld [vmem:[%s926 + $0x38] sm:$0xf]
        %v942 = vld [vmem:[%s926 + $0x3c] sm:$0xf]
        %v944 = vunpack.c.l.b16 %v925
        %v945 = vpack.c.b16 %v944, %v803
        %vm946 = vsmask.f32 6400
        %v948 = vshrl.u32 %v805, 16
        %v950 = vrot.slane %v948, 1
        %v951 = vshll.u32 %v805, 16
        %v953 = vrot.slane %v951, 2
        %v954 = vor.u32 %v950, %v953
        %v956 = vshrl.u32 %v806, 16
        %v958 = vrot.slane %v956, 1
        %v959 = vshll.u32 %v806, 16
        %v961 = vrot.slane %v959, 2
        %v962 = vor.u32 %v958, %v961
        %v963 = vsel %vm946, %v954, %v962
        %v965 = vshrl.u32 %v945, 16
        %v967 = vrot.slane %v965, 1
        %v968 = vshll.u32 %v945, 16
        %v970 = vrot.slane %v968, 2
        %v971 = vor.u32 %v967, %v970
        %v972 = vsel %vm946, %v962, %v971
        %v992 = vunpack.c.l.b16 %v927
        %v993 = vunpack.c.l.b16 %v928
        %v994 = vunpack.c.l.b16 %v929
        %v995 = vunpack.c.l.b16 %v930
        %v996 = vunpack.c.l.b16 %v931
        %v997 = vunpack.c.l.b16 %v932
        %v998 = vunpack.c.l.b16 %v933
        %v999 = vunpack.c.l.b16 %v934
        %v1000 = vunpack.c.l.b16 %v935
        %v1001 = vunpack.c.l.b16 %v936
        %v1002 = vunpack.c.l.b16 %v937
        %v1003 = vunpack.c.l.b16 %v938
        %v1004 = vunpack.c.l.b16 %v939
        %v1005 = vunpack.c.l.b16 %v940
        %v1006 = vunpack.c.l.b16 %v941
        %v1007 = vunpack.c.l.b16 %v942
        %v1008 = vpack.c.b16 %v993, %v992
        %v1009 = vpack.c.b16 %v995, %v994
        %v1010 = vpack.c.b16 %v997, %v996
        %v1011 = vpack.c.b16 %v999, %v998
        %v1012 = vpack.c.b16 %v1001, %v1000
        %v1013 = vpack.c.b16 %v1003, %v1002
        %v1014 = vpack.c.b16 %v1005, %v1004
        %v1015 = vpack.c.b16 %v1007, %v1006
        %1024 = vmatprep.subr.bf16.mxu0 0
        %1025 = vmatpush1.bf16.msra.mxu0 %v1015
        %1026 = vmatprep.subr.bf16.mxu0 0
        %1027 = vmatpush1.bf16.msra.mxu0 %v1014
        %1028 = vmatprep.subr.bf16.mxu0 0
        %1029 = vmatpush1.bf16.msra.mxu0 %v1013
        %1030 = vmatprep.subr.bf16.mxu0 0
        %1031 = vmatpush1.bf16.msra.mxu0 %v1012
        %1032 = vmatprep.subr.bf16.mxu0 0
        %1033 = vmatpush1.bf16.msra.mxu0 %v1011
        %1034 = vmatprep.subr.bf16.mxu0 0
        %1035 = vmatpush1.bf16.msra.mxu0 %v1010
        %1036 = vmatprep.subr.bf16.mxu0 0
        %1037 = vmatpush1.bf16.msra.mxu0 %v1009
        %1038 = vmatprep.subr.bf16.mxu0 0
        %1039 = vmatpush1.bf16.msra.mxu0 %v1008
        %1040 = vmatprep.subr.bf16.mxu0 0
        %1041 = vmatpush2.bf16.msra.mxu0 0
        %1042 = vmatprep.subr.bf16.mxu0 0
        %1043 = vmatpush2.bf16.msra.mxu0 0
        %1044 = vmatprep.subr.bf16.mxu0 0
        %1045 = vmatpush2.bf16.msra.mxu0 0
        %1046 = vmatprep.subr.bf16.mxu0 0
        %1047 = vmatpush2.bf16.msra.mxu0 0
        %1048 = vmatprep.subr.bf16.mxu0 0
        %1049 = vmatpush2.bf16.msra.mxu0 0
        %1050 = vmatprep.subr.bf16.mxu0 0
        %1051 = vmatpush2.bf16.msra.mxu0 0
        %1052 = vmatprep.subr.bf16.mxu0 0
        %1053 = vmatpush2.bf16.msra.mxu0 0
        %1054 = vmatprep.subr.bf16.mxu0 0
        %1055 = vmatpush2.bf16.msra.mxu0 0
        %1056 = vmatprep.mubr.bf16.mxu0 0
        %1057 = vmatmul.mubr.bf16.gmra.mxu0 %v963
        %v1058 = vpop.f32.mrf.mxu0
        %v1059 = vadd.f32 0.0, %v1058
        %v1060 = vpop.f32.mrf.mxu0
        %v1061 = vpop.f32.mrf.mxu0
        %v1062 = vadd.f32 0.0, %v1061
        %v1063 = vpop.f32.mrf.mxu0
        %1064 = vmatprep.mubr.bf16.mxu0 0
        %1065 = vmatmul.mubr.bf16.gmra.mxu0 %v972
        %v1066 = vpop.f32.mrf.mxu0
        %v1067 = vadd.f32 0.0, %v1066
        %v1068 = vpop.f32.mrf.mxu0
        %v1069 = vpop.f32.mrf.mxu0
        %v1070 = vadd.f32 0.0, %v1069
        %v1071 = vpop.f32.mrf.mxu0
        %1072 = vmatprep.mubr.bf16.mxu0 0
        %1073 = vmatmul.mubr.bf16.gmra.mxu0 %v971
        %v1074 = vpop.f32.mrf.mxu0
        %v1075 = vadd.f32 0.0, %v1074
        %v1076 = vpop.f32.mrf.mxu0
        %v1077 = vpop.f32.mrf.mxu0
        %v1078 = vpop.f32.mrf.mxu0
        %1079 = vdwg.mxu0
        %v1080 = vadd.f32 %v920, %v1059
        %v1081 = vadd.f32 %v921, %v1062
        %v1082 = vadd.f32 %v922, %v1067
        %v1083 = vadd.f32 %v923, %v1070
        %v1084 = vadd.f32 %v924, %v1075
        %v1085 = vld [vmem:[%s300 + $0x4] sm:$0xc]
        %s1086 = scalar_lea.vmem [#allocation2], 320
        %v1087 = vld [vmem:[%s1086] sm:$0xf]
        %v1088 = vld [vmem:[%s1086 + $0x4] sm:$0xf]
        %v1089 = vld [vmem:[%s1086 + $0x8] sm:$0xf]
        %v1090 = vld [vmem:[%s1086 + $0xc] sm:$0xf]
        %v1091 = vld [vmem:[%s1086 + $0x10] sm:$0xf]
        %v1092 = vld [vmem:[%s1086 + $0x14] sm:$0xf]
        %v1093 = vld [vmem:[%s1086 + $0x18] sm:$0xf]
        %v1094 = vld [vmem:[%s1086 + $0x1c] sm:$0xf]
        %v1095 = vld [vmem:[%s1086 + $0x20] sm:$0xf]
        %v1096 = vld [vmem:[%s1086 + $0x24] sm:$0xf]
        %v1097 = vld [vmem:[%s1086 + $0x28] sm:$0xf]
        %v1098 = vld [vmem:[%s1086 + $0x2c] sm:$0xf]
        %v1099 = vld [vmem:[%s1086 + $0x30] sm:$0xf]
        %v1100 = vld [vmem:[%s1086 + $0x34] sm:$0xf]
        %v1101 = vld [vmem:[%s1086 + $0x38] sm:$0xf]
        %v1102 = vld [vmem:[%s1086 + $0x3c] sm:$0xf]
        %v1104 = vunpack.c.l.b16 %v1085
        %v1105 = vpack.c.b16 %v800, %v1104
        %vm1106 = vcmask 1045504
        %v1107 = vrot.slane %v1105, 2
        %v1108 = vrot.slane %v806, 2
        %v1109 = vsel %vm1106, %v1107, %v1108
        %v1110 = vrot.slane %v945, 2
        %v1111 = vsel %vm1106, %v1108, %v1110
        %v1131 = vunpack.c.l.b16 %v1087
        %v1132 = vunpack.c.l.b16 %v1088
        %v1133 = vunpack.c.l.b16 %v1089
        %v1134 = vunpack.c.l.b16 %v1090
        %v1135 = vunpack.c.l.b16 %v1091
        %v1136 = vunpack.c.l.b16 %v1092
        %v1137 = vunpack.c.l.b16 %v1093
        %v1138 = vunpack.c.l.b16 %v1094
        %v1139 = vunpack.c.l.b16 %v1095
        %v1140 = vunpack.c.l.b16 %v1096
        %v1141 = vunpack.c.l.b16 %v1097
        %v1142 = vunpack.c.l.b16 %v1098
        %v1143 = vunpack.c.l.b16 %v1099
        %v1144 = vunpack.c.l.b16 %v1100
        %v1145 = vunpack.c.l.b16 %v1101
        %v1146 = vunpack.c.l.b16 %v1102
        %v1147 = vpack.c.b16 %v1132, %v1131
        %v1148 = vpack.c.b16 %v1134, %v1133
        %v1149 = vpack.c.b16 %v1136, %v1135
        %v1150 = vpack.c.b16 %v1138, %v1137
        %v1151 = vpack.c.b16 %v1140, %v1139
        %v1152 = vpack.c.b16 %v1142, %v1141
        %v1153 = vpack.c.b16 %v1144, %v1143
        %v1154 = vpack.c.b16 %v1146, %v1145
        %1163 = vmatprep.subr.bf16.mxu0 0
        %1164 = vmatpush1.bf16.msra.mxu0 %v1154
        %1165 = vmatprep.subr.bf16.mxu0 0
        %1166 = vmatpush1.bf16.msra.mxu0 %v1153
        %1167 = vmatprep.subr.bf16.mxu0 0
        %1168 = vmatpush1.bf16.msra.mxu0 %v1152
        %1169 = vmatprep.subr.bf16.mxu0 0
        %1170 = vmatpush1.bf16.msra.mxu0 %v1151
        %1171 = vmatprep.subr.bf16.mxu0 0
        %1172 = vmatpush1.bf16.msra.mxu0 %v1150
        %1173 = vmatprep.subr.bf16.mxu0 0
        %1174 = vmatpush1.bf16.msra.mxu0 %v1149
        %1175 = vmatprep.subr.bf16.mxu0 0
        %1176 = vmatpush1.bf16.msra.mxu0 %v1148
        %1177 = vmatprep.subr.bf16.mxu0 0
        %1178 = vmatpush1.bf16.msra.mxu0 %v1147
        %1179 = vmatprep.subr.bf16.mxu0 0
        %1180 = vmatpush2.bf16.msra.mxu0 0
        %1181 = vmatprep.subr.bf16.mxu0 0
        %1182 = vmatpush2.bf16.msra.mxu0 0
        %1183 = vmatprep.subr.bf16.mxu0 0
        %1184 = vmatpush2.bf16.msra.mxu0 0
        %1185 = vmatprep.subr.bf16.mxu0 0
        %1186 = vmatpush2.bf16.msra.mxu0 0
        %1187 = vmatprep.subr.bf16.mxu0 0
        %1188 = vmatpush2.bf16.msra.mxu0 0
        %1189 = vmatprep.subr.bf16.mxu0 0
        %1190 = vmatpush2.bf16.msra.mxu0 0
        %1191 = vmatprep.subr.bf16.mxu0 0
        %1192 = vmatpush2.bf16.msra.mxu0 0
        %1193 = vmatprep.subr.bf16.mxu0 0
        %1194 = vmatpush2.bf16.msra.mxu0 0
        %1195 = vmatprep.mubr.bf16.mxu0 0
        %1196 = vmatmul.mubr.bf16.gmra.mxu0 %v1109
        %v1197 = vpop.f32.mrf.mxu0
        %v1198 = vadd.f32 0.0, %v1197
        %v1199 = vpop.f32.mrf.mxu0
        %v1200 = vpop.f32.mrf.mxu0
        %v1201 = vadd.f32 0.0, %v1200
        %v1202 = vpop.f32.mrf.mxu0
        %1203 = vmatprep.mubr.bf16.mxu0 0
        %1204 = vmatmul.mubr.bf16.gmra.mxu0 %v1111
        %v1205 = vpop.f32.mrf.mxu0
        %v1206 = vadd.f32 0.0, %v1205
        %v1207 = vpop.f32.mrf.mxu0
        %v1208 = vpop.f32.mrf.mxu0
        %v1209 = vadd.f32 0.0, %v1208
        %v1210 = vpop.f32.mrf.mxu0
        %1211 = vmatprep.mubr.bf16.mxu0 0
        %1212 = vmatmul.mubr.bf16.gmra.mxu0 %v1110
        %v1213 = vpop.f32.mrf.mxu0
        %v1214 = vadd.f32 0.0, %v1213
        %v1215 = vpop.f32.mrf.mxu0
        %v1216 = vpop.f32.mrf.mxu0
        %v1217 = vpop.f32.mrf.mxu0
        %1218 = vdwg.mxu0
        %v1219 = vadd.f32 %v1080, %v1198
        %v1220 = vadd.f32 %v1081, %v1201
        %v1221 = vadd.f32 %v1082, %v1206
        %v1222 = vadd.f32 %v1083, %v1209
        %v1223 = vadd.f32 %v1084, %v1214
        %v1224 = vld [vmem:[%s300 + $0x8] sm:$0xc]
        %v1225 = vld [vmem:[%s300 + $0xc] sm:$0xf]
        %v1226 = vld [vmem:[%s300 + $0x10] sm:$0xf]
        %v1227 = vld [vmem:[%s300 + $0x14] sm:$0xf]
        %v1228 = vld [vmem:[%s300 + $0x18] sm:$0xf]
        %v1229 = vld [vmem:[%s300 + $0x1c] sm:$0x3]
        %s1230 = scalar_lea.vmem [#allocation2], 384
        %v1231 = vld [vmem:[%s1230] sm:$0xf]
        %v1232 = vld [vmem:[%s1230 + $0x4] sm:$0xf]
        %v1233 = vld [vmem:[%s1230 + $0x8] sm:$0xf]
        %v1234 = vld [vmem:[%s1230 + $0xc] sm:$0xf]
        %v1235 = vld [vmem:[%s1230 + $0x10] sm:$0xf]
        %v1236 = vld [vmem:[%s1230 + $0x14] sm:$0xf]
        %v1237 = vld [vmem:[%s1230 + $0x18] sm:$0xf]
        %v1238 = vld [vmem:[%s1230 + $0x1c] sm:$0xf]
        %v1239 = vld [vmem:[%s1230 + $0x20] sm:$0xf]
        %v1240 = vld [vmem:[%s1230 + $0x24] sm:$0xf]
        %v1241 = vld [vmem:[%s1230 + $0x28] sm:$0xf]
        %v1242 = vld [vmem:[%s1230 + $0x2c] sm:$0xf]
        %v1243 = vld [vmem:[%s1230 + $0x30] sm:$0xf]
        %v1244 = vld [vmem:[%s1230 + $0x34] sm:$0xf]
        %v1245 = vld [vmem:[%s1230 + $0x38] sm:$0xf]
        %v1246 = vld [vmem:[%s1230 + $0x3c] sm:$0xf]
        %v1253 = vunpack.c.l.b16 %v1224
        %v1254 = vunpack.c.l.b16 %v1225
        %v1255 = vunpack.c.l.b16 %v1226
        %v1256 = vunpack.c.l.b16 %v1227
        %v1257 = vunpack.c.l.b16 %v1228
        %v1258 = vunpack.c.l.b16 %v1229
        %v1259 = vpack.c.b16 %v1254, %v1253
        %v1260 = vpack.c.b16 %v1256, %v1255
        %v1261 = vpack.c.b16 %v1258, %v1257
        %v1262 = vrot.slane %v1259, 2
        %v1263 = vrot.slane %v1260, 2
        %v1264 = vsel %vm1106, %v1262, %v1263
        %v1265 = vrot.slane %v1261, 2
        %v1266 = vsel %vm1106, %v1263, %v1265
        %v1286 = vunpack.c.l.b16 %v1231
        %v1287 = vunpack.c.l.b16 %v1232
        %v1288 = vunpack.c.l.b16 %v1233
        %v1289 = vunpack.c.l.b16 %v1234
        %v1290 = vunpack.c.l.b16 %v1235
        %v1291 = vunpack.c.l.b16 %v1236
        %v1292 = vunpack.c.l.b16 %v1237
        %v1293 = vunpack.c.l.b16 %v1238
        %v1294 = vunpack.c.l.b16 %v1239
        %v1295 = vunpack.c.l.b16 %v1240
        %v1296 = vunpack.c.l.b16 %v1241
        %v1297 = vunpack.c.l.b16 %v1242
        %v1298 = vunpack.c.l.b16 %v1243
        %v1299 = vunpack.c.l.b16 %v1244
        %v1300 = vunpack.c.l.b16 %v1245
        %v1301 = vunpack.c.l.b16 %v1246
        %v1302 = vpack.c.b16 %v1287, %v1286
        %v1303 = vpack.c.b16 %v1289, %v1288
        %v1304 = vpack.c.b16 %v1291, %v1290
        %v1305 = vpack.c.b16 %v1293, %v1292
        %v1306 = vpack.c.b16 %v1295, %v1294
        %v1307 = vpack.c.b16 %v1297, %v1296
        %v1308 = vpack.c.b16 %v1299, %v1298
        %v1309 = vpack.c.b16 %v1301, %v1300
        %1318 = vmatprep.subr.bf16.mxu0 0
        %1319 = vmatpush1.bf16.msra.mxu0 %v1309
        %1320 = vmatprep.subr.bf16.mxu0 0
        %1321 = vmatpush1.bf16.msra.mxu0 %v1308
        %1322 = vmatprep.subr.bf16.mxu0 0
        %1323 = vmatpush1.bf16.msra.mxu0 %v1307
        %1324 = vmatprep.subr.bf16.mxu0 0
        %1325 = vmatpush1.bf16.msra.mxu0 %v1306
        %1326 = vmatprep.subr.bf16.mxu0 0
        %1327 = vmatpush1.bf16.msra.mxu0 %v1305
        %1328 = vmatprep.subr.bf16.mxu0 0
        %1329 = vmatpush1.bf16.msra.mxu0 %v1304
        %1330 = vmatprep.subr.bf16.mxu0 0
        %1331 = vmatpush1.bf16.msra.mxu0 %v1303
        %1332 = vmatprep.subr.bf16.mxu0 0
        %1333 = vmatpush1.bf16.msra.mxu0 %v1302
        %1334 = vmatprep.subr.bf16.mxu0 0
        %1335 = vmatpush2.bf16.msra.mxu0 0
        %1336 = vmatprep.subr.bf16.mxu0 0
        %1337 = vmatpush2.bf16.msra.mxu0 0
        %1338 = vmatprep.subr.bf16.mxu0 0
        %1339 = vmatpush2.bf16.msra.mxu0 0
        %1340 = vmatprep.subr.bf16.mxu0 0
        %1341 = vmatpush2.bf16.msra.mxu0 0
        %1342 = vmatprep.subr.bf16.mxu0 0
        %1343 = vmatpush2.bf16.msra.mxu0 0
        %1344 = vmatprep.subr.bf16.mxu0 0
        %1345 = vmatpush2.bf16.msra.mxu0 0
        %1346 = vmatprep.subr.bf16.mxu0 0
        %1347 = vmatpush2.bf16.msra.mxu0 0
        %1348 = vmatprep.subr.bf16.mxu0 0
        %1349 = vmatpush2.bf16.msra.mxu0 0
        %1350 = vmatprep.mubr.bf16.mxu0 0
        %1351 = vmatmul.mubr.bf16.gmra.mxu0 %v1264
        %v1352 = vpop.f32.mrf.mxu0
        %v1353 = vadd.f32 0.0, %v1352
        %v1354 = vpop.f32.mrf.mxu0
        %v1355 = vpop.f32.mrf.mxu0
        %v1356 = vadd.f32 0.0, %v1355
        %v1357 = vpop.f32.mrf.mxu0
        %1358 = vmatprep.mubr.bf16.mxu0 0
        %1359 = vmatmul.mubr.bf16.gmra.mxu0 %v1266
        %v1360 = vpop.f32.mrf.mxu0
        %v1361 = vadd.f32 0.0, %v1360
        %v1362 = vpop.f32.mrf.mxu0
        %v1363 = vpop.f32.mrf.mxu0
        %v1364 = vadd.f32 0.0, %v1363
        %v1365 = vpop.f32.mrf.mxu0
        %1366 = vmatprep.mubr.bf16.mxu0 0
        %1367 = vmatmul.mubr.bf16.gmra.mxu0 %v1265
        %v1368 = vpop.f32.mrf.mxu0
        %v1369 = vadd.f32 0.0, %v1368
        %v1370 = vpop.f32.mrf.mxu0
        %v1371 = vpop.f32.mrf.mxu0
        %v1372 = vpop.f32.mrf.mxu0
        %1373 = vdwg.mxu0
        %v1374 = vadd.f32 %v1219, %v1353
        %v1375 = vadd.f32 %v1220, %v1356
        %v1376 = vadd.f32 %v1221, %v1361
        %v1377 = vadd.f32 %v1222, %v1364
        %v1378 = vadd.f32 %v1223, %v1369
        %v1379 = vld [vmem:[%s300 + $0x1c] sm:$0x7]
        %s1380 = scalar_lea.vmem [#allocation2], 448
        %v1381 = vld [vmem:[%s1380] sm:$0xf]
        %v1382 = vld [vmem:[%s1380 + $0x4] sm:$0xf]
        %v1383 = vld [vmem:[%s1380 + $0x8] sm:$0xf]
        %v1384 = vld [vmem:[%s1380 + $0xc] sm:$0xf]
        %v1385 = vld [vmem:[%s1380 + $0x10] sm:$0xf]
        %v1386 = vld [vmem:[%s1380 + $0x14] sm:$0xf]
        %v1387 = vld [vmem:[%s1380 + $0x18] sm:$0xf]
        %v1388 = vld [vmem:[%s1380 + $0x1c] sm:$0xf]
        %v1389 = vld [vmem:[%s1380 + $0x20] sm:$0xf]
        %v1390 = vld [vmem:[%s1380 + $0x24] sm:$0xf]
        %v1391 = vld [vmem:[%s1380 + $0x28] sm:$0xf]
        %v1392 = vld [vmem:[%s1380 + $0x2c] sm:$0xf]
        %v1393 = vld [vmem:[%s1380 + $0x30] sm:$0xf]
        %v1394 = vld [vmem:[%s1380 + $0x34] sm:$0xf]
        %v1395 = vld [vmem:[%s1380 + $0x38] sm:$0xf]
        %v1396 = vld [vmem:[%s1380 + $0x3c] sm:$0xf]
        %v1398 = vunpack.c.l.b16 %v1379
        %v1399 = vpack.c.b16 %v1398, %v1257
        %vm1400 = vsmask.f32 5376
        %v1402 = vshrl.u32 %v1259, 16
        %v1404 = vrot.slane %v1402, 2
        %v1405 = vshll.u32 %v1259, 16
        %v1407 = vrot.slane %v1405, 3
        %v1408 = vor.u32 %v1404, %v1407
        %v1410 = vshrl.u32 %v1260, 16
        %v1412 = vrot.slane %v1410, 2
        %v1413 = vshll.u32 %v1260, 16
        %v1415 = vrot.slane %v1413, 3
        %v1416 = vor.u32 %v1412, %v1415
        %v1417 = vsel %vm1400, %v1408, %v1416
        %v1419 = vshrl.u32 %v1399, 16
        %v1421 = vrot.slane %v1419, 2
        %v1422 = vshll.u32 %v1399, 16
        %v1424 = vrot.slane %v1422, 3
        %v1425 = vor.u32 %v1421, %v1424
        %v1426 = vsel %vm1400, %v1416, %v1425
        %v1446 = vunpack.c.l.b16 %v1381
        %v1447 = vunpack.c.l.b16 %v1382
        %v1448 = vunpack.c.l.b16 %v1383
        %v1449 = vunpack.c.l.b16 %v1384
        %v1450 = vunpack.c.l.b16 %v1385
        %v1451 = vunpack.c.l.b16 %v1386
        %v1452 = vunpack.c.l.b16 %v1387
        %v1453 = vunpack.c.l.b16 %v1388
        %v1454 = vunpack.c.l.b16 %v1389
        %v1455 = vunpack.c.l.b16 %v1390
        %v1456 = vunpack.c.l.b16 %v1391
        %v1457 = vunpack.c.l.b16 %v1392
        %v1458 = vunpack.c.l.b16 %v1393
        %v1459 = vunpack.c.l.b16 %v1394
        %v1460 = vunpack.c.l.b16 %v1395
        %v1461 = vunpack.c.l.b16 %v1396
        %v1462 = vpack.c.b16 %v1447, %v1446
        %v1463 = vpack.c.b16 %v1449, %v1448
        %v1464 = vpack.c.b16 %v1451, %v1450
        %v1465 = vpack.c.b16 %v1453, %v1452
        %v1466 = vpack.c.b16 %v1455, %v1454
        %v1467 = vpack.c.b16 %v1457, %v1456
        %v1468 = vpack.c.b16 %v1459, %v1458
        %v1469 = vpack.c.b16 %v1461, %v1460
        %1478 = vmatprep.subr.bf16.mxu0 0
        %1479 = vmatpush1.bf16.msra.mxu0 %v1469
        %1480 = vmatprep.subr.bf16.mxu0 0
        %1481 = vmatpush1.bf16.msra.mxu0 %v1468
        %1482 = vmatprep.subr.bf16.mxu0 0
        %1483 = vmatpush1.bf16.msra.mxu0 %v1467
        %1484 = vmatprep.subr.bf16.mxu0 0
        %1485 = vmatpush1.bf16.msra.mxu0 %v1466
        %1486 = vmatprep.subr.bf16.mxu0 0
        %1487 = vmatpush1.bf16.msra.mxu0 %v1465
        %1488 = vmatprep.subr.bf16.mxu0 0
        %1489 = vmatpush1.bf16.msra.mxu0 %v1464
        %1490 = vmatprep.subr.bf16.mxu0 0
        %1491 = vmatpush1.bf16.msra.mxu0 %v1463
        %1492 = vmatprep.subr.bf16.mxu0 0
        %1493 = vmatpush1.bf16.msra.mxu0 %v1462
        %1494 = vmatprep.subr.bf16.mxu0 0
        %1495 = vmatpush2.bf16.msra.mxu0 0
        %1496 = vmatprep.subr.bf16.mxu0 0
        %1497 = vmatpush2.bf16.msra.mxu0 0
        %1498 = vmatprep.subr.bf16.mxu0 0
        %1499 = vmatpush2.bf16.msra.mxu0 0
        %1500 = vmatprep.subr.bf16.mxu0 0
        %1501 = vmatpush2.bf16.msra.mxu0 0
        %1502 = vmatprep.subr.bf16.mxu0 0
        %1503 = vmatpush2.bf16.msra.mxu0 0
        %1504 = vmatprep.subr.bf16.mxu0 0
        %1505 = vmatpush2.bf16.msra.mxu0 0
        %1506 = vmatprep.subr.bf16.mxu0 0
        %1507 = vmatpush2.bf16.msra.mxu0 0
        %1508 = vmatprep.subr.bf16.mxu0 0
        %1509 = vmatpush2.bf16.msra.mxu0 0
        %1510 = vmatprep.mubr.bf16.mxu0 0
        %1511 = vmatmul.mubr.bf16.gmra.mxu0 %v1417
        %v1512 = vpop.f32.mrf.mxu0
        %v1513 = vadd.f32 0.0, %v1512
        %v1514 = vpop.f32.mrf.mxu0
        %v1515 = vpop.f32.mrf.mxu0
        %v1516 = vadd.f32 0.0, %v1515
        %v1517 = vpop.f32.mrf.mxu0
        %1518 = vmatprep.mubr.bf16.mxu0 0
        %1519 = vmatmul.mubr.bf16.gmra.mxu0 %v1426
        %v1520 = vpop.f32.mrf.mxu0
        %v1521 = vadd.f32 0.0, %v1520
        %v1522 = vpop.f32.mrf.mxu0
        %v1523 = vpop.f32.mrf.mxu0
        %v1524 = vadd.f32 0.0, %v1523
        %v1525 = vpop.f32.mrf.mxu0
        %1526 = vmatprep.mubr.bf16.mxu0 0
        %1527 = vmatmul.mubr.bf16.gmra.mxu0 %v1425
        %v1528 = vpop.f32.mrf.mxu0
        %v1529 = vadd.f32 0.0, %v1528
        %v1530 = vpop.f32.mrf.mxu0
        %v1531 = vpop.f32.mrf.mxu0
        %v1532 = vpop.f32.mrf.mxu0
        %1533 = vdwg.mxu0
        %v1534 = vadd.f32 %v1374, %v1513
        %v1535 = vadd.f32 %v1375, %v1516
        %v1536 = vadd.f32 %v1376, %v1521
        %v1537 = vadd.f32 %v1377, %v1524
        %v1538 = vadd.f32 %v1378, %v1529
        %v1539 = vld [vmem:[%s300 + $0x8] sm:$0x8]
        %s1540 = scalar_lea.vmem [#allocation2], 512
        %v1541 = vld [vmem:[%s1540] sm:$0xf]
        %v1542 = vld [vmem:[%s1540 + $0x4] sm:$0xf]
        %v1543 = vld [vmem:[%s1540 + $0x8] sm:$0xf]
        %v1544 = vld [vmem:[%s1540 + $0xc] sm:$0xf]
        %v1545 = vld [vmem:[%s1540 + $0x10] sm:$0xf]
        %v1546 = vld [vmem:[%s1540 + $0x14] sm:$0xf]
        %v1547 = vld [vmem:[%s1540 + $0x18] sm:$0xf]
        %v1548 = vld [vmem:[%s1540 + $0x1c] sm:$0xf]
        %v1549 = vld [vmem:[%s1540 + $0x20] sm:$0xf]
        %v1550 = vld [vmem:[%s1540 + $0x24] sm:$0xf]
        %v1551 = vld [vmem:[%s1540 + $0x28] sm:$0xf]
        %v1552 = vld [vmem:[%s1540 + $0x2c] sm:$0xf]
        %v1553 = vld [vmem:[%s1540 + $0x30] sm:$0xf]
        %v1554 = vld [vmem:[%s1540 + $0x34] sm:$0xf]
        %v1555 = vld [vmem:[%s1540 + $0x38] sm:$0xf]
        %v1556 = vld [vmem:[%s1540 + $0x3c] sm:$0xf]
        %v1558 = vunpack.c.l.b16 %v1539
        %v1559 = vpack.c.b16 %v1254, %v1558
        %vm1560 = vcmask 1044480
        %v1561 = vrot.slane %v1559, 3
        %v1562 = vrot.slane %v1260, 3
        %v1563 = vsel %vm1560, %v1561, %v1562
        %v1564 = vrot.slane %v1399, 3
        %v1565 = vsel %vm1560, %v1562, %v1564
        %v1585 = vunpack.c.l.b16 %v1541
        %v1586 = vunpack.c.l.b16 %v1542
        %v1587 = vunpack.c.l.b16 %v1543
        %v1588 = vunpack.c.l.b16 %v1544
        %v1589 = vunpack.c.l.b16 %v1545
        %v1590 = vunpack.c.l.b16 %v1546
        %v1591 = vunpack.c.l.b16 %v1547
        %v1592 = vunpack.c.l.b16 %v1548
        %v1593 = vunpack.c.l.b16 %v1549
        %v1594 = vunpack.c.l.b16 %v1550
        %v1595 = vunpack.c.l.b16 %v1551
        %v1596 = vunpack.c.l.b16 %v1552
        %v1597 = vunpack.c.l.b16 %v1553
        %v1598 = vunpack.c.l.b16 %v1554
        %v1599 = vunpack.c.l.b16 %v1555
        %v1600 = vunpack.c.l.b16 %v1556
        %v1601 = vpack.c.b16 %v1586, %v1585
        %v1602 = vpack.c.b16 %v1588, %v1587
        %v1603 = vpack.c.b16 %v1590, %v1589
        %v1604 = vpack.c.b16 %v1592, %v1591
        %v1605 = vpack.c.b16 %v1594, %v1593
        %v1606 = vpack.c.b16 %v1596, %v1595
        %v1607 = vpack.c.b16 %v1598, %v1597
        %v1608 = vpack.c.b16 %v1600, %v1599
        %1617 = vmatprep.subr.bf16.mxu0 0
        %1618 = vmatpush1.bf16.msra.mxu0 %v1608
        %1619 = vmatprep.subr.bf16.mxu0 0
        %1620 = vmatpush1.bf16.msra.mxu0 %v1607
        %1621 = vmatprep.subr.bf16.mxu0 0
        %1622 = vmatpush1.bf16.msra.mxu0 %v1606
        %1623 = vmatprep.subr.bf16.mxu0 0
        %1624 = vmatpush1.bf16.msra.mxu0 %v1605
        %1625 = vmatprep.subr.bf16.mxu0 0
        %1626 = vmatpush1.bf16.msra.mxu0 %v1604
        %1627 = vmatprep.subr.bf16.mxu0 0
        %1628 = vmatpush1.bf16.msra.mxu0 %v1603
        %1629 = vmatprep.subr.bf16.mxu0 0
        %1630 = vmatpush1.bf16.msra.mxu0 %v1602
        %1631 = vmatprep.subr.bf16.mxu0 0
        %1632 = vmatpush1.bf16.msra.mxu0 %v1601
        %1633 = vmatprep.subr.bf16.mxu0 0
        %1634 = vmatpush2.bf16.msra.mxu0 0
        %1635 = vmatprep.subr.bf16.mxu0 0
        %1636 = vmatpush2.bf16.msra.mxu0 0
        %1637 = vmatprep.subr.bf16.mxu0 0
        %1638 = vmatpush2.bf16.msra.mxu0 0
        %1639 = vmatprep.subr.bf16.mxu0 0
        %1640 = vmatpush2.bf16.msra.mxu0 0
        %1641 = vmatprep.subr.bf16.mxu0 0
        %1642 = vmatpush2.bf16.msra.mxu0 0
        %1643 = vmatprep.subr.bf16.mxu0 0
        %1644 = vmatpush2.bf16.msra.mxu0 0
        %1645 = vmatprep.subr.bf16.mxu0 0
        %1646 = vmatpush2.bf16.msra.mxu0 0
        %1647 = vmatprep.subr.bf16.mxu0 0
        %1648 = vmatpush2.bf16.msra.mxu0 0
        %1649 = vmatprep.mubr.bf16.mxu0 0
        %1650 = vmatmul.mubr.bf16.gmra.mxu0 %v1563
        %v1651 = vpop.f32.mrf.mxu0
        %v1652 = vadd.f32 0.0, %v1651
        %v1653 = vpop.f32.mrf.mxu0
        %v1654 = vpop.f32.mrf.mxu0
        %v1655 = vadd.f32 0.0, %v1654
        %v1656 = vpop.f32.mrf.mxu0
        %1657 = vmatprep.mubr.bf16.mxu0 0
        %1658 = vmatmul.mubr.bf16.gmra.mxu0 %v1565
        %v1659 = vpop.f32.mrf.mxu0
        %v1660 = vadd.f32 0.0, %v1659
        %v1661 = vpop.f32.mrf.mxu0
        %v1662 = vpop.f32.mrf.mxu0
        %v1663 = vadd.f32 0.0, %v1662
        %v1664 = vpop.f32.mrf.mxu0
        %1665 = vmatprep.mubr.bf16.mxu0 0
        %1666 = vmatmul.mubr.bf16.gmra.mxu0 %v1564
        %v1667 = vpop.f32.mrf.mxu0
        %v1668 = vadd.f32 0.0, %v1667
        %v1669 = vpop.f32.mrf.mxu0
        %v1670 = vpop.f32.mrf.mxu0
        %v1671 = vpop.f32.mrf.mxu0
        %1672 = vdwg.mxu0
        %v1673 = vadd.f32 %v1534, %v1652
        %v1674 = vadd.f32 %v1535, %v1655
        %v1675 = vadd.f32 %v1536, %v1660
        %v1676 = vadd.f32 %v1537, %v1663
        %v1677 = vadd.f32 %v1538, %v1668
        %v1678 = vld [vmem:[#allocation4] sm:$0x1]
        %v1680 = vlaneseq
        %v1681 = vshrl.u32 %v1680, 7
        %v1682 = vsub.s32 0, %v1681
        %v1683 = vrot.slane %v1678, %v1682
        %v1685 = vadd.f32 %v1673, %v1683
        %v1686 = vadd.f32 %v1674, %v1683
        %v1687 = vadd.f32 %v1675, %v1683
        %v1688 = vadd.f32 %v1676, %v1683
        %v1689 = vadd.f32 %v1677, %v1683
        %v1690 = vmax.f32 %v1685, 0.0
        %v1691 = vmax.f32 %v1686, 0.0
        %v1692 = vmax.f32 %v1687, 0.0
        %v1693 = vmax.f32 %v1688, 0.0
        %v1694 = vmax.f32 %v1689, 0.0
        %v1695 = vld [vmem:[%s318] sm:$0xff]
        %v1696 = vld [vmem:[%s318 + $0x8] sm:$0xff]
        %v1697 = vld [vmem:[%s318 + $0x10] sm:$0xff]
        %v1698 = vld [vmem:[%s318 + $0x18] sm:$0xff]
        %v1699 = vld [vmem:[%s318 + $0x20] sm:$0xff]
        %1701 = vset.pattern.permute.xlu0 0
        %1702 = vperm.xlu0 %1701, %v1695
        %v1703 = vpop.permute.xlu0 %1702
        %1706 = vset.pattern.permute.xlu0 0
        %1707 = vperm.xlu0 %1706, %v1696
        %v1708 = vpop.permute.xlu0 %1707
        %1711 = vset.pattern.permute.xlu0 0
        %1712 = vperm.xlu0 %1711, %v1697
        %v1713 = vpop.permute.xlu0 %1712
        %1716 = vset.pattern.permute.xlu0 0
        %1717 = vperm.xlu0 %1716, %v1698
        %v1718 = vpop.permute.xlu0 %1717
        %1721 = vset.pattern.permute.xlu0 0
        %1722 = vperm.xlu0 %1721, %v1699
        %v1723 = vpop.permute.xlu0 %1722
        %v1725 = vmul.f32 %v1690, %v1703
        %v1726 = vmul.f32 %v1691, %v1708
        %v1727 = vmul.f32 %v1692, %v1713
        %v1728 = vmul.f32 %v1693, %v1718
        %v1729 = vmul.f32 %v1694, %v1723
        %v1730 = vpack.c.bf16 %v1726, %v1725
        %v1731 = vpack.c.bf16 %v1728, %v1727
        %v1732 = vpack.c.bf16 %v1729, %v1729
        %v1736 = vunpack.c.l.b16 %v1730
        %v1737 = vunpack.c.h.b16 %v1730
        %v1738 = vunpack.c.l.b16 %v1731
        %v1739 = vunpack.c.h.b16 %v1731
        %v1740 = vunpack.c.l.b16 %v1732
        %v1741 = vpack.c.b16 %v1736, %v1736
        %v1742 = vpack.c.b16 %v1737, %v1737
        %v1743 = vpack.c.b16 %v1738, %v1738
        %v1744 = vpack.c.b16 %v1739, %v1739
        %v1745 = vpack.c.b16 %v1740, %v1740
        %1751 = vst [vmem:[%s336] sm:$0xf] %v1741
        %1752 = vst [vmem:[%s336 + $0x4] sm:$0xf] %v1742
        %1753 = vst [vmem:[%s336 + $0x8] sm:$0xf] %v1743
        %1754 = vst [vmem:[%s336 + $0xc] sm:$0xf] %v1744
        %1755 = vst [vmem:[%s336 + $0x10] sm:$0xf] %v1745
        %p1756 = scmp.lt.s32.totalorder %s17, 9
        %s1757 = scalar_select %p1756, %s17, 9
        %s1758 = smul.addr %s1757, 5
        %s1759 = smul.addr %s1758, 4
        %s1760 = scalar_lea.vmem %s4, %s1759
        // Predicated region
        $region45: #{ico_cnn_forward.4} parent=35 // pred_check
          %p1761 = pneg %p155
        $region46: #{ico_cnn_forward.4} parent=35 // pred_check_branch
          %1763 = sbr.rel (%p1761) target = $region48
        $region47: #{ico_cnn_forward.4} parent=35 // pred_region
          _
        $region48: #{ico_cnn_forward.4} parent=35 // pred_fallthru
          _
      $region36: #{ico_cnn_forward.4} parent=5 // pred_fallthru
        _
      %p1764 = scmp.le.s32.totalorder 2, %s12
      // Predicated region
      $region49: #{ico_cnn_forward.4} parent=5 // pred_check
        %p1765 = pneg %p1764
      $region50: #{ico_cnn_forward.4} parent=5 // pred_check_branch
        %1767 = sbr.rel (%p1765) target = $region52
      $region51: #{ico_cnn_forward.4} parent=5 // pred_region
        %s1768 = ssub.s32 %s12, 2
        // Predicated region
        $region53: #{ico_cnn_forward.4} parent=51 // pred_check
          %p1769 = pneg %p161
        $region54: #{ico_cnn_forward.4} parent=51 // pred_check_branch
          %1771 = sbr.rel (%p1769) target = $region56
        $region55: #{ico_cnn_forward.4} parent=51 // pred_region
          %p1772 = scmp.lt.s32.totalorder %s18, 9
          %s1773 = scalar_select %p1772, %s18, 9
          %s1774 = smul.addr %s1773, 5
          %s1775 = smul.addr %s1774, 4
          %s1776 = scalar_lea.vmem %s4, %s1775
        $region56: #{ico_cnn_forward.4} parent=51 // pred_fallthru
          _
      $region52: #{ico_cnn_forward.4} parent=5 // pred_fallthru
        _
    $region6: #{ico_cnn_forward.4} parent=1 // loop_footer
      %s16 = sadd.s32 1, %s12
    $region7: #{ico_cnn_forward.4} parent=1 // loop_footer_branch
      %11 = sbr.rel target = $region3
    $region8: #{ico_cnn_forward.4} parent=1 // loop_exit
      _
    %1777 = vsyncpa [#allocation3], 1
    %s1778 = scalar_lea.sflag [#allocation3], 1
    %1779 = vsyncpa %s1778, 1
    %1780 = vsyncpa [#allocation5], 1

// kernel: ico_cnn_forward.5
$region0: #{ico_cnn_forward.5}
  #allocation0 [shape = 'u32[]', space=smem, size = 0x4, offset = 0x4, fixed_abs, tag = 'smem constant byte address 0x4 - core index']
  #allocation1 [shape = 'u32[144,128]{1,0:T(1,128)}', space=vmem, size = 0x12000, scoped, tag = 'internal scratch']
  #allocation2 [shape = 'f32[8,128]{1,0:T(8,128)}', space=vmem, size = 0x1000, scoped, tag = 'scratch operand']
  %s0 = inlined_call_operand.vmem [shape: bf16[8,25600], index: 0, kind: input, shape index: {}]
  %s1 = inlined_call_operand.hbm [shape: bf16[25600,128], index: 1, kind: input, shape index: {}]
  %s2 = inlined_call_operand.hbm [shape: f32[1,128], index: 2, kind: input, shape index: {}]
  %s3 = inlined_call_operand.hbm [shape: bf16[128,128], index: 3, kind: input, shape index: {}]
  %s4 = inlined_call_operand.hbm [shape: f32[1,128], index: 4, kind: input, shape index: {}]
  %s5 = inlined_call_operand.vmem [shape: f32[8,128], index: 5, kind: output, shape index: {}]
  %s6 = sld [smem:[#allocation0]]
  $region77: #{ico_cnn_forward.5} parent=0
    _
  %s8 = ssub.s32 1, %s6
  %s9 = scalar_select 0, %s8, %s6
  $region1: #{ico_cnn_forward.5} parent=0
    #allocation3 [shape = 'u8[524288]{0}', space=vmem, size = 0x80000, scoped, tag = 'input window, operand 1']
    #allocation4 [shape = 's32[2]{0}', space=sflag, size = 0x8, scoped, tag = 'scoped memory for ico_cnn_forward.5']
    #allocation5 [shape = 'u8[512]{0}', space=vmem, size = 0x400, scoped, tag = 'input window, operand 2, single buffered']
    #allocation6 [shape = 's32[1]{0}', space=sflag, size = 0x4, scoped, tag = 'scoped memory for ico_cnn_forward.5']
    #allocation7 [shape = 'u8[32768]{0}', space=vmem, size = 0x8000, scoped, tag = 'input window, operand 3, single buffered']
    #allocation8 [shape = 'u8[512]{0}', space=vmem, size = 0x400, scoped, tag = 'input window, operand 4, single buffered']
    #allocation9 [shape = 's32[1]{0}', space=sflag, size = 0x4, scoped, tag = 'scoped memory for ico_cnn_forward.5']
    %10 = vsyncpa [#allocation4], 0
    %s11 = scalar_lea.sflag [#allocation4], 1
    %12 = vsyncpa %s11, 0
    %13 = vsyncpa [#allocation6], 0
    %14 = vsyncpa [#allocation9], 0
    loop: start=0, step=1, limit=27
    $region2: #{ico_cnn_forward.5} parent=1 // loop_pre_header
      _
    $region3: #{ico_cnn_forward.5} parent=1 // loop_header
      %s16 = sphi 0, %s20
      %p17 = scmp.ge.s32.totalorder %s16, 27
      %s26 = sphi 0, %s28
      %s29 = sphi 0, %s26
      %s30 = sphi 0, %s29
      %s46 = sphi 0, %s30
      %s52 = sphi 0, %s54
      %s55 = sphi 0, %s52
      %s56 = sphi 0, %s55
      %s72 = sphi 0, %s56
      %s76 = sphi 0, %s76
      %s78 = sphi 0, %s76
      %s79 = sphi 0, %s78
      %s93 = sphi 0, %s79
      %s97 = sphi 0, %s97
      %s99 = sphi 0, %s97
      %s100 = sphi 0, %s99
      %s114 = sphi 0, %s100
      %s118 = sphi 0, %s118
      %s120 = sphi 0, %s118
      %s121 = sphi 0, %s120
      %s135 = sphi 0, %s121
      %s139 = sphi 0, %s139
      %s141 = sphi 0, %s139
      %s142 = sphi 0, %s141
      %s156 = sphi 0, %s142
    $region4: #{ico_cnn_forward.5} parent=1 // loop_header_branch
      %19 = sbr.rel (%p17) target = $region8
    $region5: #{ico_cnn_forward.5} parent=1 // loop_body
      %s21 = ssub.s32 %s16, 1
      %s22 = ssub.s32 %s16, 2
      %s23 = sadd.s32 %s16, 1
      %s24 = ssub.s32 %s16, %s23
      %p25 = scmp.eq.s32.totalorder %s24, 0
      %s27 = sadd.s32 %s26, 1
      %s28 = scalar_select %p25, %s26, %s27
      %p31 = pneg %p25
      %p32 = scmp.eq.s32.totalorder %s16, 24
      %p33 = por %p31, %p32
      %p34 = scmp.ne.s32.totalorder %s26, %s29
      %p35 = scmp.eq.s32.totalorder %s16, 0
      %p36 = por %p34, %p35
      %p37 = scmp.ne.s32.totalorder %s26, %s29
      %p38 = scmp.eq.s32.totalorder %s21, 24
      %p39 = por %p37, %p38
      %p40 = scmp.ne.s32.totalorder %s29, %s30
      %p41 = scmp.eq.s32.totalorder %s21, 0
      %p42 = por %p40, %p41
      %p43 = scmp.ne.s32.totalorder %s29, %s30
      %p44 = scmp.eq.s32.totalorder %s22, 24
      %p45 = por %p43, %p44
      %p47 = scmp.ne.s32.totalorder %s30, %s46
      %p48 = scmp.eq.s32.totalorder %s22, 0
      %p49 = por %p47, %p48
      %s50 = ssub.s32 %s16, %s23
      %p51 = scmp.eq.s32.totalorder %s50, 0
      %s53 = sadd.s32 %s52, 1
      %s54 = scalar_select %p51, %s52, %s53
      %p57 = pneg %p51
      %p58 = scmp.eq.s32.totalorder %s16, 24
      %p59 = por %p57, %p58
      %p60 = scmp.ne.s32.totalorder %s52, %s55
      %p61 = scmp.eq.s32.totalorder %s16, 0
      %p62 = por %p60, %p61
      %p63 = scmp.ne.s32.totalorder %s52, %s55
      %p64 = scmp.eq.s32.totalorder %s21, 24
      %p65 = por %p63, %p64
      %p66 = scmp.ne.s32.totalorder %s55, %s56
      %p67 = scmp.eq.s32.totalorder %s21, 0
      %p68 = por %p66, %p67
      %p69 = scmp.ne.s32.totalorder %s55, %s56
      %p70 = scmp.eq.s32.totalorder %s22, 24
      %p71 = por %p69, %p70
      %p73 = scmp.ne.s32.totalorder %s56, %s72
      %p74 = scmp.eq.s32.totalorder %s22, 0
      %p75 = por %p73, %p74
      %s77 = sadd.s32 %s76, 1
      %p80 = scmp.eq.s32.totalorder %s16, 24
      %p81 = scmp.ne.s32.totalorder %s76, %s78
      %p82 = scmp.eq.s32.totalorder %s16, 0
      %p83 = por %p81, %p82
      %p84 = scmp.ne.s32.totalorder %s76, %s78
      %p85 = scmp.eq.s32.totalorder %s21, 24
      %p86 = por %p84, %p85
      %p87 = scmp.ne.s32.totalorder %s78, %s79
      %p88 = scmp.eq.s32.totalorder %s21, 0
      %p89 = por %p87, %p88
      %p90 = scmp.ne.s32.totalorder %s78, %s79
      %p91 = scmp.eq.s32.totalorder %s22, 24
      %p92 = por %p90, %p91
      %p94 = scmp.ne.s32.totalorder %s79, %s93
      %p95 = scmp.eq.s32.totalorder %s22, 0
      %p96 = por %p94, %p95
      %s98 = sadd.s32 %s97, 1
      %p101 = scmp.eq.s32.totalorder %s16, 24
      %p102 = scmp.ne.s32.totalorder %s97, %s99
      %p103 = scmp.eq.s32.totalorder %s16, 0
      %p104 = por %p102, %p103
      %p105 = scmp.ne.s32.totalorder %s97, %s99
      %p106 = scmp.eq.s32.totalorder %s21, 24
      %p107 = por %p105, %p106
      %p108 = scmp.ne.s32.totalorder %s99, %s100
      %p109 = scmp.eq.s32.totalorder %s21, 0
      %p110 = por %p108, %p109
      %p111 = scmp.ne.s32.totalorder %s99, %s100
      %p112 = scmp.eq.s32.totalorder %s22, 24
      %p113 = por %p111, %p112
      %p115 = scmp.ne.s32.totalorder %s100, %s114
      %p116 = scmp.eq.s32.totalorder %s22, 0
      %p117 = por %p115, %p116
      %s119 = sadd.s32 %s118, 1
      %p122 = scmp.eq.s32.totalorder %s16, 24
      %p123 = scmp.ne.s32.totalorder %s118, %s120
      %p124 = scmp.eq.s32.totalorder %s16, 0
      %p125 = por %p123, %p124
      %p126 = scmp.ne.s32.totalorder %s118, %s120
      %p127 = scmp.eq.s32.totalorder %s21, 24
      %p128 = por %p126, %p127
      %p129 = scmp.ne.s32.totalorder %s120, %s121
      %p130 = scmp.eq.s32.totalorder %s21, 0
      %p131 = por %p129, %p130
      %p132 = scmp.ne.s32.totalorder %s120, %s121
      %p133 = scmp.eq.s32.totalorder %s22, 24
      %p134 = por %p132, %p133
      %p136 = scmp.ne.s32.totalorder %s121, %s135
      %p137 = scmp.eq.s32.totalorder %s22, 0
      %p138 = por %p136, %p137
      %s140 = sadd.s32 %s139, 1
      %p143 = scmp.eq.s32.totalorder %s16, 24
      %p144 = scmp.ne.s32.totalorder %s139, %s141
      %p145 = scmp.eq.s32.totalorder %s16, 0
      %p146 = por %p144, %p145
      %p147 = scmp.ne.s32.totalorder %s139, %s141
      %p148 = scmp.eq.s32.totalorder %s21, 24
      %p149 = por %p147, %p148
      %p150 = scmp.ne.s32.totalorder %s141, %s142
      %p151 = scmp.eq.s32.totalorder %s21, 0
      %p152 = por %p150, %p151
      %p153 = scmp.ne.s32.totalorder %s141, %s142
      %p154 = scmp.eq.s32.totalorder %s22, 24
      %p155 = por %p153, %p154
      %p157 = scmp.ne.s32.totalorder %s142, %s156
      %p158 = scmp.eq.s32.totalorder %s22, 0
      %p159 = por %p157, %p158
      %p160 = scmp.le.s32.totalorder 1, %s16
      %p161 = scmp.lt.s32.totalorder %s16, 26
      %p162 = pnand %p160, %p161
      %p163 = pneg %p162
      // Predicated region
      $region9: #{ico_cnn_forward.5} parent=5 // pred_check
        _
      $region10: #{ico_cnn_forward.5} parent=5 // pred_check_branch
        %165 = sbr.rel (%p162) target = $region12
      $region11: #{ico_cnn_forward.5} parent=5 // pred_region
        %s166 = ssub.s32 %s16, 1
        // Predicated region
        $region13: #{ico_cnn_forward.5} parent=11 // pred_check
          %p167 = pneg %p89
        $region14: #{ico_cnn_forward.5} parent=11 // pred_check_branch
          %169 = sbr.rel (%p167) target = $region16
        $region15: #{ico_cnn_forward.5} parent=11 // pred_region
          %s171 = ssub.s32 16, 16
          %172 = vsyncadd [#allocation6], %s171
          %s174 = sshll.u32 [#allocation5], 4
          %s175 = int_to_ptr.vmem [resolvable:$true] %s174
          %177 = dma.hbm_to_vmem [thread:$0]  %s2, 16, %s175, [#allocation6]
        $region16: #{ico_cnn_forward.5} parent=11 // pred_fallthru
          _
        // Predicated region
        $region17: #{ico_cnn_forward.5} parent=11 // pred_check
          %p178 = pneg %p110
        $region18: #{ico_cnn_forward.5} parent=11 // pred_check_branch
          %180 = sbr.rel (%p178) target = $region20
        $region19: #{ico_cnn_forward.5} parent=11 // pred_region
          %s182 = ssub.s32 1024, 1024
          %183 = vsyncadd [#allocation6], %s182
          %s184 = sshll.u32 [#allocation7], 4
          %s185 = int_to_ptr.vmem [resolvable:$true] %s184
          %190 = dma.hbm_to_vmem [thread:$0]  %s3, 1024, %s185, [#allocation6], 64, 64, 4
        $region20: #{ico_cnn_forward.5} parent=11 // pred_fallthru
          _
        // Predicated region
        $region21: #{ico_cnn_forward.5} parent=11 // pred_check
          %p191 = pneg %p131
        $region22: #{ico_cnn_forward.5} parent=11 // pred_check_branch
          %193 = sbr.rel (%p191) target = $region24
        $region23: #{ico_cnn_forward.5} parent=11 // pred_region
          %s195 = ssub.s32 16, 16
          %196 = vsyncadd [#allocation9], %s195
          %s198 = sshll.u32 [#allocation8], 4
          %s199 = int_to_ptr.vmem [resolvable:$true] %s198
          %201 = dma.hbm_to_vmem [thread:$0]  %s4, 16, %s199, [#allocation9]
        $region24: #{ico_cnn_forward.5} parent=11 // pred_fallthru
          _
      $region12: #{ico_cnn_forward.5} parent=5 // pred_fallthru
        _
      %p202 = scmp.lt.s32.totalorder %s16, 25
      // Predicated region
      $region25: #{ico_cnn_forward.5} parent=5 // pred_check
        %p203 = pneg %p202
      $region26: #{ico_cnn_forward.5} parent=5 // pred_check_branch
        %205 = sbr.rel (%p203) target = $region28
      $region27: #{ico_cnn_forward.5} parent=5 // pred_region
        // Predicated region
        $region29: #{ico_cnn_forward.5} parent=27 // pred_check
          %p206 = pneg %p36
        $region30: #{ico_cnn_forward.5} parent=27 // pred_check_branch
          %208 = sbr.rel (%p206) target = $region32
        $region31: #{ico_cnn_forward.5} parent=27 // pred_region
          %s209 = smul.u32 8, %s16
          %p210 = scmp.lt.s32.totalorder %s209, 199
          %s211 = scalar_select %p210, %s209, 199
          %s212 = smul.addr %s211, 4
          %s213 = scalar_lea.vmem %s0, %s212
          %s214 = smul.u32 8, %s16
        $region32: #{ico_cnn_forward.5} parent=27 // pred_fallthru
          _
        // Predicated region
        $region33: #{ico_cnn_forward.5} parent=27 // pred_check
          %p215 = pneg %p62
        $region34: #{ico_cnn_forward.5} parent=27 // pred_check_branch
          %217 = sbr.rel (%p215) target = $region36
        $region35: #{ico_cnn_forward.5} parent=27 // pred_region
          %s218 = sand.u32 %s52, 1
          %s219 = scalar_lea.sflag [#allocation4], %s218
          %s220 = sand.u32 %s52, 1
          %s221 = smul.addr %s220, 512
          %s222 = scalar_lea.vmem [#allocation3], %s221
          %s223 = smul.u32 128, %s16
          %s225 = ssub.s32 8192, 8192
          %226 = vsyncadd %s219, %s225
          %s227 = smul.addr %s223, 64
          %s228 = scalar_lea.hbm %s1, %s227
          %s229 = sshll.u32 %s222, 4
          %s230 = int_to_ptr.vmem [resolvable:$true] %s229
          %235 = dma.hbm_to_vmem [thread:$0]  %s228, 8192, %s230, %s219, 64, 64, 4
        $region36: #{ico_cnn_forward.5} parent=27 // pred_fallthru
          _
      $region28: #{ico_cnn_forward.5} parent=5 // pred_fallthru
        _
      %p236 = scmp.le.s32.totalorder 1, %s16
      %p237 = scmp.lt.s32.totalorder %s16, 26
      %p238 = pnand %p236, %p237
      %p239 = pneg %p238
      // Predicated region
      $region37: #{ico_cnn_forward.5} parent=5 // pred_check
        _
      $region38: #{ico_cnn_forward.5} parent=5 // pred_check_branch
        %241 = sbr.rel (%p238) target = $region40
      $region39: #{ico_cnn_forward.5} parent=5 // pred_region
        %s242 = ssub.s32 %s16, 1
        %s243 = sand.u32 %s55, 1
        %s244 = scalar_lea.sflag [#allocation4], %s243
        %s245 = sand.u32 %s55, 1
        %s246 = smul.addr %s245, 512
        %s247 = scalar_lea.vmem [#allocation3], %s246
        // Predicated region
        $region41: #{ico_cnn_forward.5} parent=39 // pred_check
          %p248 = pneg %p68
        $region42: #{ico_cnn_forward.5} parent=39 // pred_check_branch
          %250 = sbr.rel (%p248) target = $region44
        $region43: #{ico_cnn_forward.5} parent=39 // pred_region
          %251 = dma.done %s244, 8192
        $region44: #{ico_cnn_forward.5} parent=39 // pred_fallthru
          _
        // Predicated region
        $region45: #{ico_cnn_forward.5} parent=39 // pred_check
          %p252 = pneg %p89
        $region46: #{ico_cnn_forward.5} parent=39 // pred_check_branch
          %254 = sbr.rel (%p252) target = $region48
        $region47: #{ico_cnn_forward.5} parent=39 // pred_region
          %255 = dma.done [#allocation6], 16
        $region48: #{ico_cnn_forward.5} parent=39 // pred_fallthru
          _
        // Predicated region
        $region49: #{ico_cnn_forward.5} parent=39 // pred_check
          %p256 = pneg %p110
        $region50: #{ico_cnn_forward.5} parent=39 // pred_check_branch
          %258 = sbr.rel (%p256) target = $region52
        $region51: #{ico_cnn_forward.5} parent=39 // pred_region
          %259 = dma.done [#allocation6], 1024
        $region52: #{ico_cnn_forward.5} parent=39 // pred_fallthru
          _
        // Predicated region
        $region53: #{ico_cnn_forward.5} parent=39 // pred_check
          %p260 = pneg %p131
        $region54: #{ico_cnn_forward.5} parent=39 // pred_check_branch
          %262 = sbr.rel (%p260) target = $region56
        $region55: #{ico_cnn_forward.5} parent=39 // pred_region
          %263 = dma.done [#allocation9], 16
        $region56: #{ico_cnn_forward.5} parent=39 // pred_fallthru
          _
        %s264 = smul.u32 8, %s21
        %p265 = scmp.lt.s32.totalorder %s264, 199
        %s266 = scalar_select %p265, %s264, 199
        %s267 = smul.addr %s266, 4
        %s268 = scalar_lea.vmem %s0, %s267
        %p269 = pneg %p42
        %p270 = pneg %p39
        %s271 = sand.u32 %s55, 1
        %s272 = scalar_lea.sflag [#allocation4], %s271
        %s273 = sand.u32 %s55, 1
        %s274 = smul.addr %s273, 512
        %s275 = scalar_lea.vmem [#allocation3], %s274
        %p276 = pneg %p68
        %p277 = pneg %p65
        %p278 = pneg %p89
        %p279 = pneg %p86
        %p280 = pneg %p110
        %p281 = pneg %p107
        %p282 = pneg %p131
        %p283 = pneg %p128
        %p284 = pneg %p152
        %p285 = pneg %p149
        %s286 = smul.u32 8, %s21
        %p287 = scmp.lt.s32.totalorder %s286, 199
        %s288 = scalar_select %p287, %s286, 199
        %s289 = smul.addr %s288, 4
        %s290 = scalar_lea.vmem %s0, %s289
        %s291 = smul.u32 8, %s21
        %s292 = smul.u32 128, %s21
        %p294 = scmp.eq.s32.totalorder %s21, 0
        // Predicated region
        $region57: #{ico_cnn_forward.5} parent=39 // pred_check
          %p295 = pneg %p294
        $region58: #{ico_cnn_forward.5} parent=39 // pred_check_branch
          %297 = sbr.rel (%p295) target = $region60
        $region59: #{ico_cnn_forward.5} parent=39 // pred_region
          %298 = vst [vmem:[#allocation2] sm:$0xff] 0.0
        $region60: #{ico_cnn_forward.5} parent=39 // pred_fallthru
          _
        %v299 = vld [vmem:[#allocation2] sm:$0xff]
        %v300 = vld [vmem:[%s290] sm:$0xff]
        %v301 = vld [vmem:[%s290 + $0x8] sm:$0xff]
        %v302 = vld [vmem:[%s290 + $0x10] sm:$0xff]
        %v303 = vld [vmem:[%s290 + $0x18] sm:$0xff]
        %v304 = vld [vmem:[%s247] sm:$0xf]
        %v305 = vld [vmem:[%s247 + $0x4] sm:$0xf]
        %v306 = vld [vmem:[%s247 + $0x8] sm:$0xf]
        %v307 = vld [vmem:[%s247 + $0xc] sm:$0xf]
        %v308 = vld [vmem:[%s247 + $0x10] sm:$0xf]
        %v309 = vld [vmem:[%s247 + $0x14] sm:$0xf]
        %v310 = vld [vmem:[%s247 + $0x18] sm:$0xf]
        %v311 = vld [vmem:[%s247 + $0x1c] sm:$0xf]
        %v312 = vld [vmem:[%s247 + $0x20] sm:$0xf]
        %v313 = vld [vmem:[%s247 + $0x24] sm:$0xf]
        %v314 = vld [vmem:[%s247 + $0x28] sm:$0xf]
        %v315 = vld [vmem:[%s247 + $0x2c] sm:$0xf]
        %v316 = vld [vmem:[%s247 + $0x30] sm:$0xf]
        %v317 = vld [vmem:[%s247 + $0x34] sm:$0xf]
        %v318 = vld [vmem:[%s247 + $0x38] sm:$0xf]
        %v319 = vld [vmem:[%s247 + $0x3c] sm:$0xf]
        %v320 = vld [vmem:[%s247 + $0x40] sm:$0xf]
        %v321 = vld [vmem:[%s247 + $0x44] sm:$0xf]
        %v322 = vld [vmem:[%s247 + $0x48] sm:$0xf]
        %v323 = vld [vmem:[%s247 + $0x4c] sm:$0xf]
        %v324 = vld [vmem:[%s247 + $0x50] sm:$0xf]
        %v325 = vld [vmem:[%s247 + $0x54] sm:$0xf]
        %v326 = vld [vmem:[%s247 + $0x58] sm:$0xf]
        %v327 = vld [vmem:[%s247 + $0x5c] sm:$0xf]
        %v328 = vld [vmem:[%s247 + $0x60] sm:$0xf]
        %v329 = vld [vmem:[%s247 + $0x64] sm:$0xf]
        %v330 = vld [vmem:[%s247 + $0x68] sm:$0xf]
        %v331 = vld [vmem:[%s247 + $0x6c] sm:$0xf]
        %v332 = vld [vmem:[%s247 + $0x70] sm:$0xf]
        %v333 = vld [vmem:[%s247 + $0x74] sm:$0xf]
        %v334 = vld [vmem:[%s247 + $0x78] sm:$0xf]
        %v335 = vld [vmem:[%s247 + $0x7c] sm:$0xf]
        %v336 = vld [vmem:[%s247 + $0x80] sm:$0xf]
        %v337 = vld [vmem:[%s247 + $0x84] sm:$0xf]
        %v338 = vld [vmem:[%s247 + $0x88] sm:$0xf]
        %v339 = vld [vmem:[%s247 + $0x8c] sm:$0xf]
        %v340 = vld [vmem:[%s247 + $0x90] sm:$0xf]
        %v341 = vld [vmem:[%s247 + $0x94] sm:$0xf]
        %v342 = vld [vmem:[%s247 + $0x98] sm:$0xf]
        %v343 = vld [vmem:[%s247 + $0x9c] sm:$0xf]
        %v344 = vld [vmem:[%s247 + $0xa0] sm:$0xf]
        %v345 = vld [vmem:[%s247 + $0xa4] sm:$0xf]
        %v346 = vld [vmem:[%s247 + $0xa8] sm:$0xf]
        %v347 = vld [vmem:[%s247 + $0xac] sm:$0xf]
        %v348 = vld [vmem:[%s247 + $0xb0] sm:$0xf]
        %v349 = vld [vmem:[%s247 + $0xb4] sm:$0xf]
        %v350 = vld [vmem:[%s247 + $0xb8] sm:$0xf]
        %v351 = vld [vmem:[%s247 + $0xbc] sm:$0xf]
        %v352 = vld [vmem:[%s247 + $0xc0] sm:$0xf]
        %v353 = vld [vmem:[%s247 + $0xc4] sm:$0xf]
        %v354 = vld [vmem:[%s247 + $0xc8] sm:$0xf]
        %v355 = vld [vmem:[%s247 + $0xcc] sm:$0xf]
        %v356 = vld [vmem:[%s247 + $0xd0] sm:$0xf]
        %v357 = vld [vmem:[%s247 + $0xd4] sm:$0xf]
        %v358 = vld [vmem:[%s247 + $0xd8] sm:$0xf]
        %v359 = vld [vmem:[%s247 + $0xdc] sm:$0xf]
        %v360 = vld [vmem:[%s247 + $0xe0] sm:$0xf]
        %v361 = vld [vmem:[%s247 + $0xe4] sm:$0xf]
        %v362 = vld [vmem:[%s247 + $0xe8] sm:$0xf]
        %v363 = vld [vmem:[%s247 + $0xec] sm:$0xf]
        %v364 = vld [vmem:[%s247 + $0xf0] sm:$0xf]
        %v365 = vld [vmem:[%s247 + $0xf4] sm:$0xf]
        %v366 = vld [vmem:[%s247 + $0xf8] sm:$0xf]
        %v367 = vld [vmem:[%s247 + $0xfc] sm:$0xf]
        %v368 = vld [vmem:[%s247 + $0x100] sm:$0xf]
        %v369 = vld [vmem:[%s247 + $0x104] sm:$0xf]
        %v370 = vld [vmem:[%s247 + $0x108] sm:$0xf]
        %v371 = vld [vmem:[%s247 + $0x10c] sm:$0xf]
        %v372 = vld [vmem:[%s247 + $0x110] sm:$0xf]
        %v373 = vld [vmem:[%s247 + $0x114] sm:$0xf]
        %v374 = vld [vmem:[%s247 + $0x118] sm:$0xf]
        %v375 = vld [vmem:[%s247 + $0x11c] sm:$0xf]
        %v376 = vld [vmem:[%s247 + $0x120] sm:$0xf]
        %v377 = vld [vmem:[%s247 + $0x124] sm:$0xf]
        %v378 = vld [vmem:[%s247 + $0x128] sm:$0xf]
        %v379 = vld [vmem:[%s247 + $0x12c] sm:$0xf]
        %v380 = vld [vmem:[%s247 + $0x130] sm:$0xf]
        %v381 = vld [vmem:[%s247 + $0x134] sm:$0xf]
        %v382 = vld [vmem:[%s247 + $0x138] sm:$0xf]
        %v383 = vld [vmem:[%s247 + $0x13c] sm:$0xf]
        %v384 = vld [vmem:[%s247 + $0x140] sm:$0xf]
        %v385 = vld [vmem:[%s247 + $0x144] sm:$0xf]
        %v386 = vld [vmem:[%s247 + $0x148] sm:$0xf]
        %v387 = vld [vmem:[%s247 + $0x14c] sm:$0xf]
        %v388 = vld [vmem:[%s247 + $0x150] sm:$0xf]
        %v389 = vld [vmem:[%s247 + $0x154] sm:$0xf]
        %v390 = vld [vmem:[%s247 + $0x158] sm:$0xf]
        %v391 = vld [vmem:[%s247 + $0x15c] sm:$0xf]
        %v392 = vld [vmem:[%s247 + $0x160] sm:$0xf]
        %v393 = vld [vmem:[%s247 + $0x164] sm:$0xf]
        %v394 = vld [vmem:[%s247 + $0x168] sm:$0xf]
        %v395 = vld [vmem:[%s247 + $0x16c] sm:$0xf]
        %v396 = vld [vmem:[%s247 + $0x170] sm:$0xf]
        %v397 = vld [vmem:[%s247 + $0x174] sm:$0xf]
        %v398 = vld [vmem:[%s247 + $0x178] sm:$0xf]
        %v399 = vld [vmem:[%s247 + $0x17c] sm:$0xf]
        %v400 = vld [vmem:[%s247 + $0x180] sm:$0xf]
        %v401 = vld [vmem:[%s247 + $0x184] sm:$0xf]
        %v402 = vld [vmem:[%s247 + $0x188] sm:$0xf]
        %v403 = vld [vmem:[%s247 + $0x18c] sm:$0xf]
        %v404 = vld [vmem:[%s247 + $0x190] sm:$0xf]
        %v405 = vld [vmem:[%s247 + $0x194] sm:$0xf]
        %v406 = vld [vmem:[%s247 + $0x198] sm:$0xf]
        %v407 = vld [vmem:[%s247 + $0x19c] sm:$0xf]
        %v408 = vld [vmem:[%s247 + $0x1a0] sm:$0xf]
        %v409 = vld [vmem:[%s247 + $0x1a4] sm:$0xf]
        %v410 = vld [vmem:[%s247 + $0x1a8] sm:$0xf]
        %v411 = vld [vmem:[%s247 + $0x1ac] sm:$0xf]
        %v412 = vld [vmem:[%s247 + $0x1b0] sm:$0xf]
        %v413 = vld [vmem:[%s247 + $0x1b4] sm:$0xf]
        %v414 = vld [vmem:[%s247 + $0x1b8] sm:$0xf]
        %v415 = vld [vmem:[%s247 + $0x1bc] sm:$0xf]
        %v416 = vld [vmem:[%s247 + $0x1c0] sm:$0xf]
        %v417 = vld [vmem:[%s247 + $0x1c4] sm:$0xf]
        %v418 = vld [vmem:[%s247 + $0x1c8] sm:$0xf]
        %v419 = vld [vmem:[%s247 + $0x1cc] sm:$0xf]
        %v420 = vld [vmem:[%s247 + $0x1d0] sm:$0xf]
        %v421 = vld [vmem:[%s247 + $0x1d4] sm:$0xf]
        %v422 = vld [vmem:[%s247 + $0x1d8] sm:$0xf]
        %v423 = vld [vmem:[%s247 + $0x1dc] sm:$0xf]
        %v424 = vld [vmem:[%s247 + $0x1e0] sm:$0xf]
        %v425 = vld [vmem:[%s247 + $0x1e4] sm:$0xf]
        %v426 = vld [vmem:[%s247 + $0x1e8] sm:$0xf]
        %v427 = vld [vmem:[%s247 + $0x1ec] sm:$0xf]
        %v428 = vld [vmem:[%s247 + $0x1f0] sm:$0xf]
        %v429 = vld [vmem:[%s247 + $0x1f4] sm:$0xf]
        %v430 = vld [vmem:[%s247 + $0x1f8] sm:$0xf]
        %v431 = vld [vmem:[%s247 + $0x1fc] sm:$0xf]
        %v436 = vunpack.c.l.b16 %v300
        %v437 = vunpack.c.h.b16 %v300
        %v438 = vunpack.c.l.b16 %v301
        %v439 = vunpack.c.h.b16 %v301
        %v440 = vunpack.c.l.b16 %v302
        %v441 = vunpack.c.h.b16 %v302
        %v442 = vunpack.c.l.b16 %v303
        %v443 = vunpack.c.h.b16 %v303
        %v444 = vpack.c.b16 %v436, %v436
        %v445 = vpack.c.b16 %v437, %v437
        %v446 = vpack.c.b16 %v438, %v438
        %v447 = vpack.c.b16 %v439, %v439
        %v448 = vpack.c.b16 %v440, %v440
        %v449 = vpack.c.b16 %v441, %v441
        %v450 = vpack.c.b16 %v442, %v442
        %v451 = vpack.c.b16 %v443, %v443
        %v588 = vunpack.c.l.b16 %v304
        %v589 = vunpack.c.l.b16 %v305
        %v590 = vunpack.c.l.b16 %v306
        %v591 = vunpack.c.l.b16 %v307
        %v592 = vunpack.c.l.b16 %v308
        %v593 = vunpack.c.l.b16 %v309
        %v594 = vunpack.c.l.b16 %v310
        %v595 = vunpack.c.l.b16 %v311
        %v596 = vunpack.c.l.b16 %v312
        %v597 = vunpack.c.l.b16 %v313
        %v598 = vunpack.c.l.b16 %v314
        %v599 = vunpack.c.l.b16 %v315
        %v600 = vunpack.c.l.b16 %v316
        %v601 = vunpack.c.l.b16 %v317
        %v602 = vunpack.c.l.b16 %v318
        %v603 = vunpack.c.l.b16 %v319
        %v604 = vunpack.c.l.b16 %v320
        %v605 = vunpack.c.l.b16 %v321
        %v606 = vunpack.c.l.b16 %v322
        %v607 = vunpack.c.l.b16 %v323
        %v608 = vunpack.c.l.b16 %v324
        %v609 = vunpack.c.l.b16 %v325
        %v610 = vunpack.c.l.b16 %v326
        %v611 = vunpack.c.l.b16 %v327
        %v612 = vunpack.c.l.b16 %v328
        %v613 = vunpack.c.l.b16 %v329
        %v614 = vunpack.c.l.b16 %v330
        %v615 = vunpack.c.l.b16 %v331
        %v616 = vunpack.c.l.b16 %v332
        %v617 = vunpack.c.l.b16 %v333
        %v618 = vunpack.c.l.b16 %v334
        %v619 = vunpack.c.l.b16 %v335
        %v620 = vunpack.c.l.b16 %v336
        %v621 = vunpack.c.l.b16 %v337
        %v622 = vunpack.c.l.b16 %v338
        %v623 = vunpack.c.l.b16 %v339
        %v624 = vunpack.c.l.b16 %v340
        %v625 = vunpack.c.l.b16 %v341
        %v626 = vunpack.c.l.b16 %v342
        %v627 = vunpack.c.l.b16 %v343
        %v628 = vunpack.c.l.b16 %v344
        %v629 = vunpack.c.l.b16 %v345
        %v630 = vunpack.c.l.b16 %v346
        %v631 = vunpack.c.l.b16 %v347
        %v632 = vunpack.c.l.b16 %v348
        %v633 = vunpack.c.l.b16 %v349
        %v634 = vunpack.c.l.b16 %v350
        %v635 = vunpack.c.l.b16 %v351
        %v636 = vunpack.c.l.b16 %v352
        %v637 = vunpack.c.l.b16 %v353
        %v638 = vunpack.c.l.b16 %v354
        %v639 = vunpack.c.l.b16 %v355
        %v640 = vunpack.c.l.b16 %v356
        %v641 = vunpack.c.l.b16 %v357
        %v642 = vunpack.c.l.b16 %v358
        %v643 = vunpack.c.l.b16 %v359
        %v644 = vunpack.c.l.b16 %v360
        %v645 = vunpack.c.l.b16 %v361
        %v646 = vunpack.c.l.b16 %v362
        %v647 = vunpack.c.l.b16 %v363
        %v648 = vunpack.c.l.b16 %v364
        %v649 = vunpack.c.l.b16 %v365
        %v650 = vunpack.c.l.b16 %v366
        %v651 = vunpack.c.l.b16 %v367
        %v652 = vunpack.c.l.b16 %v368
        %v653 = vunpack.c.l.b16 %v369
        %v654 = vunpack.c.l.b16 %v370
        %v655 = vunpack.c.l.b16 %v371
        %v656 = vunpack.c.l.b16 %v372
        %v657 = vunpack.c.l.b16 %v373
        %v658 = vunpack.c.l.b16 %v374
        %v659 = vunpack.c.l.b16 %v375
        %v660 = vunpack.c.l.b16 %v376
        %v661 = vunpack.c.l.b16 %v377
        %v662 = vunpack.c.l.b16 %v378
        %v663 = vunpack.c.l.b16 %v379
        %v664 = vunpack.c.l.b16 %v380
        %v665 = vunpack.c.l.b16 %v381
        %v666 = vunpack.c.l.b16 %v382
        %v667 = vunpack.c.l.b16 %v383
        %v668 = vunpack.c.l.b16 %v384
        %v669 = vunpack.c.l.b16 %v385
        %v670 = vunpack.c.l.b16 %v386
        %v671 = vunpack.c.l.b16 %v387
        %v672 = vunpack.c.l.b16 %v388
        %v673 = vunpack.c.l.b16 %v389
        %v674 = vunpack.c.l.b16 %v390
        %v675 = vunpack.c.l.b16 %v391
        %v676 = vunpack.c.l.b16 %v392
        %v677 = vunpack.c.l.b16 %v393
        %v678 = vunpack.c.l.b16 %v394
        %v679 = vunpack.c.l.b16 %v395
        %v680 = vunpack.c.l.b16 %v396
        %v681 = vunpack.c.l.b16 %v397
        %v682 = vunpack.c.l.b16 %v398
        %v683 = vunpack.c.l.b16 %v399
        %v684 = vunpack.c.l.b16 %v400
        %v685 = vunpack.c.l.b16 %v401
        %v686 = vunpack.c.l.b16 %v402
        %v687 = vunpack.c.l.b16 %v403
        %v688 = vunpack.c.l.b16 %v404
        %v689 = vunpack.c.l.b16 %v405
        %v690 = vunpack.c.l.b16 %v406
        %v691 = vunpack.c.l.b16 %v407
        %v692 = vunpack.c.l.b16 %v408
        %v693 = vunpack.c.l.b16 %v409
        %v694 = vunpack.c.l.b16 %v410
        %v695 = vunpack.c.l.b16 %v411
        %v696 = vunpack.c.l.b16 %v412
        %v697 = vunpack.c.l.b16 %v413
        %v698 = vunpack.c.l.b16 %v414
        %v699 = vunpack.c.l.b16 %v415
        %v700 = vunpack.c.l.b16 %v416
        %v701 = vunpack.c.l.b16 %v417
        %v702 = vunpack.c.l.b16 %v418
        %v703 = vunpack.c.l.b16 %v419
        %v704 = vunpack.c.l.b16 %v420
        %v705 = vunpack.c.l.b16 %v421
        %v706 = vunpack.c.l.b16 %v422
        %v707 = vunpack.c.l.b16 %v423
        %v708 = vunpack.c.l.b16 %v424
        %v709 = vunpack.c.l.b16 %v425
        %v710 = vunpack.c.l.b16 %v426
        %v711 = vunpack.c.l.b16 %v427
        %v712 = vunpack.c.l.b16 %v428
        %v713 = vunpack.c.l.b16 %v429
        %v714 = vunpack.c.l.b16 %v430
        %v715 = vunpack.c.l.b16 %v431
        %v716 = vpack.c.b16 %v589, %v588
        %v717 = vpack.c.b16 %v591, %v590
        %v718 = vpack.c.b16 %v593, %v592
        %v719 = vpack.c.b16 %v595, %v594
        %v720 = vpack.c.b16 %v597, %v596
        %v721 = vpack.c.b16 %v599, %v598
        %v722 = vpack.c.b16 %v601, %v600
        %v723 = vpack.c.b16 %v603, %v602
        %v724 = vpack.c.b16 %v605, %v604
        %v725 = vpack.c.b16 %v607, %v606
        %v726 = vpack.c.b16 %v609, %v608
        %v727 = vpack.c.b16 %v611, %v610
        %v728 = vpack.c.b16 %v613, %v612
        %v729 = vpack.c.b16 %v615, %v614
        %v730 = vpack.c.b16 %v617, %v616
        %v731 = vpack.c.b16 %v619, %v618
        %v732 = vpack.c.b16 %v621, %v620
        %v733 = vpack.c.b16 %v623, %v622
        %v734 = vpack.c.b16 %v625, %v624
        %v735 = vpack.c.b16 %v627, %v626
        %v736 = vpack.c.b16 %v629, %v628
        %v737 = vpack.c.b16 %v631, %v630
        %v738 = vpack.c.b16 %v633, %v632
        %v739 = vpack.c.b16 %v635, %v634
        %v740 = vpack.c.b16 %v637, %v636
        %v741 = vpack.c.b16 %v639, %v638
        %v742 = vpack.c.b16 %v641, %v640
        %v743 = vpack.c.b16 %v643, %v642
        %v744 = vpack.c.b16 %v645, %v644
        %v745 = vpack.c.b16 %v647, %v646
        %v746 = vpack.c.b16 %v649, %v648
        %v747 = vpack.c.b16 %v651, %v650
        %v748 = vpack.c.b16 %v653, %v652
        %v749 = vpack.c.b16 %v655, %v654
        %v750 = vpack.c.b16 %v657, %v656
        %v751 = vpack.c.b16 %v659, %v658
        %v752 = vpack.c.b16 %v661, %v660
        %v753 = vpack.c.b16 %v663, %v662
        %v754 = vpack.c.b16 %v665, %v664
        %v755 = vpack.c.b16 %v667, %v666
        %v756 = vpack.c.b16 %v669, %v668
        %v757 = vpack.c.b16 %v671, %v670
        %v758 = vpack.c.b16 %v673, %v672
        %v759 = vpack.c.b16 %v675, %v674
        %v760 = vpack.c.b16 %v677, %v676
        %v761 = vpack.c.b16 %v679, %v678
        %v762 = vpack.c.b16 %v681, %v680
        %v763 = vpack.c.b16 %v683, %v682
        %v764 = vpack.c.b16 %v685, %v684
        %v765 = vpack.c.b16 %v687, %v686
        %v766 = vpack.c.b16 %v689, %v688
        %v767 = vpack.c.b16 %v691, %v690
        %v768 = vpack.c.b16 %v693, %v692
        %v769 = vpack.c.b16 %v695, %v694
        %v770 = vpack.c.b16 %v697, %v696
        %v771 = vpack.c.b16 %v699, %v698
        %v772 = vpack.c.b16 %v701, %v700
        %v773 = vpack.c.b16 %v703, %v702
        %v774 = vpack.c.b16 %v705, %v704
        %v775 = vpack.c.b16 %v707, %v706
        %v776 = vpack.c.b16 %v709, %v708
        %v777 = vpack.c.b16 %v711, %v710
        %v778 = vpack.c.b16 %v713, %v712
        %v779 = vpack.c.b16 %v715, %v714
        %844 = vmatprep.subr.bf16.mxu0 0
        %845 = vmatpush1.bf16.msra.mxu0 %v723
        %846 = vmatprep.subr.bf16.mxu0 0
        %847 = vmatpush1.bf16.msra.mxu0 %v722
        %848 = vmatprep.subr.bf16.mxu0 0
        %849 = vmatpush1.bf16.msra.mxu0 %v721
        %850 = vmatprep.subr.bf16.mxu0 0
        %851 = vmatpush1.bf16.msra.mxu0 %v720
        %852 = vmatprep.subr.bf16.mxu0 0
        %853 = vmatpush1.bf16.msra.mxu0 %v719
        %854 = vmatprep.subr.bf16.mxu0 0
        %855 = vmatpush1.bf16.msra.mxu0 %v718
        %856 = vmatprep.subr.bf16.mxu0 0
        %857 = vmatpush1.bf16.msra.mxu0 %v717
        %858 = vmatprep.subr.bf16.mxu0 0
        %859 = vmatpush1.bf16.msra.mxu0 %v716
        %860 = vmatprep.subr.bf16.mxu0 0
        %861 = vmatpush2.bf16.msra.mxu0 %v731
        %862 = vmatprep.subr.bf16.mxu0 0
        %863 = vmatpush2.bf16.msra.mxu0 %v730
        %864 = vmatprep.subr.bf16.mxu0 0
        %865 = vmatpush2.bf16.msra.mxu0 %v729
        %866 = vmatprep.subr.bf16.mxu0 0
        %867 = vmatpush2.bf16.msra.mxu0 %v728
        %868 = vmatprep.subr.bf16.mxu0 0
        %869 = vmatpush2.bf16.msra.mxu0 %v727
        %870 = vmatprep.subr.bf16.mxu0 0
        %871 = vmatpush2.bf16.msra.mxu0 %v726
        %872 = vmatprep.subr.bf16.mxu0 0
        %873 = vmatpush2.bf16.msra.mxu0 %v725
        %874 = vmatprep.subr.bf16.mxu0 0
        %875 = vmatpush2.bf16.msra.mxu0 %v724
        %876 = vmatprep.mubr.bf16.mxu0 %v445
        %877 = vmatmul.mubr.bf16.gmra.mxu0 %v444
        %v878 = vpop.f32.mrf.mxu0
        %v879 = vadd.f32 0.0, %v878
        %v880 = vpop.f32.mrf.mxu0
        %v881 = vpop.f32.mrf.mxu0
        %v882 = vpop.f32.mrf.mxu0
        %883 = vdwg.mxu0
        %884 = vmatprep.subr.bf16.mxu0 0
        %885 = vmatpush1.bf16.msra.mxu0 %v739
        %886 = vmatprep.subr.bf16.mxu0 0
        %887 = vmatpush1.bf16.msra.mxu0 %v738
        %888 = vmatprep.subr.bf16.mxu0 0
        %889 = vmatpush1.bf16.msra.mxu0 %v737
        %890 = vmatprep.subr.bf16.mxu0 0
        %891 = vmatpush1.bf16.msra.mxu0 %v736
        %892 = vmatprep.subr.bf16.mxu0 0
        %893 = vmatpush1.bf16.msra.mxu0 %v735
        %894 = vmatprep.subr.bf16.mxu0 0
        %895 = vmatpush1.bf16.msra.mxu0 %v734
        %896 = vmatprep.subr.bf16.mxu0 0
        %897 = vmatpush1.bf16.msra.mxu0 %v733
        %898 = vmatprep.subr.bf16.mxu0 0
        %899 = vmatpush1.bf16.msra.mxu0 %v732
        %900 = vmatprep.subr.bf16.mxu0 0
        %901 = vmatpush2.bf16.msra.mxu0 %v747
        %902 = vmatprep.subr.bf16.mxu0 0
        %903 = vmatpush2.bf16.msra.mxu0 %v746
        %904 = vmatprep.subr.bf16.mxu0 0
        %905 = vmatpush2.bf16.msra.mxu0 %v745
        %906 = vmatprep.subr.bf16.mxu0 0
        %907 = vmatpush2.bf16.msra.mxu0 %v744
        %908 = vmatprep.subr.bf16.mxu0 0
        %909 = vmatpush2.bf16.msra.mxu0 %v743
        %910 = vmatprep.subr.bf16.mxu0 0
        %911 = vmatpush2.bf16.msra.mxu0 %v742
        %912 = vmatprep.subr.bf16.mxu0 0
        %913 = vmatpush2.bf16.msra.mxu0 %v741
        %914 = vmatprep.subr.bf16.mxu0 0
        %915 = vmatpush2.bf16.msra.mxu0 %v740
        %916 = vmatprep.mubr.bf16.mxu0 %v447
        %917 = vmatmul.mubr.bf16.gmra.mxu0 %v446
        %v918 = vpop.f32.mrf.mxu0
        %v919 = vadd.f32 %v879, %v918
        %v920 = vpop.f32.mrf.mxu0
        %v921 = vpop.f32.mrf.mxu0
        %v922 = vpop.f32.mrf.mxu0
        %923 = vdwg.mxu0
        %924 = vmatprep.subr.bf16.mxu0 0
        %925 = vmatpush1.bf16.msra.mxu0 %v755
        %926 = vmatprep.subr.bf16.mxu0 0
        %927 = vmatpush1.bf16.msra.mxu0 %v754
        %928 = vmatprep.subr.bf16.mxu0 0
        %929 = vmatpush1.bf16.msra.mxu0 %v753
        %930 = vmatprep.subr.bf16.mxu0 0
        %931 = vmatpush1.bf16.msra.mxu0 %v752
        %932 = vmatprep.subr.bf16.mxu0 0
        %933 = vmatpush1.bf16.msra.mxu0 %v751
        %934 = vmatprep.subr.bf16.mxu0 0
        %935 = vmatpush1.bf16.msra.mxu0 %v750
        %936 = vmatprep.subr.bf16.mxu0 0
        %937 = vmatpush1.bf16.msra.mxu0 %v749
        %938 = vmatprep.subr.bf16.mxu0 0
        %939 = vmatpush1.bf16.msra.mxu0 %v748
        %940 = vmatprep.subr.bf16.mxu0 0
        %941 = vmatpush2.bf16.msra.mxu0 %v763
        %942 = vmatprep.subr.bf16.mxu0 0
        %943 = vmatpush2.bf16.msra.mxu0 %v762
        %944 = vmatprep.subr.bf16.mxu0 0
        %945 = vmatpush2.bf16.msra.mxu0 %v761
        %946 = vmatprep.subr.bf16.mxu0 0
        %947 = vmatpush2.bf16.msra.mxu0 %v760
        %948 = vmatprep.subr.bf16.mxu0 0
        %949 = vmatpush2.bf16.msra.mxu0 %v759
        %950 = vmatprep.subr.bf16.mxu0 0
        %951 = vmatpush2.bf16.msra.mxu0 %v758
        %952 = vmatprep.subr.bf16.mxu0 0
        %953 = vmatpush2.bf16.msra.mxu0 %v757
        %954 = vmatprep.subr.bf16.mxu0 0
        %955 = vmatpush2.bf16.msra.mxu0 %v756
        %956 = vmatprep.mubr.bf16.mxu0 %v449
        %957 = vmatmul.mubr.bf16.gmra.mxu0 %v448
        %v958 = vpop.f32.mrf.mxu0
        %v959 = vadd.f32 %v919, %v958
        %v960 = vpop.f32.mrf.mxu0
        %v961 = vpop.f32.mrf.mxu0
        %v962 = vpop.f32.mrf.mxu0
        %963 = vdwg.mxu0
        %964 = vmatprep.subr.bf16.mxu0 0
        %965 = vmatpush1.bf16.msra.mxu0 %v771
        %966 = vmatprep.subr.bf16.mxu0 0
        %967 = vmatpush1.bf16.msra.mxu0 %v770
        %968 = vmatprep.subr.bf16.mxu0 0
        %969 = vmatpush1.bf16.msra.mxu0 %v769
        %970 = vmatprep.subr.bf16.mxu0 0
        %971 = vmatpush1.bf16.msra.mxu0 %v768
        %972 = vmatprep.subr.bf16.mxu0 0
        %973 = vmatpush1.bf16.msra.mxu0 %v767
        %974 = vmatprep.subr.bf16.mxu0 0
        %975 = vmatpush1.bf16.msra.mxu0 %v766
        %976 = vmatprep.subr.bf16.mxu0 0
        %977 = vmatpush1.bf16.msra.mxu0 %v765
        %978 = vmatprep.subr.bf16.mxu0 0
        %979 = vmatpush1.bf16.msra.mxu0 %v764
        %980 = vmatprep.subr.bf16.mxu0 0
        %981 = vmatpush2.bf16.msra.mxu0 %v779
        %982 = vmatprep.subr.bf16.mxu0 0
        %983 = vmatpush2.bf16.msra.mxu0 %v778
        %984 = vmatprep.subr.bf16.mxu0 0
        %985 = vmatpush2.bf16.msra.mxu0 %v777
        %986 = vmatprep.subr.bf16.mxu0 0
        %987 = vmatpush2.bf16.msra.mxu0 %v776
        %988 = vmatprep.subr.bf16.mxu0 0
        %989 = vmatpush2.bf16.msra.mxu0 %v775
        %990 = vmatprep.subr.bf16.mxu0 0
        %991 = vmatpush2.bf16.msra.mxu0 %v774
        %992 = vmatprep.subr.bf16.mxu0 0
        %993 = vmatpush2.bf16.msra.mxu0 %v773
        %994 = vmatprep.subr.bf16.mxu0 0
        %995 = vmatpush2.bf16.msra.mxu0 %v772
        %996 = vmatprep.mubr.bf16.mxu0 %v451
        %997 = vmatmul.mubr.bf16.gmra.mxu0 %v450
        %v998 = vpop.f32.mrf.mxu0
        %v999 = vadd.f32 %v959, %v998
        %v1000 = vpop.f32.mrf.mxu0
        %v1001 = vpop.f32.mrf.mxu0
        %v1002 = vpop.f32.mrf.mxu0
        %1003 = vdwg.mxu0
        %v1004 = vadd.f32 %v299, %v999
        %1005 = vst [vmem:[#allocation2] sm:$0xff] %v1004
        %p1006 = scmp.eq.s32.totalorder %s21, 24
        // Predicated region
        $region61: #{ico_cnn_forward.5} parent=39 // pred_check
          %p1007 = pneg %p1006
        $region62: #{ico_cnn_forward.5} parent=39 // pred_check_branch
          %1009 = sbr.rel (%p1007) target = $region64
        $region63: #{ico_cnn_forward.5} parent=39 // pred_region
          %v1010 = vld [vmem:[#allocation2] sm:$0xff]
          %v1011 = vld [vmem:[#allocation5] sm:$0x1]
          %v1013 = vlaneseq
          %v1014 = vshrl.u32 %v1013, 7
          %v1015 = vsub.s32 0, %v1014
          %v1016 = vrot.slane %v1011, %v1015
          %v1018 = vadd.f32 %v1010, %v1016
          %v1019 = vmax.f32 %v1018, 0.0
          %v1020 = vpack.c.bf16 %v1019, %v1019
          %v1021 = vld [vmem:[#allocation7] sm:$0xf]
          %v1022 = vld [vmem:[#allocation7 + $0x4] sm:$0xf]
          %v1023 = vld [vmem:[#allocation7 + $0x8] sm:$0xf]
          %v1024 = vld [vmem:[#allocation7 + $0xc] sm:$0xf]
          %v1025 = vld [vmem:[#allocation7 + $0x10] sm:$0xf]
          %v1026 = vld [vmem:[#allocation7 + $0x14] sm:$0xf]
          %v1027 = vld [vmem:[#allocation7 + $0x18] sm:$0xf]
          %v1028 = vld [vmem:[#allocation7 + $0x1c] sm:$0xf]
          %v1029 = vld [vmem:[#allocation7 + $0x20] sm:$0xf]
          %v1030 = vld [vmem:[#allocation7 + $0x24] sm:$0xf]
          %v1031 = vld [vmem:[#allocation7 + $0x28] sm:$0xf]
          %v1032 = vld [vmem:[#allocation7 + $0x2c] sm:$0xf]
          %v1033 = vld [vmem:[#allocation7 + $0x30] sm:$0xf]
          %v1034 = vld [vmem:[#allocation7 + $0x34] sm:$0xf]
          %v1035 = vld [vmem:[#allocation7 + $0x38] sm:$0xf]
          %v1036 = vld [vmem:[#allocation7 + $0x3c] sm:$0xf]
          %v1037 = vld [vmem:[#allocation8] sm:$0x1]
          %v1039 = vlaneseq
          %v1040 = vshrl.u32 %v1039, 7
          %v1041 = vsub.s32 0, %v1040
          %v1042 = vrot.slane %v1037, %v1041
          %v1060 = vunpack.c.l.b16 %v1021
          %v1061 = vunpack.c.l.b16 %v1022
          %v1062 = vunpack.c.l.b16 %v1023
          %v1063 = vunpack.c.l.b16 %v1024
          %v1064 = vunpack.c.l.b16 %v1025
          %v1065 = vunpack.c.l.b16 %v1026
          %v1066 = vunpack.c.l.b16 %v1027
          %v1067 = vunpack.c.l.b16 %v1028
          %v1068 = vunpack.c.l.b16 %v1029
          %v1069 = vunpack.c.l.b16 %v1030
          %v1070 = vunpack.c.l.b16 %v1031
          %v1071 = vunpack.c.l.b16 %v1032
          %v1072 = vunpack.c.l.b16 %v1033
          %v1073 = vunpack.c.l.b16 %v1034
          %v1074 = vunpack.c.l.b16 %v1035
          %v1075 = vunpack.c.l.b16 %v1036
          %v1076 = vpack.c.b16 %v1061, %v1060
          %v1077 = vpack.c.b16 %v1063, %v1062
          %v1078 = vpack.c.b16 %v1065, %v1064
          %v1079 = vpack.c.b16 %v1067, %v1066
          %v1080 = vpack.c.b16 %v1069, %v1068
          %v1081 = vpack.c.b16 %v1071, %v1070
          %v1082 = vpack.c.b16 %v1073, %v1072
          %v1083 = vpack.c.b16 %v1075, %v1074
          %1092 = vmatprep.subr.bf16.mxu0 0
          %1093 = vmatpush1.bf16.msra.mxu0 %v1083
          %1094 = vmatprep.subr.bf16.mxu0 0
          %1095 = vmatpush1.bf16.msra.mxu0 %v1082
          %1096 = vmatprep.subr.bf16.mxu0 0
          %1097 = vmatpush1.bf16.msra.mxu0 %v1081
          %1098 = vmatprep.subr.bf16.mxu0 0
          %1099 = vmatpush1.bf16.msra.mxu0 %v1080
          %1100 = vmatprep.subr.bf16.mxu0 0
          %1101 = vmatpush1.bf16.msra.mxu0 %v1079
          %1102 = vmatprep.subr.bf16.mxu0 0
          %1103 = vmatpush1.bf16.msra.mxu0 %v1078
          %1104 = vmatprep.subr.bf16.mxu0 0
          %1105 = vmatpush1.bf16.msra.mxu0 %v1077
          %1106 = vmatprep.subr.bf16.mxu0 0
          %1107 = vmatpush1.bf16.msra.mxu0 %v1076
          %1108 = vmatprep.subr.bf16.mxu0 0
          %1109 = vmatpush2.bf16.msra.mxu0 0
          %1110 = vmatprep.subr.bf16.mxu0 0
          %1111 = vmatpush2.bf16.msra.mxu0 0
          %1112 = vmatprep.subr.bf16.mxu0 0
          %1113 = vmatpush2.bf16.msra.mxu0 0
          %1114 = vmatprep.subr.bf16.mxu0 0
          %1115 = vmatpush2.bf16.msra.mxu0 0
          %1116 = vmatprep.subr.bf16.mxu0 0
          %1117 = vmatpush2.bf16.msra.mxu0 0
          %1118 = vmatprep.subr.bf16.mxu0 0
          %1119 = vmatpush2.bf16.msra.mxu0 0
          %1120 = vmatprep.subr.bf16.mxu0 0
          %1121 = vmatpush2.bf16.msra.mxu0 0
          %1122 = vmatprep.subr.bf16.mxu0 0
          %1123 = vmatpush2.bf16.msra.mxu0 0
          %1124 = vmatprep.mubr.bf16.mxu0 0
          %1125 = vmatmul.mubr.bf16.gmra.mxu0 %v1020
          %v1126 = vpop.f32.mrf.mxu0
          %v1127 = vadd.f32 %v1042, %v1126
          %v1128 = vpop.f32.mrf.mxu0
          %v1129 = vpop.f32.mrf.mxu0
          %v1130 = vpop.f32.mrf.mxu0
          %1131 = vdwg.mxu0
          %1132 = vst [vmem:[%s5] sm:$0xff] %v1127
        $region64: #{ico_cnn_forward.5} parent=39 // pred_fallthru
          _
        // Predicated region
        $region65: #{ico_cnn_forward.5} parent=39 // pred_check
          %p1133 = pneg %p149
        $region66: #{ico_cnn_forward.5} parent=39 // pred_check_branch
          %1135 = sbr.rel (%p1133) target = $region68
        $region67: #{ico_cnn_forward.5} parent=39 // pred_region
          _
        $region68: #{ico_cnn_forward.5} parent=39 // pred_fallthru
          _
        // Predicated region
        $region69: #{ico_cnn_forward.5} parent=39 // pred_check
          %p1136 = pneg %p149
        $region70: #{ico_cnn_forward.5} parent=39 // pred_check_branch
          %1138 = sbr.rel (%p1136) target = $region72
        $region71: #{ico_cnn_forward.5} parent=39 // pred_region
          _
        $region72: #{ico_cnn_forward.5} parent=39 // pred_fallthru
          _
      $region40: #{ico_cnn_forward.5} parent=5 // pred_fallthru
        _
      %p1139 = scmp.le.s32.totalorder 2, %s16
      // Predicated region
      $region73: #{ico_cnn_forward.5} parent=5 // pred_check
        %p1140 = pneg %p1139
      $region74: #{ico_cnn_forward.5} parent=5 // pred_check_branch
        %1142 = sbr.rel (%p1140) target = $region76
      $region75: #{ico_cnn_forward.5} parent=5 // pred_region
        %s1143 = ssub.s32 %s16, 2
      $region76: #{ico_cnn_forward.5} parent=5 // pred_fallthru
        _
    $region6: #{ico_cnn_forward.5} parent=1 // loop_footer
      %s20 = sadd.s32 1, %s16
    $region7: #{ico_cnn_forward.5} parent=1 // loop_footer_branch
      %15 = sbr.rel target = $region3
    $region8: #{ico_cnn_forward.5} parent=1 // loop_exit
      _
    %1144 = vsyncpa [#allocation4], 1
    %s1145 = scalar_lea.sflag [#allocation4], 1
    %1146 = vsyncpa %s1145, 1
    %1147 = vsyncpa [#allocation6], 1
    %1148 = vsyncpa [#allocation9], 1

</llo_original>
